<compile_context>
chip_gen: v7x
topology: tpu7x:2x2x1
jax: 0.10.0
libtpu: 0.0.40
codegen_flags: <defaults>
</compile_context>

<pallas_src>
import functools
import math

import jax
import jax.numpy as jnp
import numpy as np
from jax.experimental import pallas as pl
from jax.experimental.pallas import tpu as pltpu

LN2 = math.log(2.0)
PAD = 128  # lane-width padding for all feature dimensions

# Whole-array-in-VMEM block spec (everything here is tiny; no tiling needed).
VM = pl.BlockSpec(memory_space=pltpu.MemorySpace.VMEM)


def _ssp(x):
  # shifted softplus: softplus(x) - log(2); ssp(0) == 0 so zero-padded lanes stay ~0.
  # Works in the dtype of x (f32 node-side, bf16 edge-side on v6e/v7x).
  return jnp.maximum(x, 0.0) + jnp.log(1.0 + jnp.exp(-jnp.abs(x))) - LN2


# -----------------------------------------------------------------------------
# Fused SchNet kernel: edges + RBF + all interactions + output MLP + mean pool
# -----------------------------------------------------------------------------
def _schnet_kernel(x0_ref, pos_ref, post_ref, adj_ref, off_ref, pool_ref,
                   w1_ref, b1_ref, wm1_ref, bm1_ref, wm2_ref, bm2_ref,
                   wc_ref, bc_ref, wu2_ref, bu2_ref, wu3_ref, bu3_ref,
                   wo1_ref, bo1_ref, wo2_ref, bo2_ref,
                   out_ref, *, coeff, cutoff, num_layers, n_nodes, edge_dtype):
  f32 = jnp.float32
  bf16 = jnp.bfloat16
  ed = edge_dtype
  n = n_nodes

  x = x0_ref[...]                                   # [N, P] f32 (padded lanes 0)
  pc = pos_ref[...]                                 # [N, 3] f32
  pr = post_ref[...]                                # [3, N] f32

  # --- pairwise squared distances from three [N,N] coordinate planes ---
  # (no 128-lane diff tensor; ~20x less VPU/XLU work than the padded form)
  d2 = jnp.zeros((n, n), f32)
  for k in range(3):
    dk = pc[:, k:k + 1] - pr[k:k + 1, :]            # [N,1] - [1,N] -> [N,N]
    d2 = d2 + dk * dk
  dist = jnp.sqrt(d2)                               # [N, N]

  # --- radius-graph mask: same molecule & i != j (adj_ref) & dist < cutoff ---
  mask = adj_ref[...] * (dist < cutoff).astype(f32)             # [N, N]
  mask3 = mask[:, :, None].astype(ed)                           # [N, N, 1]

  # --- Gaussian smearing, hoisted out of the layer loop (layer-invariant) ---
  # Padded offset lanes are 0 -> padded rbf lanes hit zero rows of wm1 -> exact.
  dd = dist[:, :, None] - off_ref[...]                          # [N, N, P] f32
  rbf = jnp.exp((coeff * dd * dd).astype(ed))                   # EUP in edge dtype
  rbf = rbf.reshape(n * n, -1).astype(bf16)                     # [N*N, P] bf16 MXU input

  for l in range(num_layers):
    # filter-generating MLP over all (dense) edges: Linear+ssp, Linear+ssp
    # (edge-side ssp in edge dtype; matmul accumulation stays f32)
    h = jnp.dot(rbf, wm1_ref[l], preferred_element_type=f32) + bm1_ref[l]
    h = _ssp(h.astype(ed))
    w = jnp.dot(h.astype(bf16), wm2_ref[l], preferred_element_type=f32) + bm2_ref[l]
    w = _ssp(w.astype(ed))                                      # [N*N, P]

    # lin1 on node features (node-side math stays f32)
    x1 = jnp.dot(x.astype(bf16), w1_ref[l],
                 preferred_element_type=f32) + b1_ref[l]        # [N, P]

    # gather (x1[col]) via broadcast over the source axis, mask, and scatter-add
    # (index_add over targets) via a sublane reduction -- no selection matmuls.
    # Elementwise path in edge dtype, f32 accumulation for the reduce.
    wm = w.reshape(n, n, -1) * mask3                            # [N(tgt), N(src), P]
    msg = wm * x1[None, :, :].astype(ed)
    agg = jnp.sum(msg, axis=1, dtype=f32)                       # [N, P] f32

    # fused (lin2 @ update-linear-1) -- no activation between them -- then the
    # rest of the update net (ssp, Linear+ssp, Linear)
    v = jnp.dot(agg.astype(bf16), wc_ref[l],
                preferred_element_type=f32) + bc_ref[l]
    v = _ssp(v)
    v = _ssp(jnp.dot(v.astype(bf16), wu2_ref[l],
                     preferred_element_type=f32) + bu2_ref[l])
    v = jnp.dot(v.astype(bf16), wu3_ref[l],
                preferred_element_type=f32) + bu3_ref[l]

    # interaction returns x + v; SchNet.forward adds x again -> 2x + v
    x = 2.0 * x + v

  # --- fused epilogue: output MLP + mean readout pooling ---
  hh = _ssp(jnp.dot(x.astype(bf16), wo1_ref[...],
                    preferred_element_type=f32) + bo1_ref[...])   # [N, P]
  y = jnp.dot(hh.astype(bf16), wo2_ref[...],
              preferred_element_type=f32) + bo2_ref[...]          # [N, P]
  # pool[b, i] = (batch[i] == b) / count[b]  -> mean readout per graph
  out_ref[...] = jnp.dot(pool_ref[...], y, preferred_element_type=f32)  # [B, P]


# -----------------------------------------------------------------------------
# Parameter init (deterministic, xavier_uniform weights, zero biases)
# -----------------------------------------------------------------------------
def _xavier(key, fan_in, fan_out):
  bound = math.sqrt(6.0 / (fan_in + fan_out))
  return jax.random.uniform(key, (fan_in, fan_out), jnp.float32, -bound, bound)


def init_params(key, cfg):
  H, F, G, A = cfg["hidden"], cfg["filters"], cfg["gaussians"], cfg["atom_types"]
  out_dim = cfg["output_dim"]
  keys = iter(jax.random.split(key, 64))
  z1 = lambda n: jnp.zeros((1, n), jnp.float32)

  params = {"embedding": _xavier(next(keys), A, H), "interactions": []}
  for _ in range(cfg["num_interactions"]):
    params["interactions"].append({
        "w1": _xavier(next(keys), H, F), "b1": z1(F),
        "wm1": _xavier(next(keys), G, F), "bm1": z1(F),
        "wm2": _xavier(next(keys), F, F), "bm2": z1(F),
        "w2": _xavier(next(keys), F, H), "b2": z1(H),
        "wu1": _xavier(next(keys), H, H), "bu1": z1(H),
        "wu2": _xavier(next(keys), H, H), "bu2": z1(H),
        "wu3": _xavier(next(keys), H, H), "bu3": z1(H),
    })
  params["output"] = {
      "wo1": _xavier(next(keys), H, H // 2), "bo1": z1(H // 2),
      "wo2": _xavier(next(keys), H // 2, out_dim), "bo2": z1(out_dim),
  }
  return params


def prepare_params(params, pad=PAD):
  """One-time prep: zero-pad all feature dims to 128 lanes, stack per-layer
  weights on a leading axis, fuse w2@wu1 (f32 product, then bf16), and
  pre-cast matmul weights to bf16 (f32 accumulation in-kernel)."""
  bf16 = jnp.bfloat16

  def pad2(w):
    r, c = w.shape
    return jnp.pad(w, ((0, pad - r), (0, pad - c)))

  def padb(b):
    return jnp.pad(b, ((0, 0), (0, pad - b.shape[1])))

  inter = params["interactions"]
  prep = {
      "emb": jnp.pad(params["embedding"],
                     ((0, 0), (0, pad - params["embedding"].shape[1]))),
      "wo1": pad2(params["output"]["wo1"]).astype(bf16),
      "wo2": pad2(params["output"]["wo2"]).astype(bf16),
      "bo1": padb(params["output"]["bo1"]),
      "bo2": padb(params["output"]["bo2"]),
  }
  for wname in ("w1", "wm1", "wm2", "wu2", "wu3"):
    prep[wname] = jnp.stack([pad2(p[wname]) for p in inter]).astype(bf16)
  for bname in ("b1", "bm1", "bm2", "bu2", "bu3"):
    prep[bname] = jnp.stack([padb(p[bname]) for p in inter])
  # Fuse lin2 with the first update linear (no activation between them).
  # Product computed in f32 first, then padded and cast to bf16 once.
  prep["wc"] = jnp.stack([pad2(p["w2"] @ p["wu1"]) for p in inter]).astype(bf16)
  prep["bc"] = jnp.stack([padb(p["b2"] @ p["wu1"] + p["bu1"]) for p in inter])
  return prep


def _pick_edge_dtype():
  """bf16 transcendentals / message math only on chips with bf16 VPU+EUP."""
  try:
    kind = jax.devices()[0].device_kind.lower()
  except Exception:
    return jnp.float32
  if any(tag in kind for tag in ("v6", "v7", "trillium", "ironwood")):
    return jnp.bfloat16
  return jnp.float32  # v4 / v5e / v5p / unknown: keep edge math f32


# -----------------------------------------------------------------------------
# Build a jitted forward (weight prep & constants hoisted out of the call path)
# -----------------------------------------------------------------------------
def build_schnet_forward(params, cfg):
  prep = prepare_params(params)          # pad / stack / fuse / bf16-cast ONCE
  edge_dtype = _pick_edge_dtype()
  L = cfg["num_interactions"]
  G = cfg["gaussians"]
  B = cfg["num_graphs"]
  cutoff = float(cfg["cutoff"])
  out_dim = cfg["output_dim"]
  delta = cutoff / (G - 1)
  coeff = -0.5 / (delta * delta)
  off3 = jnp.pad(jnp.linspace(0.0, cutoff, G, dtype=jnp.float32),
                 (0, PAD - G)).reshape(1, 1, PAD)                 # [1,1,P]

  @jax.jit
  def forward(z, pos, batch):
    N = z.shape[0]
    NP = max(16, -(-N // 16) * 16)   # multiple of 16 so bf16 [N,N,P] reshapes stay tile-aligned
    padn = NP - N
    zp = jnp.pad(z, (0, padn))
    posp = jnp.pad(pos, ((0, padn), (0, 0)))
    batchp = jnp.pad(batch, (0, padn), constant_values=-1)  # padded atoms join no molecule

    # Embedding lookup (glue gather; N is tiny), already lane-padded.
    x0 = jnp.take(prep["emb"], zp, axis=0)                                # [NP, P]

    # Same-molecule & not-self adjacency base (cutoff applied in-kernel).
    eye = jnp.eye(NP, dtype=bool)
    adj = ((batchp[:, None] == batchp[None, :]) & ~eye).astype(jnp.float32)

    # Mean-readout pooling matrix (padded atoms get zero weight).
    onehot = (batchp[None, :] == jnp.arange(B)[:, None]).astype(jnp.float32)
    pool = onehot / jnp.maximum(jnp.sum(onehot, axis=1, keepdims=True), 1.0)

    kern = functools.partial(_schnet_kernel, coeff=coeff, cutoff=cutoff,
                             num_layers=L, n_nodes=NP, edge_dtype=edge_dtype)
    out_pad = pl.pallas_call(
        kern,
        out_shape=jax.ShapeDtypeStruct((B, PAD), jnp.float32),
        in_specs=[VM] * 22,
        out_specs=VM,
    )(x0, posp, posp.T, adj, off3, pool,
      prep["w1"], prep["b1"], prep["wm1"], prep["bm1"], prep["wm2"], prep["bm2"],
      prep["wc"], prep["bc"], prep["wu2"], prep["bu2"], prep["wu3"], prep["bu3"],
      prep["wo1"], prep["bo1"], prep["wo2"], prep["bo2"])
    return out_pad[:, :out_dim]                                           # [B, out]

  return forward


# -----------------------------------------------------------------------------
# Pure-JAX reference (same math, f32, plain XLA) for a sanity check
# -----------------------------------------------------------------------------
def schnet_reference(z, pos, batch, params, cfg):
  N = z.shape[0]
  B = cfg["num_graphs"]
  G = cfg["gaussians"]
  cutoff = cfg["cutoff"]

  x = params["embedding"][z]
  diff = pos[:, None, :] - pos[None, :, :]
  dist = jnp.sqrt(jnp.maximum(jnp.sum(diff * diff, -1), 0.0))
  same = batch[:, None] == batch[None, :]
  eye = jnp.eye(N, dtype=bool)
  mask = (same & (~eye) & (dist < cutoff)).astype(jnp.float32)

  delta = cutoff / (G - 1)
  coeff = -0.5 / (delta * delta)
  offset = jnp.linspace(0.0, cutoff, G, dtype=jnp.float32)
  rbf = jnp.exp(coeff * (dist[:, :, None] - offset[None, None, :]) ** 2)  # [N,N,G]

  for p in params["interactions"]:
    x1 = x @ p["w1"] + p["b1"]
    w = _ssp(rbf @ p["wm1"] + p["bm1"])
    w = _ssp(w @ p["wm2"] + p["bm2"])                                     # [N,N,F]
    agg = jnp.einsum("ij,ijf,jf->if", mask, w, x1)
    v = agg @ p["w2"] + p["b2"]
    v = _ssp(v @ p["wu1"] + p["bu1"])
    v = _ssp(v @ p["wu2"] + p["bu2"])
    v = v @ p["wu3"] + p["bu3"]
    x = 2.0 * x + v

  po = params["output"]
  y = _ssp(x @ po["wo1"] + po["bo1"]) @ po["wo2"] + po["bo2"]
  onehot = (batch[None, :] == jnp.arange(B)[:, None]).astype(jnp.float32)
  counts = jnp.maximum(jnp.sum(onehot, axis=1, keepdims=True), 1.0)
  return (onehot @ y) / counts


# -----------------------------------------------------------------------------
if __name__ == "__main__":
  cfg = {
      "hidden": 32,          # hidden_channels
      "filters": 32,         # num_filters
      "gaussians": 16,       # num_gaussians
      "num_interactions": 2,
      "cutoff": 10.0,
      "atom_types": 100,     # n_atom_type
      "output_dim": 1,
      "num_graphs": 2,
  }
  N = 16  # total atoms (2 molecules x 8 atoms)

  key = jax.random.PRNGKey(0)
  kp, kz, kpos = jax.random.split(key, 3)
  params = init_params(kp, cfg)

  z = jax.random.randint(kz, (N,), 0, cfg["atom_types"])
  pos = jax.random.uniform(kpos, (N, 3), jnp.float32, 0.0, 3.0)
  batch = jnp.repeat(jnp.arange(cfg["num_graphs"], dtype=jnp.int32),
                     N // cfg["num_graphs"])

  forward = build_schnet_forward(params, cfg)   # weight prep + jit compile path
  out = jax.block_until_ready(forward(z, pos, batch))

  ref = jax.block_until_ready(schnet_reference(z, pos, batch, params, cfg))
  # Tolerance accounts for bf16 MXU inputs and (on v6e/v7x) bf16 edge
  # transcendentals / message math vs the f32 reference.
  np.testing.assert_allclose(np.asarray(out), np.asarray(ref), rtol=4e-2, atol=4e-2)
  assert out.shape == (cfg["num_graphs"], cfg["output_dim"])

  print("KERNEL_OK")
</pallas_src>

<mosaic_0001>
module attributes {stable_mosaic.version = 11 : i64} {
  func.func @_schnet_kernel(%arg0: memref<16x128xf32, #tpu.memory_space<vmem>>, %arg1: memref<16x3xf32, #tpu.memory_space<vmem>>, %arg2: memref<3x16xf32, #tpu.memory_space<vmem>>, %arg3: memref<16x16xf32, #tpu.memory_space<vmem>>, %arg4: memref<1x1x128xf32, #tpu.memory_space<vmem>>, %arg5: memref<2x16xf32, #tpu.memory_space<vmem>>, %arg6: memref<2x128x128xbf16, #tpu.memory_space<vmem>>, %arg7: memref<2x1x128xf32, #tpu.memory_space<vmem>>, %arg8: memref<2x128x128xbf16, #tpu.memory_space<vmem>>, %arg9: memref<2x1x128xf32, #tpu.memory_space<vmem>>, %arg10: memref<2x128x128xbf16, #tpu.memory_space<vmem>>, %arg11: memref<2x1x128xf32, #tpu.memory_space<vmem>>, %arg12: memref<2x128x128xbf16, #tpu.memory_space<vmem>>, %arg13: memref<2x1x128xf32, #tpu.memory_space<vmem>>, %arg14: memref<2x128x128xbf16, #tpu.memory_space<vmem>>, %arg15: memref<2x1x128xf32, #tpu.memory_space<vmem>>, %arg16: memref<2x128x128xbf16, #tpu.memory_space<vmem>>, %arg17: memref<2x1x128xf32, #tpu.memory_space<vmem>>, %arg18: memref<128x128xbf16, #tpu.memory_space<vmem>>, %arg19: memref<1x128xf32, #tpu.memory_space<vmem>>, %arg20: memref<128x128xbf16, #tpu.memory_space<vmem>>, %arg21: memref<1x128xf32, #tpu.memory_space<vmem>>, %arg22: memref<2x128xf32, #tpu.memory_space<vmem>>) attributes {dimension_semantics = [], scalar_prefetch = 0 : i64, scratch_operands = 0 : i64, tpu.core_type = #tpu.core_type<tc>} {
    %c0 = arith.constant 0 : index
    %c0_0 = arith.constant 0 : index
    %0 = vector.load %arg0[%c0, %c0_0] : memref<16x128xf32, #tpu.memory_space<vmem>>, vector<16x128xf32>
    %c0_1 = arith.constant 0 : index
    %c0_2 = arith.constant 0 : index
    %1 = vector.load %arg1[%c0_1, %c0_2] : memref<16x3xf32, #tpu.memory_space<vmem>>, vector<16x3xf32>
    %c0_3 = arith.constant 0 : index
    %c0_4 = arith.constant 0 : index
    %2 = vector.load %arg2[%c0_3, %c0_4] : memref<3x16xf32, #tpu.memory_space<vmem>>, vector<3x16xf32>
    %cst = arith.constant 0.000000e+00 : f32
    %3 = vector.broadcast %cst : f32 to vector<16x16xf32>
    %4 = vector.extract_strided_slice %1 {offsets = [0, 0], sizes = [16, 1], strides = [1, 1]} : vector<16x3xf32> to vector<16x1xf32>
    %5 = vector.extract_strided_slice %2 {offsets = [0, 0], sizes = [1, 16], strides = [1, 1]} : vector<3x16xf32> to vector<1x16xf32>
    %6 = vector.broadcast %4 : vector<16x1xf32> to vector<16x16xf32>
    %7 = vector.broadcast %5 : vector<1x16xf32> to vector<16x16xf32>
    %8 = arith.subf %6, %7 : vector<16x16xf32>
    %9 = arith.mulf %8, %8 : vector<16x16xf32>
    %10 = arith.addf %3, %9 : vector<16x16xf32>
    %11 = vector.extract_strided_slice %1 {offsets = [0, 1], sizes = [16, 1], strides = [1, 1]} : vector<16x3xf32> to vector<16x1xf32>
    %12 = vector.extract_strided_slice %2 {offsets = [1, 0], sizes = [1, 16], strides = [1, 1]} : vector<3x16xf32> to vector<1x16xf32>
    %13 = vector.broadcast %11 : vector<16x1xf32> to vector<16x16xf32>
    %14 = vector.broadcast %12 : vector<1x16xf32> to vector<16x16xf32>
    %15 = arith.subf %13, %14 : vector<16x16xf32>
    %16 = arith.mulf %15, %15 : vector<16x16xf32>
    %17 = arith.addf %10, %16 : vector<16x16xf32>
    %18 = vector.extract_strided_slice %1 {offsets = [0, 2], sizes = [16, 1], strides = [1, 1]} : vector<16x3xf32> to vector<16x1xf32>
    %19 = vector.extract_strided_slice %2 {offsets = [2, 0], sizes = [1, 16], strides = [1, 1]} : vector<3x16xf32> to vector<1x16xf32>
    %20 = vector.broadcast %18 : vector<16x1xf32> to vector<16x16xf32>
    %21 = vector.broadcast %19 : vector<1x16xf32> to vector<16x16xf32>
    %22 = arith.subf %20, %21 : vector<16x16xf32>
    %23 = arith.mulf %22, %22 : vector<16x16xf32>
    %24 = arith.addf %17, %23 : vector<16x16xf32>
    %25 = math.sqrt %24 : vector<16x16xf32>
    %c0_5 = arith.constant 0 : index
    %c0_6 = arith.constant 0 : index
    %26 = vector.load %arg3[%c0_5, %c0_6] : memref<16x16xf32, #tpu.memory_space<vmem>>, vector<16x16xf32>
    %cst_7 = arith.constant 1.000000e+01 : f32
    %27 = vector.broadcast %cst_7 : f32 to vector<16x16xf32>
    %28 = arith.cmpf olt, %25, %27 : vector<16x16xf32>
    %29 = arith.extui %28 : vector<16x16xi1> to vector<16x16xi32>
    %30 = arith.sitofp %29 : vector<16x16xi32> to vector<16x16xf32>
    %31 = arith.mulf %26, %30 : vector<16x16xf32>
    %32 = vector.shape_cast %31 : vector<16x16xf32> to vector<16x16x1xf32>
    %33 = vector.shape_cast %25 : vector<16x16xf32> to vector<16x16x1xf32>
    %c0_8 = arith.constant 0 : index
    %c0_9 = arith.constant 0 : index
    %c0_10 = arith.constant 0 : index
    %34 = vector.load %arg4[%c0_8, %c0_9, %c0_10] : memref<1x1x128xf32, #tpu.memory_space<vmem>>, vector<1x1x128xf32>
    %35 = vector.broadcast %33 : vector<16x16x1xf32> to vector<16x16x128xf32>
    %36 = vector.broadcast %34 : vector<1x1x128xf32> to vector<16x16x128xf32>
    %37 = arith.subf %35, %36 : vector<16x16x128xf32>
    %cst_11 = arith.constant -1.125000e+00 : f32
    %38 = vector.broadcast %cst_11 : f32 to vector<16x16x128xf32>
    %39 = arith.mulf %38, %37 : vector<16x16x128xf32>
    %40 = arith.mulf %39, %37 : vector<16x16x128xf32>
    %41 = math.exp %40 : vector<16x16x128xf32>
    %42 = vector.shape_cast %41 : vector<16x16x128xf32> to vector<256x128xf32>
    %43 = arith.truncf %42 : vector<256x128xf32> to vector<256x128xbf16>
    %c0_12 = arith.constant 0 : index
    %c0_13 = arith.constant 0 : index
    %c0_14 = arith.constant 0 : index
    %44 = vector.load %arg8[%c0_12, %c0_13, %c0_14] : memref<2x128x128xbf16, #tpu.memory_space<vmem>>, vector<1x128x128xbf16>
    %45 = vector.shape_cast %44 : vector<1x128x128xbf16> to vector<128x128xbf16>
    %cst_15 = arith.constant dense<0.000000e+00> : vector<256x128xf32>
    %46 = tpu.matmul %43, %45, %cst_15 {dimension_numbers = #tpu.dot_dimension_numbers<[1], [0], [0], [1], [0, 0, 1, 1], [], []>} : vector<256x128xbf16>, vector<128x128xbf16>, vector<256x128xf32> -> vector<256x128xf32>
    %c0_16 = arith.constant 0 : index
    %c0_17 = arith.constant 0 : index
    %c0_18 = arith.constant 0 : index
    %47 = vector.load %arg9[%c0_16, %c0_17, %c0_18] : memref<2x1x128xf32, #tpu.memory_space<vmem>>, vector<1x1x128xf32>
    %48 = vector.shape_cast %47 : vector<1x1x128xf32> to vector<1x128xf32>
    %49 = vector.broadcast %48 : vector<1x128xf32> to vector<256x128xf32>
    %50 = arith.addf %46, %49 : vector<256x128xf32>
    %cst_19 = arith.constant 0.000000e+00 : f32
    %51 = vector.broadcast %cst_19 : f32 to vector<256x128xf32>
    %52 = arith.maximumf %50, %51 : vector<256x128xf32>
    %53 = math.absf %50 : vector<256x128xf32>
    %cst_20 = arith.constant 0.000000e+00 : f32
    %54 = vector.broadcast %cst_20 : f32 to vector<256x128xf32>
    %55 = arith.subf %54, %53 : vector<256x128xf32>
    %56 = math.exp %55 : vector<256x128xf32>
    %cst_21 = arith.constant 1.000000e+00 : f32
    %57 = vector.broadcast %cst_21 : f32 to vector<256x128xf32>
    %58 = arith.addf %57, %56 : vector<256x128xf32>
    %59 = math.log %58 : vector<256x128xf32>
    %60 = arith.addf %52, %59 : vector<256x128xf32>
    %cst_22 = arith.constant 0.693147182 : f32
    %61 = vector.broadcast %cst_22 : f32 to vector<256x128xf32>
    %62 = arith.subf %60, %61 : vector<256x128xf32>
    %63 = arith.truncf %62 : vector<256x128xf32> to vector<256x128xbf16>
    %c0_23 = arith.constant 0 : index
    %c0_24 = arith.constant 0 : index
    %c0_25 = arith.constant 0 : index
    %64 = vector.load %arg10[%c0_23, %c0_24, %c0_25] : memref<2x128x128xbf16, #tpu.memory_space<vmem>>, vector<1x128x128xbf16>
    %65 = vector.shape_cast %64 : vector<1x128x128xbf16> to vector<128x128xbf16>
    %cst_26 = arith.constant dense<0.000000e+00> : vector<256x128xf32>
    %66 = tpu.matmul %63, %65, %cst_26 {dimension_numbers = #tpu.dot_dimension_numbers<[1], [0], [0], [1], [0, 0, 1, 1], [], []>} : vector<256x128xbf16>, vector<128x128xbf16>, vector<256x128xf32> -> vector<256x128xf32>
    %c0_27 = arith.constant 0 : index
    %c0_28 = arith.constant 0 : index
    %c0_29 = arith.constant 0 : index
    %67 = vector.load %arg11[%c0_27, %c0_28, %c0_29] : memref<2x1x128xf32, #tpu.memory_space<vmem>>, vector<1x1x128xf32>
    %68 = vector.shape_cast %67 : vector<1x1x128xf32> to vector<1x128xf32>
    %69 = vector.broadcast %68 : vector<1x128xf32> to vector<256x128xf32>
    %70 = arith.addf %66, %69 : vector<256x128xf32>
    %cst_30 = arith.constant 0.000000e+00 : f32
    %71 = vector.broadcast %cst_30 : f32 to vector<256x128xf32>
    %72 = arith.maximumf %70, %71 : vector<256x128xf32>
    %73 = math.absf %70 : vector<256x128xf32>
    %cst_31 = arith.constant 0.000000e+00 : f32
    %74 = vector.broadcast %cst_31 : f32 to vector<256x128xf32>
    %75 = arith.subf %74, %73 : vector<256x128xf32>
    %76 = math.exp %75 : vector<256x128xf32>
    %cst_32 = arith.constant 1.000000e+00 : f32
    %77 = vector.broadcast %cst_32 : f32 to vector<256x128xf32>
    %78 = arith.addf %77, %76 : vector<256x128xf32>
    %79 = math.log %78 : vector<256x128xf32>
    %80 = arith.addf %72, %79 : vector<256x128xf32>
    %cst_33 = arith.constant 0.693147182 : f32
    %81 = vector.broadcast %cst_33 : f32 to vector<256x128xf32>
    %82 = arith.subf %80, %81 : vector<256x128xf32>
    %83 = arith.truncf %0 : vector<16x128xf32> to vector<16x128xbf16>
    %c0_34 = arith.constant 0 : index
    %c0_35 = arith.constant 0 : index
    %c0_36 = arith.constant 0 : index
    %84 = vector.load %arg6[%c0_34, %c0_35, %c0_36] : memref<2x128x128xbf16, #tpu.memory_space<vmem>>, vector<1x128x128xbf16>
    %85 = vector.shape_cast %84 : vector<1x128x128xbf16> to vector<128x128xbf16>
    %cst_37 = arith.constant dense<0.000000e+00> : vector<16x128xf32>
    %86 = tpu.matmul %83, %85, %cst_37 {dimension_numbers = #tpu.dot_dimension_numbers<[1], [0], [0], [1], [0, 0, 1, 1], [], []>} : vector<16x128xbf16>, vector<128x128xbf16>, vector<16x128xf32> -> vector<16x128xf32>
    %c0_38 = arith.constant 0 : index
    %c0_39 = arith.constant 0 : index
    %c0_40 = arith.constant 0 : index
    %87 = vector.load %arg7[%c0_38, %c0_39, %c0_40] : memref<2x1x128xf32, #tpu.memory_space<vmem>>, vector<1x1x128xf32>
    %88 = vector.shape_cast %87 : vector<1x1x128xf32> to vector<1x128xf32>
    %89 = vector.broadcast %88 : vector<1x128xf32> to vector<16x128xf32>
    %90 = arith.addf %86, %89 : vector<16x128xf32>
    %91 = vector.shape_cast %82 : vector<256x128xf32> to vector<16x16x128xf32>
    %92 = vector.broadcast %32 : vector<16x16x1xf32> to vector<16x16x128xf32>
    %93 = arith.mulf %91, %92 : vector<16x16x128xf32>
    %94 = vector.shape_cast %90 : vector<16x128xf32> to vector<1x16x128xf32>
    %95 = vector.broadcast %94 : vector<1x16x128xf32> to vector<16x16x128xf32>
    %96 = arith.mulf %93, %95 : vector<16x16x128xf32>
    %cst_41 = arith.constant dense<0.000000e+00> : vector<16x128xf32>
    %97 = vector.multi_reduction <add>, %96, %cst_41 [1] : vector<16x16x128xf32> to vector<16x128xf32>
    %98 = arith.truncf %97 : vector<16x128xf32> to vector<16x128xbf16>
    %c0_42 = arith.constant 0 : index
    %c0_43 = arith.constant 0 : index
    %c0_44 = arith.constant 0 : index
    %99 = vector.load %arg12[%c0_42, %c0_43, %c0_44] : memref<2x128x128xbf16, #tpu.memory_space<vmem>>, vector<1x128x128xbf16>
    %100 = vector.shape_cast %99 : vector<1x128x128xbf16> to vector<128x128xbf16>
    %cst_45 = arith.constant dense<0.000000e+00> : vector<16x128xf32>
    %101 = tpu.matmul %98, %100, %cst_45 {dimension_numbers = #tpu.dot_dimension_numbers<[1], [0], [0], [1], [0, 0, 1, 1], [], []>} : vector<16x128xbf16>, vector<128x128xbf16>, vector<16x128xf32> -> vector<16x128xf32>
    %c0_46 = arith.constant 0 : index
    %c0_47 = arith.constant 0 : index
    %c0_48 = arith.constant 0 : index
    %102 = vector.load %arg13[%c0_46, %c0_47, %c0_48] : memref<2x1x128xf32, #tpu.memory_space<vmem>>, vector<1x1x128xf32>
    %103 = vector.shape_cast %102 : vector<1x1x128xf32> to vector<1x128xf32>
    %104 = vector.broadcast %103 : vector<1x128xf32> to vector<16x128xf32>
    %105 = arith.addf %101, %104 : vector<16x128xf32>
    %cst_49 = arith.constant 0.000000e+00 : f32
    %106 = vector.broadcast %cst_49 : f32 to vector<16x128xf32>
    %107 = arith.maximumf %105, %106 : vector<16x128xf32>
    %108 = math.absf %105 : vector<16x128xf32>
    %cst_50 = arith.constant 0.000000e+00 : f32
    %109 = vector.broadcast %cst_50 : f32 to vector<16x128xf32>
    %110 = arith.subf %109, %108 : vector<16x128xf32>
    %111 = math.exp %110 : vector<16x128xf32>
    %cst_51 = arith.constant 1.000000e+00 : f32
    %112 = vector.broadcast %cst_51 : f32 to vector<16x128xf32>
    %113 = arith.addf %112, %111 : vector<16x128xf32>
    %114 = math.log %113 : vector<16x128xf32>
    %115 = arith.addf %107, %114 : vector<16x128xf32>
    %cst_52 = arith.constant 0.693147182 : f32
    %116 = vector.broadcast %cst_52 : f32 to vector<16x128xf32>
    %117 = arith.subf %115, %116 : vector<16x128xf32>
    %118 = arith.truncf %117 : vector<16x128xf32> to vector<16x128xbf16>
    %c0_53 = arith.constant 0 : index
    %c0_54 = arith.constant 0 : index
    %c0_55 = arith.constant 0 : index
    %119 = vector.load %arg14[%c0_53, %c0_54, %c0_55] : memref<2x128x128xbf16, #tpu.memory_space<vmem>>, vector<1x128x128xbf16>
    %120 = vector.shape_cast %119 : vector<1x128x128xbf16> to vector<128x128xbf16>
    %cst_56 = arith.constant dense<0.000000e+00> : vector<16x128xf32>
    %121 = tpu.matmul %118, %120, %cst_56 {dimension_numbers = #tpu.dot_dimension_numbers<[1], [0], [0], [1], [0, 0, 1, 1], [], []>} : vector<16x128xbf16>, vector<128x128xbf16>, vector<16x128xf32> -> vector<16x128xf32>
    %c0_57 = arith.constant 0 : index
    %c0_58 = arith.constant 0 : index
    %c0_59 = arith.constant 0 : index
    %122 = vector.load %arg15[%c0_57, %c0_58, %c0_59] : memref<2x1x128xf32, #tpu.memory_space<vmem>>, vector<1x1x128xf32>
    %123 = vector.shape_cast %122 : vector<1x1x128xf32> to vector<1x128xf32>
    %124 = vector.broadcast %123 : vector<1x128xf32> to vector<16x128xf32>
    %125 = arith.addf %121, %124 : vector<16x128xf32>
    %cst_60 = arith.constant 0.000000e+00 : f32
    %126 = vector.broadcast %cst_60 : f32 to vector<16x128xf32>
    %127 = arith.maximumf %125, %126 : vector<16x128xf32>
    %128 = math.absf %125 : vector<16x128xf32>
    %cst_61 = arith.constant 0.000000e+00 : f32
    %129 = vector.broadcast %cst_61 : f32 to vector<16x128xf32>
    %130 = arith.subf %129, %128 : vector<16x128xf32>
    %131 = math.exp %130 : vector<16x128xf32>
    %cst_62 = arith.constant 1.000000e+00 : f32
    %132 = vector.broadcast %cst_62 : f32 to vector<16x128xf32>
    %133 = arith.addf %132, %131 : vector<16x128xf32>
    %134 = math.log %133 : vector<16x128xf32>
    %135 = arith.addf %127, %134 : vector<16x128xf32>
    %cst_63 = arith.constant 0.693147182 : f32
    %136 = vector.broadcast %cst_63 : f32 to vector<16x128xf32>
    %137 = arith.subf %135, %136 : vector<16x128xf32>
    %138 = arith.truncf %137 : vector<16x128xf32> to vector<16x128xbf16>
    %c0_64 = arith.constant 0 : index
    %c0_65 = arith.constant 0 : index
    %c0_66 = arith.constant 0 : index
    %139 = vector.load %arg16[%c0_64, %c0_65, %c0_66] : memref<2x128x128xbf16, #tpu.memory_space<vmem>>, vector<1x128x128xbf16>
    %140 = vector.shape_cast %139 : vector<1x128x128xbf16> to vector<128x128xbf16>
    %cst_67 = arith.constant dense<0.000000e+00> : vector<16x128xf32>
    %141 = tpu.matmul %138, %140, %cst_67 {dimension_numbers = #tpu.dot_dimension_numbers<[1], [0], [0], [1], [0, 0, 1, 1], [], []>} : vector<16x128xbf16>, vector<128x128xbf16>, vector<16x128xf32> -> vector<16x128xf32>
    %c0_68 = arith.constant 0 : index
    %c0_69 = arith.constant 0 : index
    %c0_70 = arith.constant 0 : index
    %142 = vector.load %arg17[%c0_68, %c0_69, %c0_70] : memref<2x1x128xf32, #tpu.memory_space<vmem>>, vector<1x1x128xf32>
    %143 = vector.shape_cast %142 : vector<1x1x128xf32> to vector<1x128xf32>
    %144 = vector.broadcast %143 : vector<1x128xf32> to vector<16x128xf32>
    %145 = arith.addf %141, %144 : vector<16x128xf32>
    %cst_71 = arith.constant 2.000000e+00 : f32
    %146 = vector.broadcast %cst_71 : f32 to vector<16x128xf32>
    %147 = arith.mulf %146, %0 : vector<16x128xf32>
    %148 = arith.addf %147, %145 : vector<16x128xf32>
    %c1 = arith.constant 1 : index
    %c0_72 = arith.constant 0 : index
    %c0_73 = arith.constant 0 : index
    %149 = vector.load %arg8[%c1, %c0_72, %c0_73] : memref<2x128x128xbf16, #tpu.memory_space<vmem>>, vector<1x128x128xbf16>
    %150 = vector.shape_cast %149 : vector<1x128x128xbf16> to vector<128x128xbf16>
    %cst_74 = arith.constant dense<0.000000e+00> : vector<256x128xf32>
    %151 = tpu.matmul %43, %150, %cst_74 {dimension_numbers = #tpu.dot_dimension_numbers<[1], [0], [0], [1], [0, 0, 1, 1], [], []>} : vector<256x128xbf16>, vector<128x128xbf16>, vector<256x128xf32> -> vector<256x128xf32>
    %c1_75 = arith.constant 1 : index
    %c0_76 = arith.constant 0 : index
    %c0_77 = arith.constant 0 : index
    %152 = vector.load %arg9[%c1_75, %c0_76, %c0_77] : memref<2x1x128xf32, #tpu.memory_space<vmem>>, vector<1x1x128xf32>
    %153 = vector.shape_cast %152 : vector<1x1x128xf32> to vector<1x128xf32>
    %154 = vector.broadcast %153 : vector<1x128xf32> to vector<256x128xf32>
    %155 = arith.addf %151, %154 : vector<256x128xf32>
    %cst_78 = arith.constant 0.000000e+00 : f32
    %156 = vector.broadcast %cst_78 : f32 to vector<256x128xf32>
    %157 = arith.maximumf %155, %156 : vector<256x128xf32>
    %158 = math.absf %155 : vector<256x128xf32>
    %cst_79 = arith.constant 0.000000e+00 : f32
    %159 = vector.broadcast %cst_79 : f32 to vector<256x128xf32>
    %160 = arith.subf %159, %158 : vector<256x128xf32>
    %161 = math.exp %160 : vector<256x128xf32>
    %cst_80 = arith.constant 1.000000e+00 : f32
    %162 = vector.broadcast %cst_80 : f32 to vector<256x128xf32>
    %163 = arith.addf %162, %161 : vector<256x128xf32>
    %164 = math.log %163 : vector<256x128xf32>
    %165 = arith.addf %157, %164 : vector<256x128xf32>
    %cst_81 = arith.constant 0.693147182 : f32
    %166 = vector.broadcast %cst_81 : f32 to vector<256x128xf32>
    %167 = arith.subf %165, %166 : vector<256x128xf32>
    %168 = arith.truncf %167 : vector<256x128xf32> to vector<256x128xbf16>
    %c1_82 = arith.constant 1 : index
    %c0_83 = arith.constant 0 : index
    %c0_84 = arith.constant 0 : index
    %169 = vector.load %arg10[%c1_82, %c0_83, %c0_84] : memref<2x128x128xbf16, #tpu.memory_space<vmem>>, vector<1x128x128xbf16>
    %170 = vector.shape_cast %169 : vector<1x128x128xbf16> to vector<128x128xbf16>
    %cst_85 = arith.constant dense<0.000000e+00> : vector<256x128xf32>
    %171 = tpu.matmul %168, %170, %cst_85 {dimension_numbers = #tpu.dot_dimension_numbers<[1], [0], [0], [1], [0, 0, 1, 1], [], []>} : vector<256x128xbf16>, vector<128x128xbf16>, vector<256x128xf32> -> vector<256x128xf32>
    %c1_86 = arith.constant 1 : index
    %c0_87 = arith.constant 0 : index
    %c0_88 = arith.constant 0 : index
    %172 = vector.load %arg11[%c1_86, %c0_87, %c0_88] : memref<2x1x128xf32, #tpu.memory_space<vmem>>, vector<1x1x128xf32>
    %173 = vector.shape_cast %172 : vector<1x1x128xf32> to vector<1x128xf32>
    %174 = vector.broadcast %173 : vector<1x128xf32> to vector<256x128xf32>
    %175 = arith.addf %171, %174 : vector<256x128xf32>
    %cst_89 = arith.constant 0.000000e+00 : f32
    %176 = vector.broadcast %cst_89 : f32 to vector<256x128xf32>
    %177 = arith.maximumf %175, %176 : vector<256x128xf32>
    %178 = math.absf %175 : vector<256x128xf32>
    %cst_90 = arith.constant 0.000000e+00 : f32
    %179 = vector.broadcast %cst_90 : f32 to vector<256x128xf32>
    %180 = arith.subf %179, %178 : vector<256x128xf32>
    %181 = math.exp %180 : vector<256x128xf32>
    %cst_91 = arith.constant 1.000000e+00 : f32
    %182 = vector.broadcast %cst_91 : f32 to vector<256x128xf32>
    %183 = arith.addf %182, %181 : vector<256x128xf32>
    %184 = math.log %183 : vector<256x128xf32>
    %185 = arith.addf %177, %184 : vector<256x128xf32>
    %cst_92 = arith.constant 0.693147182 : f32
    %186 = vector.broadcast %cst_92 : f32 to vector<256x128xf32>
    %187 = arith.subf %185, %186 : vector<256x128xf32>
    %188 = arith.truncf %148 : vector<16x128xf32> to vector<16x128xbf16>
    %c1_93 = arith.constant 1 : index
    %c0_94 = arith.constant 0 : index
    %c0_95 = arith.constant 0 : index
    %189 = vector.load %arg6[%c1_93, %c0_94, %c0_95] : memref<2x128x128xbf16, #tpu.memory_space<vmem>>, vector<1x128x128xbf16>
    %190 = vector.shape_cast %189 : vector<1x128x128xbf16> to vector<128x128xbf16>
    %cst_96 = arith.constant dense<0.000000e+00> : vector<16x128xf32>
    %191 = tpu.matmul %188, %190, %cst_96 {dimension_numbers = #tpu.dot_dimension_numbers<[1], [0], [0], [1], [0, 0, 1, 1], [], []>} : vector<16x128xbf16>, vector<128x128xbf16>, vector<16x128xf32> -> vector<16x128xf32>
    %c1_97 = arith.constant 1 : index
    %c0_98 = arith.constant 0 : index
    %c0_99 = arith.constant 0 : index
    %192 = vector.load %arg7[%c1_97, %c0_98, %c0_99] : memref<2x1x128xf32, #tpu.memory_space<vmem>>, vector<1x1x128xf32>
    %193 = vector.shape_cast %192 : vector<1x1x128xf32> to vector<1x128xf32>
    %194 = vector.broadcast %193 : vector<1x128xf32> to vector<16x128xf32>
    %195 = arith.addf %191, %194 : vector<16x128xf32>
    %196 = vector.shape_cast %187 : vector<256x128xf32> to vector<16x16x128xf32>
    %197 = vector.broadcast %32 : vector<16x16x1xf32> to vector<16x16x128xf32>
    %198 = arith.mulf %196, %197 : vector<16x16x128xf32>
    %199 = vector.shape_cast %195 : vector<16x128xf32> to vector<1x16x128xf32>
    %200 = vector.broadcast %199 : vector<1x16x128xf32> to vector<16x16x128xf32>
    %201 = arith.mulf %198, %200 : vector<16x16x128xf32>
    %cst_100 = arith.constant dense<0.000000e+00> : vector<16x128xf32>
    %202 = vector.multi_reduction <add>, %201, %cst_100 [1] : vector<16x16x128xf32> to vector<16x128xf32>
    %203 = arith.truncf %202 : vector<16x128xf32> to vector<16x128xbf16>
    %c1_101 = arith.constant 1 : index
    %c0_102 = arith.constant 0 : index
    %c0_103 = arith.constant 0 : index
    %204 = vector.load %arg12[%c1_101, %c0_102, %c0_103] : memref<2x128x128xbf16, #tpu.memory_space<vmem>>, vector<1x128x128xbf16>
    %205 = vector.shape_cast %204 : vector<1x128x128xbf16> to vector<128x128xbf16>
    %cst_104 = arith.constant dense<0.000000e+00> : vector<16x128xf32>
    %206 = tpu.matmul %203, %205, %cst_104 {dimension_numbers = #tpu.dot_dimension_numbers<[1], [0], [0], [1], [0, 0, 1, 1], [], []>} : vector<16x128xbf16>, vector<128x128xbf16>, vector<16x128xf32> -> vector<16x128xf32>
    %c1_105 = arith.constant 1 : index
    %c0_106 = arith.constant 0 : index
    %c0_107 = arith.constant 0 : index
    %207 = vector.load %arg13[%c1_105, %c0_106, %c0_107] : memref<2x1x128xf32, #tpu.memory_space<vmem>>, vector<1x1x128xf32>
    %208 = vector.shape_cast %207 : vector<1x1x128xf32> to vector<1x128xf32>
    %209 = vector.broadcast %208 : vector<1x128xf32> to vector<16x128xf32>
    %210 = arith.addf %206, %209 : vector<16x128xf32>
    %cst_108 = arith.constant 0.000000e+00 : f32
    %211 = vector.broadcast %cst_108 : f32 to vector<16x128xf32>
    %212 = arith.maximumf %210, %211 : vector<16x128xf32>
    %213 = math.absf %210 : vector<16x128xf32>
    %cst_109 = arith.constant 0.000000e+00 : f32
    %214 = vector.broadcast %cst_109 : f32 to vector<16x128xf32>
    %215 = arith.subf %214, %213 : vector<16x128xf32>
    %216 = math.exp %215 : vector<16x128xf32>
    %cst_110 = arith.constant 1.000000e+00 : f32
    %217 = vector.broadcast %cst_110 : f32 to vector<16x128xf32>
    %218 = arith.addf %217, %216 : vector<16x128xf32>
    %219 = math.log %218 : vector<16x128xf32>
    %220 = arith.addf %212, %219 : vector<16x128xf32>
    %cst_111 = arith.constant 0.693147182 : f32
    %221 = vector.broadcast %cst_111 : f32 to vector<16x128xf32>
    %222 = arith.subf %220, %221 : vector<16x128xf32>
    %223 = arith.truncf %222 : vector<16x128xf32> to vector<16x128xbf16>
    %c1_112 = arith.constant 1 : index
    %c0_113 = arith.constant 0 : index
    %c0_114 = arith.constant 0 : index
    %224 = vector.load %arg14[%c1_112, %c0_113, %c0_114] : memref<2x128x128xbf16, #tpu.memory_space<vmem>>, vector<1x128x128xbf16>
    %225 = vector.shape_cast %224 : vector<1x128x128xbf16> to vector<128x128xbf16>
    %cst_115 = arith.constant dense<0.000000e+00> : vector<16x128xf32>
    %226 = tpu.matmul %223, %225, %cst_115 {dimension_numbers = #tpu.dot_dimension_numbers<[1], [0], [0], [1], [0, 0, 1, 1], [], []>} : vector<16x128xbf16>, vector<128x128xbf16>, vector<16x128xf32> -> vector<16x128xf32>
    %c1_116 = arith.constant 1 : index
    %c0_117 = arith.constant 0 : index
    %c0_118 = arith.constant 0 : index
    %227 = vector.load %arg15[%c1_116, %c0_117, %c0_118] : memref<2x1x128xf32, #tpu.memory_space<vmem>>, vector<1x1x128xf32>
    %228 = vector.shape_cast %227 : vector<1x1x128xf32> to vector<1x128xf32>
    %229 = vector.broadcast %228 : vector<1x128xf32> to vector<16x128xf32>
    %230 = arith.addf %226, %229 : vector<16x128xf32>
    %cst_119 = arith.constant 0.000000e+00 : f32
    %231 = vector.broadcast %cst_119 : f32 to vector<16x128xf32>
    %232 = arith.maximumf %230, %231 : vector<16x128xf32>
    %233 = math.absf %230 : vector<16x128xf32>
    %cst_120 = arith.constant 0.000000e+00 : f32
    %234 = vector.broadcast %cst_120 : f32 to vector<16x128xf32>
    %235 = arith.subf %234, %233 : vector<16x128xf32>
    %236 = math.exp %235 : vector<16x128xf32>
    %cst_121 = arith.constant 1.000000e+00 : f32
    %237 = vector.broadcast %cst_121 : f32 to vector<16x128xf32>
    %238 = arith.addf %237, %236 : vector<16x128xf32>
    %239 = math.log %238 : vector<16x128xf32>
    %240 = arith.addf %232, %239 : vector<16x128xf32>
    %cst_122 = arith.constant 0.693147182 : f32
    %241 = vector.broadcast %cst_122 : f32 to vector<16x128xf32>
    %242 = arith.subf %240, %241 : vector<16x128xf32>
    %243 = arith.truncf %242 : vector<16x128xf32> to vector<16x128xbf16>
    %c1_123 = arith.constant 1 : index
    %c0_124 = arith.constant 0 : index
    %c0_125 = arith.constant 0 : index
    %244 = vector.load %arg16[%c1_123, %c0_124, %c0_125] : memref<2x128x128xbf16, #tpu.memory_space<vmem>>, vector<1x128x128xbf16>
    %245 = vector.shape_cast %244 : vector<1x128x128xbf16> to vector<128x128xbf16>
    %cst_126 = arith.constant dense<0.000000e+00> : vector<16x128xf32>
    %246 = tpu.matmul %243, %245, %cst_126 {dimension_numbers = #tpu.dot_dimension_numbers<[1], [0], [0], [1], [0, 0, 1, 1], [], []>} : vector<16x128xbf16>, vector<128x128xbf16>, vector<16x128xf32> -> vector<16x128xf32>
    %c1_127 = arith.constant 1 : index
    %c0_128 = arith.constant 0 : index
    %c0_129 = arith.constant 0 : index
    %247 = vector.load %arg17[%c1_127, %c0_128, %c0_129] : memref<2x1x128xf32, #tpu.memory_space<vmem>>, vector<1x1x128xf32>
    %248 = vector.shape_cast %247 : vector<1x1x128xf32> to vector<1x128xf32>
    %249 = vector.broadcast %248 : vector<1x128xf32> to vector<16x128xf32>
    %250 = arith.addf %246, %249 : vector<16x128xf32>
    %cst_130 = arith.constant 2.000000e+00 : f32
    %251 = vector.broadcast %cst_130 : f32 to vector<16x128xf32>
    %252 = arith.mulf %251, %148 : vector<16x128xf32>
    %253 = arith.addf %252, %250 : vector<16x128xf32>
    %254 = arith.truncf %253 : vector<16x128xf32> to vector<16x128xbf16>
    %c0_131 = arith.constant 0 : index
    %c0_132 = arith.constant 0 : index
    %255 = vector.load %arg18[%c0_131, %c0_132] : memref<128x128xbf16, #tpu.memory_space<vmem>>, vector<128x128xbf16>
    %cst_133 = arith.constant dense<0.000000e+00> : vector<16x128xf32>
    %256 = tpu.matmul %254, %255, %cst_133 {dimension_numbers = #tpu.dot_dimension_numbers<[1], [0], [0], [1], [0, 0, 1, 1], [], []>} : vector<16x128xbf16>, vector<128x128xbf16>, vector<16x128xf32> -> vector<16x128xf32>
    %c0_134 = arith.constant 0 : index
    %c0_135 = arith.constant 0 : index
    %257 = vector.load %arg19[%c0_134, %c0_135] : memref<1x128xf32, #tpu.memory_space<vmem>>, vector<1x128xf32>
    %258 = vector.broadcast %257 : vector<1x128xf32> to vector<16x128xf32>
    %259 = arith.addf %256, %258 : vector<16x128xf32>
    %cst_136 = arith.constant 0.000000e+00 : f32
    %260 = vector.broadcast %cst_136 : f32 to vector<16x128xf32>
    %261 = arith.maximumf %259, %260 : vector<16x128xf32>
    %262 = math.absf %259 : vector<16x128xf32>
    %cst_137 = arith.constant 0.000000e+00 : f32
    %263 = vector.broadcast %cst_137 : f32 to vector<16x128xf32>
    %264 = arith.subf %263, %262 : vector<16x128xf32>
    %265 = math.exp %264 : vector<16x128xf32>
    %cst_138 = arith.constant 1.000000e+00 : f32
    %266 = vector.broadcast %cst_138 : f32 to vector<16x128xf32>
    %267 = arith.addf %266, %265 : vector<16x128xf32>
    %268 = math.log %267 : vector<16x128xf32>
    %269 = arith.addf %261, %268 : vector<16x128xf32>
    %cst_139 = arith.constant 0.693147182 : f32
    %270 = vector.broadcast %cst_139 : f32 to vector<16x128xf32>
    %271 = arith.subf %269, %270 : vector<16x128xf32>
    %272 = arith.truncf %271 : vector<16x128xf32> to vector<16x128xbf16>
    %c0_140 = arith.constant 0 : index
    %c0_141 = arith.constant 0 : index
    %273 = vector.load %arg20[%c0_140, %c0_141] : memref<128x128xbf16, #tpu.memory_space<vmem>>, vector<128x128xbf16>
    %cst_142 = arith.constant dense<0.000000e+00> : vector<16x128xf32>
    %274 = tpu.matmul %272, %273, %cst_142 {dimension_numbers = #tpu.dot_dimension_numbers<[1], [0], [0], [1], [0, 0, 1, 1], [], []>} : vector<16x128xbf16>, vector<128x128xbf16>, vector<16x128xf32> -> vector<16x128xf32>
    %c0_143 = arith.constant 0 : index
    %c0_144 = arith.constant 0 : index
    %275 = vector.load %arg21[%c0_143, %c0_144] : memref<1x128xf32, #tpu.memory_space<vmem>>, vector<1x128xf32>
    %276 = vector.broadcast %275 : vector<1x128xf32> to vector<16x128xf32>
    %277 = arith.addf %274, %276 : vector<16x128xf32>
    %c0_145 = arith.constant 0 : index
    %c0_146 = arith.constant 0 : index
    %278 = vector.load %arg5[%c0_145, %c0_146] : memref<2x16xf32, #tpu.memory_space<vmem>>, vector<2x16xf32>
    %cst_147 = arith.constant dense<0.000000e+00> : vector<2x128xf32>
    %279 = tpu.matmul %278, %277, %cst_147 {dimension_numbers = #tpu.dot_dimension_numbers<[1], [0], [0], [1], [0, 0, 1, 1], [], []>} : vector<2x16xf32>, vector<16x128xf32>, vector<2x128xf32> -> vector<2x128xf32>
    %c0_148 = arith.constant 0 : index
    %c0_149 = arith.constant 0 : index
    %280 = vector.load %arg22[%c0_148, %c0_149] : memref<2x128xf32, #tpu.memory_space<vmem>>, vector<2x128xf32>
    tpu.vector_store %arg22[%c0_148, %c0_149], %279 {strides = array<i32>} : memref<2x128xf32, #tpu.memory_space<vmem>>, vector<2x128xf32>,
    return
  }
}

</mosaic_0001>

<llo_original>
// kernel: forward.1
$region0: #{forward.1}
  #allocation0 [shape = 'u32[]', space=smem, size = 0x4, offset = 0x4, fixed_abs, tag = 'smem constant byte address 0x4 - core index']
  #allocation1 [shape = 'u32[144,128]{1,0:T(1,128)}', space=vmem, size = 0x12000, scoped, tag = 'internal scratch']
  %s0 = inlined_call_operand.vmem [shape: f32[16,128], index: 0, kind: input, shape index: {}]
  %s1 = inlined_call_operand.vmem [shape: f32[16,3], index: 1, kind: input, shape index: {}]
  %s2 = inlined_call_operand.hbm [shape: f32[3,16], index: 2, kind: input, shape index: {}]
  %s3 = inlined_call_operand.vmem [shape: f32[16,16], index: 3, kind: input, shape index: {}]
  %s4 = inlined_call_operand.vmem [shape: f32[1,1,128], index: 4, kind: input, shape index: {}]
  %s5 = inlined_call_operand.vmem [shape: f32[2,16], index: 5, kind: input, shape index: {}]
  %s6 = inlined_call_operand.hbm [shape: bf16[2,128,128], index: 6, kind: input, shape index: {}]
  %s7 = inlined_call_operand.vmem [shape: f32[2,1,128], index: 7, kind: input, shape index: {}, may-alias: {7,9,11,13,15,17}]
  %s8 = inlined_call_operand.hbm [shape: bf16[2,128,128], index: 8, kind: input, shape index: {}]
  %s9 = inlined_call_operand.vmem [shape: f32[2,1,128], index: 9, kind: input, shape index: {}, may-alias: {7,9,11,13,15,17}]
  %s10 = inlined_call_operand.hbm [shape: bf16[2,128,128], index: 10, kind: input, shape index: {}]
  %s11 = inlined_call_operand.vmem [shape: f32[2,1,128], index: 11, kind: input, shape index: {}, may-alias: {7,9,11,13,15,17}]
  %s12 = inlined_call_operand.hbm [shape: bf16[2,128,128], index: 12, kind: input, shape index: {}]
  %s13 = inlined_call_operand.vmem [shape: f32[2,1,128], index: 13, kind: input, shape index: {}, may-alias: {7,9,11,13,15,17}]
  %s14 = inlined_call_operand.vmem [shape: bf16[2,128,128], index: 14, kind: input, shape index: {}]
  %s15 = inlined_call_operand.vmem [shape: f32[2,1,128], index: 15, kind: input, shape index: {}, may-alias: {7,9,11,13,15,17}]
  %s16 = inlined_call_operand.vmem [shape: bf16[2,128,128], index: 16, kind: input, shape index: {}]
  %s17 = inlined_call_operand.vmem [shape: f32[2,1,128], index: 17, kind: input, shape index: {}, may-alias: {7,9,11,13,15,17}]
  %s18 = inlined_call_operand.hbm [shape: bf16[128,128], index: 18, kind: input, shape index: {}]
  %s19 = inlined_call_operand.vmem [shape: f32[1,128], index: 19, kind: input, shape index: {}, may-alias: {19,21}]
  %s20 = inlined_call_operand.vmem [shape: bf16[128,128], index: 20, kind: input, shape index: {}]
  %s21 = inlined_call_operand.vmem [shape: f32[1,128], index: 21, kind: input, shape index: {}, may-alias: {19,21}]
  %s22 = inlined_call_operand.vmem [shape: f32[2,128], index: 22, kind: output, shape index: {}]
  %s23 = sld [smem:[#allocation0]]
  $region122: #{forward.1} parent=0
    _
  %s25 = ssub.s32 1, %s23
  %s26 = scalar_select 0, %s25, %s23
  $region1: #{forward.1} parent=0
    #allocation2 [shape = 'u8[2048]{0}', space=vmem, size = 0x800, scoped, tag = 'input window, operand 2, single buffered']
    #allocation3 [shape = 's32[1]{0}', space=sflag, size = 0x4, scoped, tag = 'scoped memory for forward.1']
    #allocation4 [shape = 'u8[65536]{0}', space=vmem, size = 0x10000, scoped, tag = 'input window, operand 6, single buffered']
    #allocation5 [shape = 's32[1]{0}', space=sflag, size = 0x4, scoped, tag = 'scoped memory for forward.1']
    #allocation6 [shape = 'u8[65536]{0}', space=vmem, size = 0x10000, scoped, tag = 'input window, operand 8, single buffered']
    #allocation7 [shape = 'u8[65536]{0}', space=vmem, size = 0x10000, scoped, tag = 'input window, operand 10, single buffered']
    #allocation8 [shape = 's32[1]{0}', space=sflag, size = 0x4, scoped, tag = 'scoped memory for forward.1']
    #allocation9 [shape = 'u8[65536]{0}', space=vmem, size = 0x10000, scoped, tag = 'input window, operand 12, single buffered']
    #allocation10 [shape = 'u8[32768]{0}', space=vmem, size = 0x8000, scoped, tag = 'input window, operand 18, single buffered']
    #allocation11 [shape = 's32[1]{0}', space=sflag, size = 0x4, scoped, tag = 'scoped memory for forward.1']
    %27 = vsyncpa [#allocation3], 0
    %28 = vsyncpa [#allocation5], 0
    %29 = vsyncpa [#allocation8], 0
    %30 = vsyncpa [#allocation11], 0
    // Predicated region
    $region2: #{forward.1} parent=1 // pred_check
      _
    $region3: #{forward.1} parent=1 // pred_check_branch
      %32 = sbr.rel (0) target = $region5
    $region4: #{forward.1} parent=1 // pred_region
      _
    $region5: #{forward.1} parent=1 // pred_fallthru
      _
    // Predicated region
    $region6: #{forward.1} parent=1 // pred_check
      _
    $region7: #{forward.1} parent=1 // pred_check_branch
      %34 = sbr.rel (0) target = $region9
    $region8: #{forward.1} parent=1 // pred_region
      _
    $region9: #{forward.1} parent=1 // pred_fallthru
      _
    // Predicated region
    $region10: #{forward.1} parent=1 // pred_check
      _
    $region11: #{forward.1} parent=1 // pred_check_branch
      %36 = sbr.rel (0) target = $region13
    $region12: #{forward.1} parent=1 // pred_region
      %s38 = ssub.s32 64, 64
      %39 = vsyncadd [#allocation3], %s38
      %s41 = sshll.u32 [#allocation2], 4
      %s42 = int_to_ptr.vmem [resolvable:$true] %s41
      %44 = dma.hbm_to_vmem [thread:$0]  %s2, 64, %s42, [#allocation3]
    $region13: #{forward.1} parent=1 // pred_fallthru
      _
    // Predicated region
    $region14: #{forward.1} parent=1 // pred_check
      _
    $region15: #{forward.1} parent=1 // pred_check_branch
      %46 = sbr.rel (0) target = $region17
    $region16: #{forward.1} parent=1 // pred_region
      _
    $region17: #{forward.1} parent=1 // pred_fallthru
      _
    // Predicated region
    $region18: #{forward.1} parent=1 // pred_check
      _
    $region19: #{forward.1} parent=1 // pred_check_branch
      %48 = sbr.rel (0) target = $region21
    $region20: #{forward.1} parent=1 // pred_region
      _
    $region21: #{forward.1} parent=1 // pred_fallthru
      _
    // Predicated region
    $region22: #{forward.1} parent=1 // pred_check
      _
    $region23: #{forward.1} parent=1 // pred_check_branch
      %50 = sbr.rel (0) target = $region25
    $region24: #{forward.1} parent=1 // pred_region
      _
    $region25: #{forward.1} parent=1 // pred_fallthru
      _
    // Predicated region
    $region26: #{forward.1} parent=1 // pred_check
      _
    $region27: #{forward.1} parent=1 // pred_check_branch
      %52 = sbr.rel (0) target = $region29
    $region28: #{forward.1} parent=1 // pred_region
      %s54 = ssub.s32 2048, 2048
      %55 = vsyncadd [#allocation5], %s54
      %s56 = sshll.u32 [#allocation4], 4
      %s57 = int_to_ptr.vmem [resolvable:$true] %s56
      %62 = dma.hbm_to_vmem [thread:$0]  %s6, 2048, %s57, [#allocation5], 64, 64, 4
    $region29: #{forward.1} parent=1 // pred_fallthru
      _
    // Predicated region
    $region30: #{forward.1} parent=1 // pred_check
      _
    $region31: #{forward.1} parent=1 // pred_check_branch
      %64 = sbr.rel (0) target = $region33
    $region32: #{forward.1} parent=1 // pred_region
      _
    $region33: #{forward.1} parent=1 // pred_fallthru
      _
    // Predicated region
    $region34: #{forward.1} parent=1 // pred_check
      _
    $region35: #{forward.1} parent=1 // pred_check_branch
      %66 = sbr.rel (0) target = $region37
    $region36: #{forward.1} parent=1 // pred_region
      %s68 = ssub.s32 2048, 2048
      %69 = vsyncadd [#allocation5], %s68
      %s70 = sshll.u32 [#allocation6], 4
      %s71 = int_to_ptr.vmem [resolvable:$true] %s70
      %76 = dma.hbm_to_vmem [thread:$0]  %s8, 2048, %s71, [#allocation5], 64, 64, 4
    $region37: #{forward.1} parent=1 // pred_fallthru
      _
    // Predicated region
    $region38: #{forward.1} parent=1 // pred_check
      _
    $region39: #{forward.1} parent=1 // pred_check_branch
      %78 = sbr.rel (0) target = $region41
    $region40: #{forward.1} parent=1 // pred_region
      _
    $region41: #{forward.1} parent=1 // pred_fallthru
      _
    // Predicated region
    $region42: #{forward.1} parent=1 // pred_check
      _
    $region43: #{forward.1} parent=1 // pred_check_branch
      %80 = sbr.rel (0) target = $region45
    $region44: #{forward.1} parent=1 // pred_region
      %s82 = ssub.s32 2048, 2048
      %83 = vsyncadd [#allocation8], %s82
      %s84 = sshll.u32 [#allocation7], 4
      %s85 = int_to_ptr.vmem [resolvable:$true] %s84
      %90 = dma.hbm_to_vmem [thread:$0]  %s10, 2048, %s85, [#allocation8], 64, 64, 4
    $region45: #{forward.1} parent=1 // pred_fallthru
      _
    // Predicated region
    $region46: #{forward.1} parent=1 // pred_check
      _
    $region47: #{forward.1} parent=1 // pred_check_branch
      %92 = sbr.rel (0) target = $region49
    $region48: #{forward.1} parent=1 // pred_region
      _
    $region49: #{forward.1} parent=1 // pred_fallthru
      _
    // Predicated region
    $region50: #{forward.1} parent=1 // pred_check
      _
    $region51: #{forward.1} parent=1 // pred_check_branch
      %94 = sbr.rel (0) target = $region53
    $region52: #{forward.1} parent=1 // pred_region
      %s96 = ssub.s32 2048, 2048
      %97 = vsyncadd [#allocation8], %s96
      %s98 = sshll.u32 [#allocation9], 4
      %s99 = int_to_ptr.vmem [resolvable:$true] %s98
      %104 = dma.hbm_to_vmem [thread:$0]  %s12, 2048, %s99, [#allocation8], 64, 64, 4
    $region53: #{forward.1} parent=1 // pred_fallthru
      _
    // Predicated region
    $region54: #{forward.1} parent=1 // pred_check
      _
    $region55: #{forward.1} parent=1 // pred_check_branch
      %106 = sbr.rel (0) target = $region57
    $region56: #{forward.1} parent=1 // pred_region
      _
    $region57: #{forward.1} parent=1 // pred_fallthru
      _
    // Predicated region
    $region58: #{forward.1} parent=1 // pred_check
      _
    $region59: #{forward.1} parent=1 // pred_check_branch
      %108 = sbr.rel (0) target = $region61
    $region60: #{forward.1} parent=1 // pred_region
      _
    $region61: #{forward.1} parent=1 // pred_fallthru
      _
    // Predicated region
    $region62: #{forward.1} parent=1 // pred_check
      _
    $region63: #{forward.1} parent=1 // pred_check_branch
      %110 = sbr.rel (0) target = $region65
    $region64: #{forward.1} parent=1 // pred_region
      _
    $region65: #{forward.1} parent=1 // pred_fallthru
      _
    // Predicated region
    $region66: #{forward.1} parent=1 // pred_check
      _
    $region67: #{forward.1} parent=1 // pred_check_branch
      %112 = sbr.rel (0) target = $region69
    $region68: #{forward.1} parent=1 // pred_region
      _
    $region69: #{forward.1} parent=1 // pred_fallthru
      _
    // Predicated region
    $region70: #{forward.1} parent=1 // pred_check
      _
    $region71: #{forward.1} parent=1 // pred_check_branch
      %114 = sbr.rel (0) target = $region73
    $region72: #{forward.1} parent=1 // pred_region
      _
    $region73: #{forward.1} parent=1 // pred_fallthru
      _
    // Predicated region
    $region74: #{forward.1} parent=1 // pred_check
      _
    $region75: #{forward.1} parent=1 // pred_check_branch
      %116 = sbr.rel (0) target = $region77
    $region76: #{forward.1} parent=1 // pred_region
      %s118 = ssub.s32 1024, 1024
      %119 = vsyncadd [#allocation11], %s118
      %s120 = sshll.u32 [#allocation10], 4
      %s121 = int_to_ptr.vmem [resolvable:$true] %s120
      %126 = dma.hbm_to_vmem [thread:$0]  %s18, 1024, %s121, [#allocation11], 64, 64, 4
    $region77: #{forward.1} parent=1 // pred_fallthru
      _
    // Predicated region
    $region78: #{forward.1} parent=1 // pred_check
      _
    $region79: #{forward.1} parent=1 // pred_check_branch
      %128 = sbr.rel (0) target = $region81
    $region80: #{forward.1} parent=1 // pred_region
      _
    $region81: #{forward.1} parent=1 // pred_fallthru
      _
    // Predicated region
    $region82: #{forward.1} parent=1 // pred_check
      _
    $region83: #{forward.1} parent=1 // pred_check_branch
      %130 = sbr.rel (0) target = $region85
    $region84: #{forward.1} parent=1 // pred_region
      _
    $region85: #{forward.1} parent=1 // pred_fallthru
      _
    // Predicated region
    $region86: #{forward.1} parent=1 // pred_check
      _
    $region87: #{forward.1} parent=1 // pred_check_branch
      %132 = sbr.rel (0) target = $region89
    $region88: #{forward.1} parent=1 // pred_region
      _
    $region89: #{forward.1} parent=1 // pred_fallthru
      _
    // Predicated region
    $region90: #{forward.1} parent=1 // pred_check
      _
    $region91: #{forward.1} parent=1 // pred_check_branch
      %134 = sbr.rel (0) target = $region93
    $region92: #{forward.1} parent=1 // pred_region
      %135 = dma.done [#allocation3], 64
    $region93: #{forward.1} parent=1 // pred_fallthru
      _
    // Predicated region
    $region94: #{forward.1} parent=1 // pred_check
      _
    $region95: #{forward.1} parent=1 // pred_check_branch
      %137 = sbr.rel (0) target = $region97
    $region96: #{forward.1} parent=1 // pred_region
      %138 = dma.done [#allocation5], 2048
    $region97: #{forward.1} parent=1 // pred_fallthru
      _
    // Predicated region
    $region98: #{forward.1} parent=1 // pred_check
      _
    $region99: #{forward.1} parent=1 // pred_check_branch
      %140 = sbr.rel (0) target = $region101
    $region100: #{forward.1} parent=1 // pred_region
      %141 = dma.done [#allocation5], 2048
    $region101: #{forward.1} parent=1 // pred_fallthru
      _
    // Predicated region
    $region102: #{forward.1} parent=1 // pred_check
      _
    $region103: #{forward.1} parent=1 // pred_check_branch
      %143 = sbr.rel (0) target = $region105
    $region104: #{forward.1} parent=1 // pred_region
      %144 = dma.done [#allocation8], 2048
    $region105: #{forward.1} parent=1 // pred_fallthru
      _
    // Predicated region
    $region106: #{forward.1} parent=1 // pred_check
      _
    $region107: #{forward.1} parent=1 // pred_check_branch
      %146 = sbr.rel (0) target = $region109
    $region108: #{forward.1} parent=1 // pred_region
      %147 = dma.done [#allocation8], 2048
    $region109: #{forward.1} parent=1 // pred_fallthru
      _
    // Predicated region
    $region110: #{forward.1} parent=1 // pred_check
      _
    $region111: #{forward.1} parent=1 // pred_check_branch
      %149 = sbr.rel (0) target = $region113
    $region112: #{forward.1} parent=1 // pred_region
      %150 = dma.done [#allocation11], 1024
    $region113: #{forward.1} parent=1 // pred_fallthru
      _
    %v152 = vld [vmem:[%s0] sm:$0xff]
    %v153 = vld [vmem:[%s0 + $0x8] sm:$0xff]
    %v154 = vld [vmem:[%s1] sm:$0xff]
    %v155 = vld [vmem:[%s1 + $0x8] sm:$0xff]
    %v156 = vld [vmem:[#allocation2] sm:$0x7]
    %158 = vset.pattern.permute.xlu0 0
    %159 = vperm.xlu0 %158, %v154
    %v160 = vpop.permute.xlu0 %159
    %163 = vset.pattern.permute.xlu0 0
    %164 = vperm.xlu0 %163, %v155
    %v165 = vpop.permute.xlu0 %164
    %v167 = vlaneseq
    %v168 = vshrl.u32 %v167, 7
    %v169 = vsub.s32 0, %v168
    %v170 = vrot.slane %v156, %v169
    %v171 = vsub.f32 %v160, %v170
    %v172 = vsub.f32 %v165, %v170
    %v173 = vmul.f32 %v171, %v171
    %v174 = vmul.f32 %v172, %v172
    %v175 = vadd.f32 %v173, 0.0
    %v176 = vadd.f32 %v174, 0.0
    %177 = vset.pattern.permute.xlu0 1
    %178 = vperm.xlu0 %177, %v154
    %v179 = vpop.permute.xlu0 %178
    %181 = vset.pattern.permute.xlu0 1
    %182 = vperm.xlu0 %181, %v155
    %v183 = vpop.permute.xlu0 %182
    %v185 = vlaneseq
    %v186 = vshrl.u32 %v185, 7
    %v187 = vsub.s32 1, %v186
    %v188 = vrot.slane %v156, %v187
    %v189 = vsub.f32 %v179, %v188
    %v190 = vsub.f32 %v183, %v188
    %v191 = vmul.f32 %v189, %v189
    %v192 = vmul.f32 %v190, %v190
    %v193 = vadd.f32 %v175, %v191
    %v194 = vadd.f32 %v176, %v192
    %195 = vset.pattern.permute.xlu0 2
    %196 = vperm.xlu0 %195, %v154
    %v197 = vpop.permute.xlu0 %196
    %199 = vset.pattern.permute.xlu0 2
    %200 = vperm.xlu0 %199, %v155
    %v201 = vpop.permute.xlu0 %200
    %v203 = vlaneseq
    %v204 = vshrl.u32 %v203, 7
    %v205 = vsub.s32 2, %v204
    %v206 = vrot.slane %v156, %v205
    %v207 = vsub.f32 %v197, %v206
    %v208 = vsub.f32 %v201, %v206
    %v209 = vmul.f32 %v207, %v207
    %v210 = vmul.f32 %v208, %v208
    %v211 = vadd.f32 %v193, %v209
    %v212 = vadd.f32 %v194, %v210
    %v213 = vrsqrt.pop %v211
    %v214 = vmul.f32 %v211, %v213
    %vm215 = vcmp.eq.f32.partialorder %v211, inf
    %v216 = vsel %vm215, %v211, %v214
    %vm217 = vcmp.eq.f32.partialorder %v211, 0.0
    %v218 = vand.u32 %v211, 2147483648
    %v219 = vsel %vm217, %v218, %v216
    %v220 = vrsqrt.pop %v212
    %v221 = vmul.f32 %v212, %v220
    %vm222 = vcmp.eq.f32.partialorder %v212, inf
    %v223 = vsel %vm222, %v212, %v221
    %vm224 = vcmp.eq.f32.partialorder %v212, 0.0
    %v225 = vand.u32 %v212, 2147483648
    %v226 = vsel %vm224, %v225, %v223
    %v227 = vld [vmem:[%s3] sm:$0xff]
    %v228 = vld [vmem:[%s3 + $0x8] sm:$0xff]
    %vm229 = vcmp.lt.f32.partialorder %v219, 10.0
    %vm230 = vcmp.lt.f32.partialorder %v226, 10.0
    %v231 = vsel %vm229, 1, 0
    %v232 = vsel %vm230, 1, 0
    %v233 = vcvt.s32.f32 %v231
    %v234 = vcvt.s32.f32 %v232
    %v235 = vmul.f32 %v227, %v233
    %v236 = vmul.f32 %v228, %v234
    %v237 = vlaneseq
    %v238 = vshrl.u32 %v237, 7
    %v239 = vsub.s32 0, %v238
    %v240 = vrot.slane %v235, %v239
    %242 = vbcast.lane.b32.xlu0 %v240, 256
    %v243 = vpop.permute.xlu0 %242
    %s245 = sor.u32 256, 8
    %246 = vbcast.lane.b32.xlu0 %v240, %s245
    %v247 = vpop.permute.xlu0 %246
    %v248 = vlaneseq
    %v249 = vshrl.u32 %v248, 7
    %v250 = vsub.s32 1, %v249
    %v251 = vrot.slane %v235, %v250
    %253 = vbcast.lane.b32.xlu0 %v251, 256
    %v254 = vpop.permute.xlu0 %253
    %s256 = sor.u32 256, 8
    %257 = vbcast.lane.b32.xlu0 %v251, %s256
    %v258 = vpop.permute.xlu0 %257
    %v259 = vlaneseq
    %v260 = vshrl.u32 %v259, 7
    %v261 = vsub.s32 2, %v260
    %v262 = vrot.slane %v235, %v261
    %264 = vbcast.lane.b32.xlu0 %v262, 256
    %v265 = vpop.permute.xlu0 %264
    %s267 = sor.u32 256, 8
    %268 = vbcast.lane.b32.xlu0 %v262, %s267
    %v269 = vpop.permute.xlu0 %268
    %v270 = vlaneseq
    %v271 = vshrl.u32 %v270, 7
    %v272 = vsub.s32 3, %v271
    %v273 = vrot.slane %v235, %v272
    %275 = vbcast.lane.b32.xlu0 %v273, 256
    %v276 = vpop.permute.xlu0 %275
    %s278 = sor.u32 256, 8
    %279 = vbcast.lane.b32.xlu0 %v273, %s278
    %v280 = vpop.permute.xlu0 %279
    %v281 = vlaneseq
    %v282 = vshrl.u32 %v281, 7
    %v283 = vsub.s32 4, %v282
    %v284 = vrot.slane %v235, %v283
    %286 = vbcast.lane.b32.xlu0 %v284, 256
    %v287 = vpop.permute.xlu0 %286
    %s289 = sor.u32 256, 8
    %290 = vbcast.lane.b32.xlu0 %v284, %s289
    %v291 = vpop.permute.xlu0 %290
    %v292 = vlaneseq
    %v293 = vshrl.u32 %v292, 7
    %v294 = vsub.s32 5, %v293
    %v295 = vrot.slane %v235, %v294
    %297 = vbcast.lane.b32.xlu0 %v295, 256
    %v298 = vpop.permute.xlu0 %297
    %s300 = sor.u32 256, 8
    %301 = vbcast.lane.b32.xlu0 %v295, %s300
    %v302 = vpop.permute.xlu0 %301
    %v303 = vlaneseq
    %v304 = vshrl.u32 %v303, 7
    %v305 = vsub.s32 6, %v304
    %v306 = vrot.slane %v235, %v305
    %308 = vbcast.lane.b32.xlu0 %v306, 256
    %v309 = vpop.permute.xlu0 %308
    %s311 = sor.u32 256, 8
    %312 = vbcast.lane.b32.xlu0 %v306, %s311
    %v313 = vpop.permute.xlu0 %312
    %v314 = vlaneseq
    %v315 = vshrl.u32 %v314, 7
    %v316 = vsub.s32 7, %v315
    %v317 = vrot.slane %v235, %v316
    %319 = vbcast.lane.b32.xlu0 %v317, 256
    %v320 = vpop.permute.xlu0 %319
    %s322 = sor.u32 256, 8
    %323 = vbcast.lane.b32.xlu0 %v317, %s322
    %v324 = vpop.permute.xlu0 %323
    %v325 = vlaneseq
    %v326 = vshrl.u32 %v325, 7
    %v327 = vsub.s32 0, %v326
    %v328 = vrot.slane %v236, %v327
    %330 = vbcast.lane.b32.xlu0 %v328, 256
    %v331 = vpop.permute.xlu0 %330
    %s333 = sor.u32 256, 8
    %334 = vbcast.lane.b32.xlu0 %v328, %s333
    %v335 = vpop.permute.xlu0 %334
    %v336 = vlaneseq
    %v337 = vshrl.u32 %v336, 7
    %v338 = vsub.s32 1, %v337
    %v339 = vrot.slane %v236, %v338
    %341 = vbcast.lane.b32.xlu0 %v339, 256
    %v342 = vpop.permute.xlu0 %341
    %s344 = sor.u32 256, 8
    %345 = vbcast.lane.b32.xlu0 %v339, %s344
    %v346 = vpop.permute.xlu0 %345
    %v347 = vlaneseq
    %v348 = vshrl.u32 %v347, 7
    %v349 = vsub.s32 2, %v348
    %v350 = vrot.slane %v236, %v349
    %352 = vbcast.lane.b32.xlu0 %v350, 256
    %v353 = vpop.permute.xlu0 %352
    %s355 = sor.u32 256, 8
    %356 = vbcast.lane.b32.xlu0 %v350, %s355
    %v357 = vpop.permute.xlu0 %356
    %v358 = vlaneseq
    %v359 = vshrl.u32 %v358, 7
    %v360 = vsub.s32 3, %v359
    %v361 = vrot.slane %v236, %v360
    %363 = vbcast.lane.b32.xlu0 %v361, 256
    %v364 = vpop.permute.xlu0 %363
    %s366 = sor.u32 256, 8
    %367 = vbcast.lane.b32.xlu0 %v361, %s366
    %v368 = vpop.permute.xlu0 %367
    %v369 = vlaneseq
    %v370 = vshrl.u32 %v369, 7
    %v371 = vsub.s32 4, %v370
    %v372 = vrot.slane %v236, %v371
    %374 = vbcast.lane.b32.xlu0 %v372, 256
    %v375 = vpop.permute.xlu0 %374
    %s377 = sor.u32 256, 8
    %378 = vbcast.lane.b32.xlu0 %v372, %s377
    %v379 = vpop.permute.xlu0 %378
    %v380 = vlaneseq
    %v381 = vshrl.u32 %v380, 7
    %v382 = vsub.s32 5, %v381
    %v383 = vrot.slane %v236, %v382
    %385 = vbcast.lane.b32.xlu0 %v383, 256
    %v386 = vpop.permute.xlu0 %385
    %s388 = sor.u32 256, 8
    %389 = vbcast.lane.b32.xlu0 %v383, %s388
    %v390 = vpop.permute.xlu0 %389
    %v391 = vlaneseq
    %v392 = vshrl.u32 %v391, 7
    %v393 = vsub.s32 6, %v392
    %v394 = vrot.slane %v236, %v393
    %396 = vbcast.lane.b32.xlu0 %v394, 256
    %v397 = vpop.permute.xlu0 %396
    %s399 = sor.u32 256, 8
    %400 = vbcast.lane.b32.xlu0 %v394, %s399
    %v401 = vpop.permute.xlu0 %400
    %v402 = vlaneseq
    %v403 = vshrl.u32 %v402, 7
    %v404 = vsub.s32 7, %v403
    %v405 = vrot.slane %v236, %v404
    %407 = vbcast.lane.b32.xlu0 %v405, 256
    %v408 = vpop.permute.xlu0 %407
    %s410 = sor.u32 256, 8
    %411 = vbcast.lane.b32.xlu0 %v405, %s410
    %v412 = vpop.permute.xlu0 %411
    %v413 = vlaneseq
    %v414 = vshrl.u32 %v413, 7
    %v415 = vsub.s32 0, %v414
    %v416 = vrot.slane %v219, %v415
    %418 = vbcast.lane.b32.xlu0 %v416, 256
    %v419 = vpop.permute.xlu0 %418
    %s421 = sor.u32 256, 8
    %422 = vbcast.lane.b32.xlu0 %v416, %s421
    %v423 = vpop.permute.xlu0 %422
    %v424 = vlaneseq
    %v425 = vshrl.u32 %v424, 7
    %v426 = vsub.s32 1, %v425
    %v427 = vrot.slane %v219, %v426
    %429 = vbcast.lane.b32.xlu0 %v427, 256
    %v430 = vpop.permute.xlu0 %429
    %s432 = sor.u32 256, 8
    %433 = vbcast.lane.b32.xlu0 %v427, %s432
    %v434 = vpop.permute.xlu0 %433
    %v435 = vlaneseq
    %v436 = vshrl.u32 %v435, 7
    %v437 = vsub.s32 2, %v436
    %v438 = vrot.slane %v219, %v437
    %440 = vbcast.lane.b32.xlu0 %v438, 256
    %v441 = vpop.permute.xlu0 %440
    %s443 = sor.u32 256, 8
    %444 = vbcast.lane.b32.xlu0 %v438, %s443
    %v445 = vpop.permute.xlu0 %444
    %v446 = vlaneseq
    %v447 = vshrl.u32 %v446, 7
    %v448 = vsub.s32 3, %v447
    %v449 = vrot.slane %v219, %v448
    %451 = vbcast.lane.b32.xlu0 %v449, 256
    %v452 = vpop.permute.xlu0 %451
    %s454 = sor.u32 256, 8
    %455 = vbcast.lane.b32.xlu0 %v449, %s454
    %v456 = vpop.permute.xlu0 %455
    %v457 = vlaneseq
    %v458 = vshrl.u32 %v457, 7
    %v459 = vsub.s32 4, %v458
    %v460 = vrot.slane %v219, %v459
    %462 = vbcast.lane.b32.xlu0 %v460, 256
    %v463 = vpop.permute.xlu0 %462
    %s465 = sor.u32 256, 8
    %466 = vbcast.lane.b32.xlu0 %v460, %s465
    %v467 = vpop.permute.xlu0 %466
    %v468 = vlaneseq
    %v469 = vshrl.u32 %v468, 7
    %v470 = vsub.s32 5, %v469
    %v471 = vrot.slane %v219, %v470
    %473 = vbcast.lane.b32.xlu0 %v471, 256
    %v474 = vpop.permute.xlu0 %473
    %s476 = sor.u32 256, 8
    %477 = vbcast.lane.b32.xlu0 %v471, %s476
    %v478 = vpop.permute.xlu0 %477
    %v479 = vlaneseq
    %v480 = vshrl.u32 %v479, 7
    %v481 = vsub.s32 6, %v480
    %v482 = vrot.slane %v219, %v481
    %484 = vbcast.lane.b32.xlu0 %v482, 256
    %v485 = vpop.permute.xlu0 %484
    %s487 = sor.u32 256, 8
    %488 = vbcast.lane.b32.xlu0 %v482, %s487
    %v489 = vpop.permute.xlu0 %488
    %v490 = vlaneseq
    %v491 = vshrl.u32 %v490, 7
    %v492 = vsub.s32 7, %v491
    %v493 = vrot.slane %v219, %v492
    %495 = vbcast.lane.b32.xlu0 %v493, 256
    %v496 = vpop.permute.xlu0 %495
    %s498 = sor.u32 256, 8
    %499 = vbcast.lane.b32.xlu0 %v493, %s498
    %v500 = vpop.permute.xlu0 %499
    %v501 = vlaneseq
    %v502 = vshrl.u32 %v501, 7
    %v503 = vsub.s32 0, %v502
    %v504 = vrot.slane %v226, %v503
    %506 = vbcast.lane.b32.xlu0 %v504, 256
    %v507 = vpop.permute.xlu0 %506
    %s509 = sor.u32 256, 8
    %510 = vbcast.lane.b32.xlu0 %v504, %s509
    %v511 = vpop.permute.xlu0 %510
    %v512 = vlaneseq
    %v513 = vshrl.u32 %v512, 7
    %v514 = vsub.s32 1, %v513
    %v515 = vrot.slane %v226, %v514
    %517 = vbcast.lane.b32.xlu0 %v515, 256
    %v518 = vpop.permute.xlu0 %517
    %s520 = sor.u32 256, 8
    %521 = vbcast.lane.b32.xlu0 %v515, %s520
    %v522 = vpop.permute.xlu0 %521
    %v523 = vlaneseq
    %v524 = vshrl.u32 %v523, 7
    %v525 = vsub.s32 2, %v524
    %v526 = vrot.slane %v226, %v525
    %528 = vbcast.lane.b32.xlu0 %v526, 256
    %v529 = vpop.permute.xlu0 %528
    %s531 = sor.u32 256, 8
    %532 = vbcast.lane.b32.xlu0 %v526, %s531
    %v533 = vpop.permute.xlu0 %532
    %v534 = vlaneseq
    %v535 = vshrl.u32 %v534, 7
    %v536 = vsub.s32 3, %v535
    %v537 = vrot.slane %v226, %v536
    %539 = vbcast.lane.b32.xlu0 %v537, 256
    %v540 = vpop.permute.xlu0 %539
    %s542 = sor.u32 256, 8
    %543 = vbcast.lane.b32.xlu0 %v537, %s542
    %v544 = vpop.permute.xlu0 %543
    %v545 = vlaneseq
    %v546 = vshrl.u32 %v545, 7
    %v547 = vsub.s32 4, %v546
    %v548 = vrot.slane %v226, %v547
    %550 = vbcast.lane.b32.xlu0 %v548, 256
    %v551 = vpop.permute.xlu0 %550
    %s553 = sor.u32 256, 8
    %554 = vbcast.lane.b32.xlu0 %v548, %s553
    %v555 = vpop.permute.xlu0 %554
    %v556 = vlaneseq
    %v557 = vshrl.u32 %v556, 7
    %v558 = vsub.s32 5, %v557
    %v559 = vrot.slane %v226, %v558
    %561 = vbcast.lane.b32.xlu0 %v559, 256
    %v562 = vpop.permute.xlu0 %561
    %s564 = sor.u32 256, 8
    %565 = vbcast.lane.b32.xlu0 %v559, %s564
    %v566 = vpop.permute.xlu0 %565
    %v567 = vlaneseq
    %v568 = vshrl.u32 %v567, 7
    %v569 = vsub.s32 6, %v568
    %v570 = vrot.slane %v226, %v569
    %572 = vbcast.lane.b32.xlu0 %v570, 256
    %v573 = vpop.permute.xlu0 %572
    %s575 = sor.u32 256, 8
    %576 = vbcast.lane.b32.xlu0 %v570, %s575
    %v577 = vpop.permute.xlu0 %576
    %v578 = vlaneseq
    %v579 = vshrl.u32 %v578, 7
    %v580 = vsub.s32 7, %v579
    %v581 = vrot.slane %v226, %v580
    %583 = vbcast.lane.b32.xlu0 %v581, 256
    %v584 = vpop.permute.xlu0 %583
    %s586 = sor.u32 256, 8
    %587 = vbcast.lane.b32.xlu0 %v581, %s586
    %v588 = vpop.permute.xlu0 %587
    %v589 = vld [vmem:[%s4] sm:$0x1]
    %v591 = vlaneseq
    %v592 = vshrl.u32 %v591, 7
    %v593 = vsub.s32 0, %v592
    %v594 = vrot.slane %v589, %v593
    %v596 = vsub.f32 %v419, %v594
    %v597 = vsub.f32 %v423, %v594
    %v598 = vsub.f32 %v430, %v594
    %v599 = vsub.f32 %v434, %v594
    %v600 = vsub.f32 %v441, %v594
    %v601 = vsub.f32 %v445, %v594
    %v602 = vsub.f32 %v452, %v594
    %v603 = vsub.f32 %v456, %v594
    %v604 = vsub.f32 %v463, %v594
    %v605 = vsub.f32 %v467, %v594
    %v606 = vsub.f32 %v474, %v594
    %v607 = vsub.f32 %v478, %v594
    %v608 = vsub.f32 %v485, %v594
    %v609 = vsub.f32 %v489, %v594
    %v610 = vsub.f32 %v496, %v594
    %v611 = vsub.f32 %v500, %v594
    %v612 = vsub.f32 %v507, %v594
    %v613 = vsub.f32 %v511, %v594
    %v614 = vsub.f32 %v518, %v594
    %v615 = vsub.f32 %v522, %v594
    %v616 = vsub.f32 %v529, %v594
    %v617 = vsub.f32 %v533, %v594
    %v618 = vsub.f32 %v540, %v594
    %v619 = vsub.f32 %v544, %v594
    %v620 = vsub.f32 %v551, %v594
    %v621 = vsub.f32 %v555, %v594
    %v622 = vsub.f32 %v562, %v594
    %v623 = vsub.f32 %v566, %v594
    %v624 = vsub.f32 %v573, %v594
    %v625 = vsub.f32 %v577, %v594
    %v626 = vsub.f32 %v584, %v594
    %v627 = vsub.f32 %v588, %v594
    %v628 = vmul.f32 %v596, -1.125
    %v629 = vmul.f32 %v597, -1.125
    %v630 = vmul.f32 %v598, -1.125
    %v631 = vmul.f32 %v599, -1.125
    %v632 = vmul.f32 %v600, -1.125
    %v633 = vmul.f32 %v601, -1.125
    %v634 = vmul.f32 %v602, -1.125
    %v635 = vmul.f32 %v603, -1.125
    %v636 = vmul.f32 %v604, -1.125
    %v637 = vmul.f32 %v605, -1.125
    %v638 = vmul.f32 %v606, -1.125
    %v639 = vmul.f32 %v607, -1.125
    %v640 = vmul.f32 %v608, -1.125
    %v641 = vmul.f32 %v609, -1.125
    %v642 = vmul.f32 %v610, -1.125
    %v643 = vmul.f32 %v611, -1.125
    %v644 = vmul.f32 %v612, -1.125
    %v645 = vmul.f32 %v613, -1.125
    %v646 = vmul.f32 %v614, -1.125
    %v647 = vmul.f32 %v615, -1.125
    %v648 = vmul.f32 %v616, -1.125
    %v649 = vmul.f32 %v617, -1.125
    %v650 = vmul.f32 %v618, -1.125
    %v651 = vmul.f32 %v619, -1.125
    %v652 = vmul.f32 %v620, -1.125
    %v653 = vmul.f32 %v621, -1.125
    %v654 = vmul.f32 %v622, -1.125
    %v655 = vmul.f32 %v623, -1.125
    %v656 = vmul.f32 %v624, -1.125
    %v657 = vmul.f32 %v625, -1.125
    %v658 = vmul.f32 %v626, -1.125
    %v659 = vmul.f32 %v627, -1.125
    %v660 = vmul.f32 %v628, %v596
    %v661 = vmul.f32 %v629, %v597
    %v662 = vmul.f32 %v630, %v598
    %v663 = vmul.f32 %v631, %v599
    %v664 = vmul.f32 %v632, %v600
    %v665 = vmul.f32 %v633, %v601
    %v666 = vmul.f32 %v634, %v602
    %v667 = vmul.f32 %v635, %v603
    %v668 = vmul.f32 %v636, %v604
    %v669 = vmul.f32 %v637, %v605
    %v670 = vmul.f32 %v638, %v606
    %v671 = vmul.f32 %v639, %v607
    %v672 = vmul.f32 %v640, %v608
    %v673 = vmul.f32 %v641, %v609
    %v674 = vmul.f32 %v642, %v610
    %v675 = vmul.f32 %v643, %v611
    %v676 = vmul.f32 %v644, %v612
    %v677 = vmul.f32 %v645, %v613
    %v678 = vmul.f32 %v646, %v614
    %v679 = vmul.f32 %v647, %v615
    %v680 = vmul.f32 %v648, %v616
    %v681 = vmul.f32 %v649, %v617
    %v682 = vmul.f32 %v650, %v618
    %v683 = vmul.f32 %v651, %v619
    %v684 = vmul.f32 %v652, %v620
    %v685 = vmul.f32 %v653, %v621
    %v686 = vmul.f32 %v654, %v622
    %v687 = vmul.f32 %v655, %v623
    %v688 = vmul.f32 %v656, %v624
    %v689 = vmul.f32 %v657, %v625
    %v690 = vmul.f32 %v658, %v626
    %v691 = vmul.f32 %v659, %v627
    %v692 = vmul.f32 %v660, 1.442695
    %v693 = vpow.pop %v692
    %v694 = vmul.f32 %v661, 1.442695
    %v695 = vpow.pop %v694
    %v696 = vmul.f32 %v662, 1.442695
    %v697 = vpow.pop %v696
    %v698 = vmul.f32 %v663, 1.442695
    %v699 = vpow.pop %v698
    %v700 = vmul.f32 %v664, 1.442695
    %v701 = vpow.pop %v700
    %v702 = vmul.f32 %v665, 1.442695
    %v703 = vpow.pop %v702
    %v704 = vmul.f32 %v666, 1.442695
    %v705 = vpow.pop %v704
    %v706 = vmul.f32 %v667, 1.442695
    %v707 = vpow.pop %v706
    %v708 = vmul.f32 %v668, 1.442695
    %v709 = vpow.pop %v708
    %v710 = vmul.f32 %v669, 1.442695
    %v711 = vpow.pop %v710
    %v712 = vmul.f32 %v670, 1.442695
    %v713 = vpow.pop %v712
    %v714 = vmul.f32 %v671, 1.442695
    %v715 = vpow.pop %v714
    %v716 = vmul.f32 %v672, 1.442695
    %v717 = vpow.pop %v716
    %v718 = vmul.f32 %v673, 1.442695
    %v719 = vpow.pop %v718
    %v720 = vmul.f32 %v674, 1.442695
    %v721 = vpow.pop %v720
    %v722 = vmul.f32 %v675, 1.442695
    %v723 = vpow.pop %v722
    %v724 = vmul.f32 %v676, 1.442695
    %v725 = vpow.pop %v724
    %v726 = vmul.f32 %v677, 1.442695
    %v727 = vpow.pop %v726
    %v728 = vmul.f32 %v678, 1.442695
    %v729 = vpow.pop %v728
    %v730 = vmul.f32 %v679, 1.442695
    %v731 = vpow.pop %v730
    %v732 = vmul.f32 %v680, 1.442695
    %v733 = vpow.pop %v732
    %v734 = vmul.f32 %v681, 1.442695
    %v735 = vpow.pop %v734
    %v736 = vmul.f32 %v682, 1.442695
    %v737 = vpow.pop %v736
    %v738 = vmul.f32 %v683, 1.442695
    %v739 = vpow.pop %v738
    %v740 = vmul.f32 %v684, 1.442695
    %v741 = vpow.pop %v740
    %v742 = vmul.f32 %v685, 1.442695
    %v743 = vpow.pop %v742
    %v744 = vmul.f32 %v686, 1.442695
    %v745 = vpow.pop %v744
    %v746 = vmul.f32 %v687, 1.442695
    %v747 = vpow.pop %v746
    %v748 = vmul.f32 %v688, 1.442695
    %v749 = vpow.pop %v748
    %v750 = vmul.f32 %v689, 1.442695
    %v751 = vpow.pop %v750
    %v752 = vmul.f32 %v690, 1.442695
    %v753 = vpow.pop %v752
    %v754 = vmul.f32 %v691, 1.442695
    %v755 = vpow.pop %v754
    %v756 = vpack.c.bf16 %v695, %v693
    %v757 = vpack.c.bf16 %v699, %v697
    %v758 = vpack.c.bf16 %v703, %v701
    %v759 = vpack.c.bf16 %v707, %v705
    %v760 = vpack.c.bf16 %v711, %v709
    %v761 = vpack.c.bf16 %v715, %v713
    %v762 = vpack.c.bf16 %v719, %v717
    %v763 = vpack.c.bf16 %v723, %v721
    %v764 = vpack.c.bf16 %v727, %v725
    %v765 = vpack.c.bf16 %v731, %v729
    %v766 = vpack.c.bf16 %v735, %v733
    %v767 = vpack.c.bf16 %v739, %v737
    %v768 = vpack.c.bf16 %v743, %v741
    %v769 = vpack.c.bf16 %v747, %v745
    %v770 = vpack.c.bf16 %v751, %v749
    %v771 = vpack.c.bf16 %v755, %v753
    %v772 = vld [vmem:[#allocation6] sm:$0xf]
    %v773 = vld [vmem:[#allocation6 + $0x4] sm:$0xf]
    %v774 = vld [vmem:[#allocation6 + $0x8] sm:$0xf]
    %v775 = vld [vmem:[#allocation6 + $0xc] sm:$0xf]
    %v776 = vld [vmem:[#allocation6 + $0x10] sm:$0xf]
    %v777 = vld [vmem:[#allocation6 + $0x14] sm:$0xf]
    %v778 = vld [vmem:[#allocation6 + $0x18] sm:$0xf]
    %v779 = vld [vmem:[#allocation6 + $0x1c] sm:$0xf]
    %v780 = vld [vmem:[#allocation6 + $0x20] sm:$0xf]
    %v781 = vld [vmem:[#allocation6 + $0x24] sm:$0xf]
    %v782 = vld [vmem:[#allocation6 + $0x28] sm:$0xf]
    %v783 = vld [vmem:[#allocation6 + $0x2c] sm:$0xf]
    %v784 = vld [vmem:[#allocation6 + $0x30] sm:$0xf]
    %v785 = vld [vmem:[#allocation6 + $0x34] sm:$0xf]
    %v786 = vld [vmem:[#allocation6 + $0x38] sm:$0xf]
    %v787 = vld [vmem:[#allocation6 + $0x3c] sm:$0xf]
    %v788 = vld [vmem:[%s9] sm:$0x1]
    %v790 = vlaneseq
    %v791 = vshrl.u32 %v790, 7
    %v792 = vsub.s32 0, %v791
    %v793 = vrot.slane %v788, %v792
    %v811 = vunpack.c.l.b16 %v772
    %v812 = vunpack.c.l.b16 %v773
    %v813 = vunpack.c.l.b16 %v774
    %v814 = vunpack.c.l.b16 %v775
    %v815 = vunpack.c.l.b16 %v776
    %v816 = vunpack.c.l.b16 %v777
    %v817 = vunpack.c.l.b16 %v778
    %v818 = vunpack.c.l.b16 %v779
    %v819 = vunpack.c.l.b16 %v780
    %v820 = vunpack.c.l.b16 %v781
    %v821 = vunpack.c.l.b16 %v782
    %v822 = vunpack.c.l.b16 %v783
    %v823 = vunpack.c.l.b16 %v784
    %v824 = vunpack.c.l.b16 %v785
    %v825 = vunpack.c.l.b16 %v786
    %v826 = vunpack.c.l.b16 %v787
    %v827 = vpack.c.b16 %v812, %v811
    %v828 = vpack.c.b16 %v814, %v813
    %v829 = vpack.c.b16 %v816, %v815
    %v830 = vpack.c.b16 %v818, %v817
    %v831 = vpack.c.b16 %v820, %v819
    %v832 = vpack.c.b16 %v822, %v821
    %v833 = vpack.c.b16 %v824, %v823
    %v834 = vpack.c.b16 %v826, %v825
    %843 = vmatprep.subr.bf16.mxu0 0
    %844 = vmatpush1.bf16.msra.mxu0 %v827
    %845 = vmatprep.subr.bf16.mxu0 0
    %846 = vmatpush1.bf16.msra.mxu0 %v828
    %847 = vmatprep.subr.bf16.mxu0 0
    %848 = vmatpush1.bf16.msra.mxu0 %v829
    %849 = vmatprep.subr.bf16.mxu0 0
    %850 = vmatpush1.bf16.msra.mxu0 %v830
    %851 = vmatprep.subr.bf16.mxu0 0
    %852 = vmatpush1.bf16.msra.mxu0 %v831
    %853 = vmatprep.subr.bf16.mxu0 0
    %854 = vmatpush1.bf16.msra.mxu0 %v832
    %855 = vmatprep.subr.bf16.mxu0 0
    %856 = vmatpush1.bf16.msra.mxu0 %v833
    %857 = vmatprep.subr.bf16.mxu0 0
    %858 = vmatpush1.bf16.msra.mxu0 %v834
    %859 = vmatprep.subr.bf16.mxu0 0
    %860 = vmatpush1.bf16.msra.mxu0 0
    %861 = vmatprep.subr.bf16.mxu0 0
    %862 = vmatpush1.bf16.msra.mxu0 0
    %863 = vmatprep.subr.bf16.mxu0 0
    %864 = vmatpush1.bf16.msra.mxu0 0
    %865 = vmatprep.subr.bf16.mxu0 0
    %866 = vmatpush1.bf16.msra.mxu0 0
    %867 = vmatprep.subr.bf16.mxu0 0
    %868 = vmatpush1.bf16.msra.mxu0 0
    %869 = vmatprep.subr.bf16.mxu0 0
    %870 = vmatpush1.bf16.msra.mxu0 0
    %871 = vmatprep.subr.bf16.mxu0 0
    %872 = vmatpush1.bf16.msra.mxu0 0
    %873 = vmatprep.subr.bf16.mxu0 0
    %874 = vmatpush1.bf16.msra.mxu0 0
    %875 = vmatprep.mubr.bf16.mxu0 0
    %876 = vmatmul.mubr.bf16.gmra.mrb[0].mxu0 %v756
    %v877 = vpop.f32.mrb[0].mxu0
    %v878 = vadd.f32 %v793, %v877
    %v879 = vpop.f32.mrb[0].mxu0
    %v880 = vpop.f32.mrb[0].mxu0
    %v881 = vadd.f32 %v793, %v880
    %v882 = vpop.f32.mrb[0].mxu0
    %883 = vmatprep.mubr.bf16.mxu0 0
    %884 = vmatmul.mubr.bf16.gmra.mrb[0].mxu0 %v757
    %v885 = vpop.f32.mrb[0].mxu0
    %v886 = vadd.f32 %v793, %v885
    %v887 = vpop.f32.mrb[0].mxu0
    %v888 = vpop.f32.mrb[0].mxu0
    %v889 = vadd.f32 %v793, %v888
    %v890 = vpop.f32.mrb[0].mxu0
    %891 = vmatprep.mubr.bf16.mxu0 0
    %892 = vmatmul.mubr.bf16.gmra.mrb[0].mxu0 %v758
    %v893 = vpop.f32.mrb[0].mxu0
    %v894 = vadd.f32 %v793, %v893
    %v895 = vpop.f32.mrb[0].mxu0
    %v896 = vpop.f32.mrb[0].mxu0
    %v897 = vadd.f32 %v793, %v896
    %v898 = vpop.f32.mrb[0].mxu0
    %899 = vmatprep.mubr.bf16.mxu0 0
    %900 = vmatmul.mubr.bf16.gmra.mrb[0].mxu0 %v759
    %v901 = vpop.f32.mrb[0].mxu0
    %v902 = vadd.f32 %v793, %v901
    %v903 = vpop.f32.mrb[0].mxu0
    %v904 = vpop.f32.mrb[0].mxu0
    %v905 = vadd.f32 %v793, %v904
    %v906 = vpop.f32.mrb[0].mxu0
    %907 = vmatprep.mubr.bf16.mxu0 0
    %908 = vmatmul.mubr.bf16.gmra.mrb[0].mxu0 %v760
    %v909 = vpop.f32.mrb[0].mxu0
    %v910 = vadd.f32 %v793, %v909
    %v911 = vpop.f32.mrb[0].mxu0
    %v912 = vpop.f32.mrb[0].mxu0
    %v913 = vadd.f32 %v793, %v912
    %v914 = vpop.f32.mrb[0].mxu0
    %915 = vmatprep.mubr.bf16.mxu0 0
    %916 = vmatmul.mubr.bf16.gmra.mrb[0].mxu0 %v761
    %v917 = vpop.f32.mrb[0].mxu0
    %v918 = vadd.f32 %v793, %v917
    %v919 = vpop.f32.mrb[0].mxu0
    %v920 = vpop.f32.mrb[0].mxu0
    %v921 = vadd.f32 %v793, %v920
    %v922 = vpop.f32.mrb[0].mxu0
    %923 = vmatprep.mubr.bf16.mxu0 0
    %924 = vmatmul.mubr.bf16.gmra.mrb[0].mxu0 %v762
    %v925 = vpop.f32.mrb[0].mxu0
    %v926 = vadd.f32 %v793, %v925
    %v927 = vpop.f32.mrb[0].mxu0
    %v928 = vpop.f32.mrb[0].mxu0
    %v929 = vadd.f32 %v793, %v928
    %v930 = vpop.f32.mrb[0].mxu0
    %931 = vmatprep.mubr.bf16.mxu0 0
    %932 = vmatmul.mubr.bf16.gmra.mrb[0].mxu0 %v763
    %v933 = vpop.f32.mrb[0].mxu0
    %v934 = vadd.f32 %v793, %v933
    %v935 = vpop.f32.mrb[0].mxu0
    %v936 = vpop.f32.mrb[0].mxu0
    %v937 = vadd.f32 %v793, %v936
    %v938 = vpop.f32.mrb[0].mxu0
    %939 = vmatprep.mubr.bf16.mxu0 0
    %940 = vmatmul.mubr.bf16.gmra.mrb[0].mxu0 %v764
    %v941 = vpop.f32.mrb[0].mxu0
    %v942 = vadd.f32 %v793, %v941
    %v943 = vpop.f32.mrb[0].mxu0
    %v944 = vpop.f32.mrb[0].mxu0
    %v945 = vadd.f32 %v793, %v944
    %v946 = vpop.f32.mrb[0].mxu0
    %947 = vmatprep.mubr.bf16.mxu0 0
    %948 = vmatmul.mubr.bf16.gmra.mrb[0].mxu0 %v765
    %v949 = vpop.f32.mrb[0].mxu0
    %v950 = vadd.f32 %v793, %v949
    %v951 = vpop.f32.mrb[0].mxu0
    %v952 = vpop.f32.mrb[0].mxu0
    %v953 = vadd.f32 %v793, %v952
    %v954 = vpop.f32.mrb[0].mxu0
    %955 = vmatprep.mubr.bf16.mxu0 0
    %956 = vmatmul.mubr.bf16.gmra.mrb[0].mxu0 %v766
    %v957 = vpop.f32.mrb[0].mxu0
    %v958 = vadd.f32 %v793, %v957
    %v959 = vpop.f32.mrb[0].mxu0
    %v960 = vpop.f32.mrb[0].mxu0
    %v961 = vadd.f32 %v793, %v960
    %v962 = vpop.f32.mrb[0].mxu0
    %963 = vmatprep.mubr.bf16.mxu0 0
    %964 = vmatmul.mubr.bf16.gmra.mrb[0].mxu0 %v767
    %v965 = vpop.f32.mrb[0].mxu0
    %v966 = vadd.f32 %v793, %v965
    %v967 = vpop.f32.mrb[0].mxu0
    %v968 = vpop.f32.mrb[0].mxu0
    %v969 = vadd.f32 %v793, %v968
    %v970 = vpop.f32.mrb[0].mxu0
    %971 = vmatprep.mubr.bf16.mxu0 0
    %972 = vmatmul.mubr.bf16.gmra.mrb[0].mxu0 %v768
    %v973 = vpop.f32.mrb[0].mxu0
    %v974 = vadd.f32 %v793, %v973
    %v975 = vpop.f32.mrb[0].mxu0
    %v976 = vpop.f32.mrb[0].mxu0
    %v977 = vadd.f32 %v793, %v976
    %v978 = vpop.f32.mrb[0].mxu0
    %979 = vmatprep.mubr.bf16.mxu0 0
    %980 = vmatmul.mubr.bf16.gmra.mrb[0].mxu0 %v769
    %v981 = vpop.f32.mrb[0].mxu0
    %v982 = vadd.f32 %v793, %v981
    %v983 = vpop.f32.mrb[0].mxu0
    %v984 = vpop.f32.mrb[0].mxu0
    %v985 = vadd.f32 %v793, %v984
    %v986 = vpop.f32.mrb[0].mxu0
    %987 = vmatprep.mubr.bf16.mxu0 0
    %988 = vmatmul.mubr.bf16.gmra.mrb[0].mxu0 %v770
    %v989 = vpop.f32.mrb[0].mxu0
    %v990 = vadd.f32 %v793, %v989
    %v991 = vpop.f32.mrb[0].mxu0
    %v992 = vpop.f32.mrb[0].mxu0
    %v993 = vadd.f32 %v793, %v992
    %v994 = vpop.f32.mrb[0].mxu0
    %995 = vmatprep.mubr.bf16.mxu0 0
    %996 = vmatmul.mubr.bf16.gmra.mrb[0].mxu0 %v771
    %v997 = vpop.f32.mrb[0].mxu0
    %v998 = vadd.f32 %v793, %v997
    %v999 = vpop.f32.mrb[0].mxu0
    %v1000 = vpop.f32.mrb[0].mxu0
    %v1001 = vadd.f32 %v793, %v1000
    %v1002 = vpop.f32.mrb[0].mxu0
    %1003 = vdwg.mxu0
    %v1004 = vmax.f32 %v878, 0.0
    %v1005 = vmax.f32 %v881, 0.0
    %v1006 = vmax.f32 %v886, 0.0
    %v1007 = vmax.f32 %v889, 0.0
    %v1008 = vmax.f32 %v894, 0.0
    %v1009 = vmax.f32 %v897, 0.0
    %v1010 = vmax.f32 %v902, 0.0
    %v1011 = vmax.f32 %v905, 0.0
    %v1012 = vmax.f32 %v910, 0.0
    %v1013 = vmax.f32 %v913, 0.0
    %v1014 = vmax.f32 %v918, 0.0
    %v1015 = vmax.f32 %v921, 0.0
    %v1016 = vmax.f32 %v926, 0.0
    %v1017 = vmax.f32 %v929, 0.0
    %v1018 = vmax.f32 %v934, 0.0
    %v1019 = vmax.f32 %v937, 0.0
    %v1020 = vmax.f32 %v942, 0.0
    %v1021 = vmax.f32 %v945, 0.0
    %v1022 = vmax.f32 %v950, 0.0
    %v1023 = vmax.f32 %v953, 0.0
    %v1024 = vmax.f32 %v958, 0.0
    %v1025 = vmax.f32 %v961, 0.0
    %v1026 = vmax.f32 %v966, 0.0
    %v1027 = vmax.f32 %v969, 0.0
    %v1028 = vmax.f32 %v974, 0.0
    %v1029 = vmax.f32 %v977, 0.0
    %v1030 = vmax.f32 %v982, 0.0
    %v1031 = vmax.f32 %v985, 0.0
    %v1032 = vmax.f32 %v990, 0.0
    %v1033 = vmax.f32 %v993, 0.0
    %v1034 = vmax.f32 %v998, 0.0
    %v1035 = vmax.f32 %v1001, 0.0
    %v1036 = vand.u32 2147483647, %v878
    %v1037 = vand.u32 2147483647, %v881
    %v1038 = vand.u32 2147483647, %v886
    %v1039 = vand.u32 2147483647, %v889
    %v1040 = vand.u32 2147483647, %v894
    %v1041 = vand.u32 2147483647, %v897
    %v1042 = vand.u32 2147483647, %v902
    %v1043 = vand.u32 2147483647, %v905
    %v1044 = vand.u32 2147483647, %v910
    %v1045 = vand.u32 2147483647, %v913
    %v1046 = vand.u32 2147483647, %v918
    %v1047 = vand.u32 2147483647, %v921
    %v1048 = vand.u32 2147483647, %v926
    %v1049 = vand.u32 2147483647, %v929
    %v1050 = vand.u32 2147483647, %v934
    %v1051 = vand.u32 2147483647, %v937
    %v1052 = vand.u32 2147483647, %v942
    %v1053 = vand.u32 2147483647, %v945
    %v1054 = vand.u32 2147483647, %v950
    %v1055 = vand.u32 2147483647, %v953
    %v1056 = vand.u32 2147483647, %v958
    %v1057 = vand.u32 2147483647, %v961
    %v1058 = vand.u32 2147483647, %v966
    %v1059 = vand.u32 2147483647, %v969
    %v1060 = vand.u32 2147483647, %v974
    %v1061 = vand.u32 2147483647, %v977
    %v1062 = vand.u32 2147483647, %v982
    %v1063 = vand.u32 2147483647, %v985
    %v1064 = vand.u32 2147483647, %v990
    %v1065 = vand.u32 2147483647, %v993
    %v1066 = vand.u32 2147483647, %v998
    %v1067 = vand.u32 2147483647, %v1001
    %v1068 = vsub.f32 0.0, %v1036
    %v1069 = vsub.f32 0.0, %v1037
    %v1070 = vsub.f32 0.0, %v1038
    %v1071 = vsub.f32 0.0, %v1039
    %v1072 = vsub.f32 0.0, %v1040
    %v1073 = vsub.f32 0.0, %v1041
    %v1074 = vsub.f32 0.0, %v1042
    %v1075 = vsub.f32 0.0, %v1043
    %v1076 = vsub.f32 0.0, %v1044
    %v1077 = vsub.f32 0.0, %v1045
    %v1078 = vsub.f32 0.0, %v1046
    %v1079 = vsub.f32 0.0, %v1047
    %v1080 = vsub.f32 0.0, %v1048
    %v1081 = vsub.f32 0.0, %v1049
    %v1082 = vsub.f32 0.0, %v1050
    %v1083 = vsub.f32 0.0, %v1051
    %v1084 = vsub.f32 0.0, %v1052
    %v1085 = vsub.f32 0.0, %v1053
    %v1086 = vsub.f32 0.0, %v1054
    %v1087 = vsub.f32 0.0, %v1055
    %v1088 = vsub.f32 0.0, %v1056
    %v1089 = vsub.f32 0.0, %v1057
    %v1090 = vsub.f32 0.0, %v1058
    %v1091 = vsub.f32 0.0, %v1059
    %v1092 = vsub.f32 0.0, %v1060
    %v1093 = vsub.f32 0.0, %v1061
    %v1094 = vsub.f32 0.0, %v1062
    %v1095 = vsub.f32 0.0, %v1063
    %v1096 = vsub.f32 0.0, %v1064
    %v1097 = vsub.f32 0.0, %v1065
    %v1098 = vsub.f32 0.0, %v1066
    %v1099 = vsub.f32 0.0, %v1067
    %v1100 = vmul.f32 %v1068, 1.442695
    %v1101 = vpow.pop %v1100
    %v1102 = vmul.f32 %v1069, 1.442695
    %v1103 = vpow.pop %v1102
    %v1104 = vmul.f32 %v1070, 1.442695
    %v1105 = vpow.pop %v1104
    %v1106 = vmul.f32 %v1071, 1.442695
    %v1107 = vpow.pop %v1106
    %v1108 = vmul.f32 %v1072, 1.442695
    %v1109 = vpow.pop %v1108
    %v1110 = vmul.f32 %v1073, 1.442695
    %v1111 = vpow.pop %v1110
    %v1112 = vmul.f32 %v1074, 1.442695
    %v1113 = vpow.pop %v1112
    %v1114 = vmul.f32 %v1075, 1.442695
    %v1115 = vpow.pop %v1114
    %v1116 = vmul.f32 %v1076, 1.442695
    %v1117 = vpow.pop %v1116
    %v1118 = vmul.f32 %v1077, 1.442695
    %v1119 = vpow.pop %v1118
    %v1120 = vmul.f32 %v1078, 1.442695
    %v1121 = vpow.pop %v1120
    %v1122 = vmul.f32 %v1079, 1.442695
    %v1123 = vpow.pop %v1122
    %v1124 = vmul.f32 %v1080, 1.442695
    %v1125 = vpow.pop %v1124
    %v1126 = vmul.f32 %v1081, 1.442695
    %v1127 = vpow.pop %v1126
    %v1128 = vmul.f32 %v1082, 1.442695
    %v1129 = vpow.pop %v1128
    %v1130 = vmul.f32 %v1083, 1.442695
    %v1131 = vpow.pop %v1130
    %v1132 = vmul.f32 %v1084, 1.442695
    %v1133 = vpow.pop %v1132
    %v1134 = vmul.f32 %v1085, 1.442695
    %v1135 = vpow.pop %v1134
    %v1136 = vmul.f32 %v1086, 1.442695
    %v1137 = vpow.pop %v1136
    %v1138 = vmul.f32 %v1087, 1.442695
    %v1139 = vpow.pop %v1138
    %v1140 = vmul.f32 %v1088, 1.442695
    %v1141 = vpow.pop %v1140
    %v1142 = vmul.f32 %v1089, 1.442695
    %v1143 = vpow.pop %v1142
    %v1144 = vmul.f32 %v1090, 1.442695
    %v1145 = vpow.pop %v1144
    %v1146 = vmul.f32 %v1091, 1.442695
    %v1147 = vpow.pop %v1146
    %v1148 = vmul.f32 %v1092, 1.442695
    %v1149 = vpow.pop %v1148
    %v1150 = vmul.f32 %v1093, 1.442695
    %v1151 = vpow.pop %v1150
    %v1152 = vmul.f32 %v1094, 1.442695
    %v1153 = vpow.pop %v1152
    %v1154 = vmul.f32 %v1095, 1.442695
    %v1155 = vpow.pop %v1154
    %v1156 = vmul.f32 %v1096, 1.442695
    %v1157 = vpow.pop %v1156
    %v1158 = vmul.f32 %v1097, 1.442695
    %v1159 = vpow.pop %v1158
    %v1160 = vmul.f32 %v1098, 1.442695
    %v1161 = vpow.pop %v1160
    %v1162 = vmul.f32 %v1099, 1.442695
    %v1163 = vpow.pop %v1162
    %v1164 = vadd.f32 %v1101, 1.0
    %v1165 = vadd.f32 %v1103, 1.0
    %v1166 = vadd.f32 %v1105, 1.0
    %v1167 = vadd.f32 %v1107, 1.0
    %v1168 = vadd.f32 %v1109, 1.0
    %v1169 = vadd.f32 %v1111, 1.0
    %v1170 = vadd.f32 %v1113, 1.0
    %v1171 = vadd.f32 %v1115, 1.0
    %v1172 = vadd.f32 %v1117, 1.0
    %v1173 = vadd.f32 %v1119, 1.0
    %v1174 = vadd.f32 %v1121, 1.0
    %v1175 = vadd.f32 %v1123, 1.0
    %v1176 = vadd.f32 %v1125, 1.0
    %v1177 = vadd.f32 %v1127, 1.0
    %v1178 = vadd.f32 %v1129, 1.0
    %v1179 = vadd.f32 %v1131, 1.0
    %v1180 = vadd.f32 %v1133, 1.0
    %v1181 = vadd.f32 %v1135, 1.0
    %v1182 = vadd.f32 %v1137, 1.0
    %v1183 = vadd.f32 %v1139, 1.0
    %v1184 = vadd.f32 %v1141, 1.0
    %v1185 = vadd.f32 %v1143, 1.0
    %v1186 = vadd.f32 %v1145, 1.0
    %v1187 = vadd.f32 %v1147, 1.0
    %v1188 = vadd.f32 %v1149, 1.0
    %v1189 = vadd.f32 %v1151, 1.0
    %v1190 = vadd.f32 %v1153, 1.0
    %v1191 = vadd.f32 %v1155, 1.0
    %v1192 = vadd.f32 %v1157, 1.0
    %v1193 = vadd.f32 %v1159, 1.0
    %v1194 = vadd.f32 %v1161, 1.0
    %v1195 = vadd.f32 %v1163, 1.0
    %v1196 = vlog2.pop %v1164
    %v1197 = vmul.f32 %v1196, 0.6931472
    %v1198 = vlog2.pop %v1165
    %v1199 = vmul.f32 %v1198, 0.6931472
    %v1200 = vlog2.pop %v1166
    %v1201 = vmul.f32 %v1200, 0.6931472
    %v1202 = vlog2.pop %v1167
    %v1203 = vmul.f32 %v1202, 0.6931472
    %v1204 = vlog2.pop %v1168
    %v1205 = vmul.f32 %v1204, 0.6931472
    %v1206 = vlog2.pop %v1169
    %v1207 = vmul.f32 %v1206, 0.6931472
    %v1208 = vlog2.pop %v1170
    %v1209 = vmul.f32 %v1208, 0.6931472
    %v1210 = vlog2.pop %v1171
    %v1211 = vmul.f32 %v1210, 0.6931472
    %v1212 = vlog2.pop %v1172
    %v1213 = vmul.f32 %v1212, 0.6931472
    %v1214 = vlog2.pop %v1173
    %v1215 = vmul.f32 %v1214, 0.6931472
    %v1216 = vlog2.pop %v1174
    %v1217 = vmul.f32 %v1216, 0.6931472
    %v1218 = vlog2.pop %v1175
    %v1219 = vmul.f32 %v1218, 0.6931472
    %v1220 = vlog2.pop %v1176
    %v1221 = vmul.f32 %v1220, 0.6931472
    %v1222 = vlog2.pop %v1177
    %v1223 = vmul.f32 %v1222, 0.6931472
    %v1224 = vlog2.pop %v1178
    %v1225 = vmul.f32 %v1224, 0.6931472
    %v1226 = vlog2.pop %v1179
    %v1227 = vmul.f32 %v1226, 0.6931472
    %v1228 = vlog2.pop %v1180
    %v1229 = vmul.f32 %v1228, 0.6931472
    %v1230 = vlog2.pop %v1181
    %v1231 = vmul.f32 %v1230, 0.6931472
    %v1232 = vlog2.pop %v1182
    %v1233 = vmul.f32 %v1232, 0.6931472
    %v1234 = vlog2.pop %v1183
    %v1235 = vmul.f32 %v1234, 0.6931472
    %v1236 = vlog2.pop %v1184
    %v1237 = vmul.f32 %v1236, 0.6931472
    %v1238 = vlog2.pop %v1185
    %v1239 = vmul.f32 %v1238, 0.6931472
    %v1240 = vlog2.pop %v1186
    %v1241 = vmul.f32 %v1240, 0.6931472
    %v1242 = vlog2.pop %v1187
    %v1243 = vmul.f32 %v1242, 0.6931472
    %v1244 = vlog2.pop %v1188
    %v1245 = vmul.f32 %v1244, 0.6931472
    %v1246 = vlog2.pop %v1189
    %v1247 = vmul.f32 %v1246, 0.6931472
    %v1248 = vlog2.pop %v1190
    %v1249 = vmul.f32 %v1248, 0.6931472
    %v1250 = vlog2.pop %v1191
    %v1251 = vmul.f32 %v1250, 0.6931472
    %v1252 = vlog2.pop %v1192
    %v1253 = vmul.f32 %v1252, 0.6931472
    %v1254 = vlog2.pop %v1193
    %v1255 = vmul.f32 %v1254, 0.6931472
    %v1256 = vlog2.pop %v1194
    %v1257 = vmul.f32 %v1256, 0.6931472
    %v1258 = vlog2.pop %v1195
    %v1259 = vmul.f32 %v1258, 0.6931472
    %v1260 = vadd.f32 %v1004, %v1197
    %v1261 = vadd.f32 %v1005, %v1199
    %v1262 = vadd.f32 %v1006, %v1201
    %v1263 = vadd.f32 %v1007, %v1203
    %v1264 = vadd.f32 %v1008, %v1205
    %v1265 = vadd.f32 %v1009, %v1207
    %v1266 = vadd.f32 %v1010, %v1209
    %v1267 = vadd.f32 %v1011, %v1211
    %v1268 = vadd.f32 %v1012, %v1213
    %v1269 = vadd.f32 %v1013, %v1215
    %v1270 = vadd.f32 %v1014, %v1217
    %v1271 = vadd.f32 %v1015, %v1219
    %v1272 = vadd.f32 %v1016, %v1221
    %v1273 = vadd.f32 %v1017, %v1223
    %v1274 = vadd.f32 %v1018, %v1225
    %v1275 = vadd.f32 %v1019, %v1227
    %v1276 = vadd.f32 %v1020, %v1229
    %v1277 = vadd.f32 %v1021, %v1231
    %v1278 = vadd.f32 %v1022, %v1233
    %v1279 = vadd.f32 %v1023, %v1235
    %v1280 = vadd.f32 %v1024, %v1237
    %v1281 = vadd.f32 %v1025, %v1239
    %v1282 = vadd.f32 %v1026, %v1241
    %v1283 = vadd.f32 %v1027, %v1243
    %v1284 = vadd.f32 %v1028, %v1245
    %v1285 = vadd.f32 %v1029, %v1247
    %v1286 = vadd.f32 %v1030, %v1249
    %v1287 = vadd.f32 %v1031, %v1251
    %v1288 = vadd.f32 %v1032, %v1253
    %v1289 = vadd.f32 %v1033, %v1255
    %v1290 = vadd.f32 %v1034, %v1257
    %v1291 = vadd.f32 %v1035, %v1259
    %v1292 = vsub.f32 %v1260, 0.6931472
    %v1293 = vsub.f32 %v1261, 0.6931472
    %v1294 = vsub.f32 %v1262, 0.6931472
    %v1295 = vsub.f32 %v1263, 0.6931472
    %v1296 = vsub.f32 %v1264, 0.6931472
    %v1297 = vsub.f32 %v1265, 0.6931472
    %v1298 = vsub.f32 %v1266, 0.6931472
    %v1299 = vsub.f32 %v1267, 0.6931472
    %v1300 = vsub.f32 %v1268, 0.6931472
    %v1301 = vsub.f32 %v1269, 0.6931472
    %v1302 = vsub.f32 %v1270, 0.6931472
    %v1303 = vsub.f32 %v1271, 0.6931472
    %v1304 = vsub.f32 %v1272, 0.6931472
    %v1305 = vsub.f32 %v1273, 0.6931472
    %v1306 = vsub.f32 %v1274, 0.6931472
    %v1307 = vsub.f32 %v1275, 0.6931472
    %v1308 = vsub.f32 %v1276, 0.6931472
    %v1309 = vsub.f32 %v1277, 0.6931472
    %v1310 = vsub.f32 %v1278, 0.6931472
    %v1311 = vsub.f32 %v1279, 0.6931472
    %v1312 = vsub.f32 %v1280, 0.6931472
    %v1313 = vsub.f32 %v1281, 0.6931472
    %v1314 = vsub.f32 %v1282, 0.6931472
    %v1315 = vsub.f32 %v1283, 0.6931472
    %v1316 = vsub.f32 %v1284, 0.6931472
    %v1317 = vsub.f32 %v1285, 0.6931472
    %v1318 = vsub.f32 %v1286, 0.6931472
    %v1319 = vsub.f32 %v1287, 0.6931472
    %v1320 = vsub.f32 %v1288, 0.6931472
    %v1321 = vsub.f32 %v1289, 0.6931472
    %v1322 = vsub.f32 %v1290, 0.6931472
    %v1323 = vsub.f32 %v1291, 0.6931472
    %v1324 = vpack.c.bf16 %v1293, %v1292
    %v1325 = vpack.c.bf16 %v1295, %v1294
    %v1326 = vpack.c.bf16 %v1297, %v1296
    %v1327 = vpack.c.bf16 %v1299, %v1298
    %v1328 = vpack.c.bf16 %v1301, %v1300
    %v1329 = vpack.c.bf16 %v1303, %v1302
    %v1330 = vpack.c.bf16 %v1305, %v1304
    %v1331 = vpack.c.bf16 %v1307, %v1306
    %v1332 = vpack.c.bf16 %v1309, %v1308
    %v1333 = vpack.c.bf16 %v1311, %v1310
    %v1334 = vpack.c.bf16 %v1313, %v1312
    %v1335 = vpack.c.bf16 %v1315, %v1314
    %v1336 = vpack.c.bf16 %v1317, %v1316
    %v1337 = vpack.c.bf16 %v1319, %v1318
    %v1338 = vpack.c.bf16 %v1321, %v1320
    %v1339 = vpack.c.bf16 %v1323, %v1322
    %v1340 = vld [vmem:[#allocation7] sm:$0xf]
    %v1341 = vld [vmem:[#allocation7 + $0x4] sm:$0xf]
    %v1342 = vld [vmem:[#allocation7 + $0x8] sm:$0xf]
    %v1343 = vld [vmem:[#allocation7 + $0xc] sm:$0xf]
    %v1344 = vld [vmem:[#allocation7 + $0x10] sm:$0xf]
    %v1345 = vld [vmem:[#allocation7 + $0x14] sm:$0xf]
    %v1346 = vld [vmem:[#allocation7 + $0x18] sm:$0xf]
    %v1347 = vld [vmem:[#allocation7 + $0x1c] sm:$0xf]
    %v1348 = vld [vmem:[#allocation7 + $0x20] sm:$0xf]
    %v1349 = vld [vmem:[#allocation7 + $0x24] sm:$0xf]
    %v1350 = vld [vmem:[#allocation7 + $0x28] sm:$0xf]
    %v1351 = vld [vmem:[#allocation7 + $0x2c] sm:$0xf]
    %v1352 = vld [vmem:[#allocation7 + $0x30] sm:$0xf]
    %v1353 = vld [vmem:[#allocation7 + $0x34] sm:$0xf]
    %v1354 = vld [vmem:[#allocation7 + $0x38] sm:$0xf]
    %v1355 = vld [vmem:[#allocation7 + $0x3c] sm:$0xf]
    %v1356 = vld [vmem:[%s11] sm:$0x1]
    %v1358 = vlaneseq
    %v1359 = vshrl.u32 %v1358, 7
    %v1360 = vsub.s32 0, %v1359
    %v1361 = vrot.slane %v1356, %v1360
    %v1379 = vunpack.c.l.b16 %v1340
    %v1380 = vunpack.c.l.b16 %v1341
    %v1381 = vunpack.c.l.b16 %v1342
    %v1382 = vunpack.c.l.b16 %v1343
    %v1383 = vunpack.c.l.b16 %v1344
    %v1384 = vunpack.c.l.b16 %v1345
    %v1385 = vunpack.c.l.b16 %v1346
    %v1386 = vunpack.c.l.b16 %v1347
    %v1387 = vunpack.c.l.b16 %v1348
    %v1388 = vunpack.c.l.b16 %v1349
    %v1389 = vunpack.c.l.b16 %v1350
    %v1390 = vunpack.c.l.b16 %v1351
    %v1391 = vunpack.c.l.b16 %v1352
    %v1392 = vunpack.c.l.b16 %v1353
    %v1393 = vunpack.c.l.b16 %v1354
    %v1394 = vunpack.c.l.b16 %v1355
    %v1395 = vpack.c.b16 %v1380, %v1379
    %v1396 = vpack.c.b16 %v1382, %v1381
    %v1397 = vpack.c.b16 %v1384, %v1383
    %v1398 = vpack.c.b16 %v1386, %v1385
    %v1399 = vpack.c.b16 %v1388, %v1387
    %v1400 = vpack.c.b16 %v1390, %v1389
    %v1401 = vpack.c.b16 %v1392, %v1391
    %v1402 = vpack.c.b16 %v1394, %v1393
    %1411 = vmatprep.subr.bf16.mxu0 0
    %1412 = vmatpush1.bf16.msra.mxu0 %v1395
    %1413 = vmatprep.subr.bf16.mxu0 0
    %1414 = vmatpush1.bf16.msra.mxu0 %v1396
    %1415 = vmatprep.subr.bf16.mxu0 0
    %1416 = vmatpush1.bf16.msra.mxu0 %v1397
    %1417 = vmatprep.subr.bf16.mxu0 0
    %1418 = vmatpush1.bf16.msra.mxu0 %v1398
    %1419 = vmatprep.subr.bf16.mxu0 0
    %1420 = vmatpush1.bf16.msra.mxu0 %v1399
    %1421 = vmatprep.subr.bf16.mxu0 0
    %1422 = vmatpush1.bf16.msra.mxu0 %v1400
    %1423 = vmatprep.subr.bf16.mxu0 0
    %1424 = vmatpush1.bf16.msra.mxu0 %v1401
    %1425 = vmatprep.subr.bf16.mxu0 0
    %1426 = vmatpush1.bf16.msra.mxu0 %v1402
    %1427 = vmatprep.subr.bf16.mxu0 0
    %1428 = vmatpush1.bf16.msra.mxu0 0
    %1429 = vmatprep.subr.bf16.mxu0 0
    %1430 = vmatpush1.bf16.msra.mxu0 0
    %1431 = vmatprep.subr.bf16.mxu0 0
    %1432 = vmatpush1.bf16.msra.mxu0 0
    %1433 = vmatprep.subr.bf16.mxu0 0
    %1434 = vmatpush1.bf16.msra.mxu0 0
    %1435 = vmatprep.subr.bf16.mxu0 0
    %1436 = vmatpush1.bf16.msra.mxu0 0
    %1437 = vmatprep.subr.bf16.mxu0 0
    %1438 = vmatpush1.bf16.msra.mxu0 0
    %1439 = vmatprep.subr.bf16.mxu0 0
    %1440 = vmatpush1.bf16.msra.mxu0 0
    %1441 = vmatprep.subr.bf16.mxu0 0
    %1442 = vmatpush1.bf16.msra.mxu0 0
    %1443 = vmatprep.mubr.bf16.mxu0 0
    %1444 = vmatmul.mubr.bf16.gmra.mrb[0].mxu0 %v1324
    %v1445 = vpop.f32.mrb[0].mxu0
    %v1446 = vadd.f32 %v1361, %v1445
    %v1447 = vpop.f32.mrb[0].mxu0
    %v1448 = vpop.f32.mrb[0].mxu0
    %v1449 = vadd.f32 %v1361, %v1448
    %v1450 = vpop.f32.mrb[0].mxu0
    %1451 = vmatprep.mubr.bf16.mxu0 0
    %1452 = vmatmul.mubr.bf16.gmra.mrb[0].mxu0 %v1325
    %v1453 = vpop.f32.mrb[0].mxu0
    %v1454 = vadd.f32 %v1361, %v1453
    %v1455 = vpop.f32.mrb[0].mxu0
    %v1456 = vpop.f32.mrb[0].mxu0
    %v1457 = vadd.f32 %v1361, %v1456
    %v1458 = vpop.f32.mrb[0].mxu0
    %1459 = vmatprep.mubr.bf16.mxu0 0
    %1460 = vmatmul.mubr.bf16.gmra.mrb[0].mxu0 %v1326
    %v1461 = vpop.f32.mrb[0].mxu0
    %v1462 = vadd.f32 %v1361, %v1461
    %v1463 = vpop.f32.mrb[0].mxu0
    %v1464 = vpop.f32.mrb[0].mxu0
    %v1465 = vadd.f32 %v1361, %v1464
    %v1466 = vpop.f32.mrb[0].mxu0
    %1467 = vmatprep.mubr.bf16.mxu0 0
    %1468 = vmatmul.mubr.bf16.gmra.mrb[0].mxu0 %v1327
    %v1469 = vpop.f32.mrb[0].mxu0
    %v1470 = vadd.f32 %v1361, %v1469
    %v1471 = vpop.f32.mrb[0].mxu0
    %v1472 = vpop.f32.mrb[0].mxu0
    %v1473 = vadd.f32 %v1361, %v1472
    %v1474 = vpop.f32.mrb[0].mxu0
    %1475 = vmatprep.mubr.bf16.mxu0 0
    %1476 = vmatmul.mubr.bf16.gmra.mrb[0].mxu0 %v1328
    %v1477 = vpop.f32.mrb[0].mxu0
    %v1478 = vadd.f32 %v1361, %v1477
    %v1479 = vpop.f32.mrb[0].mxu0
    %v1480 = vpop.f32.mrb[0].mxu0
    %v1481 = vadd.f32 %v1361, %v1480
    %v1482 = vpop.f32.mrb[0].mxu0
    %1483 = vmatprep.mubr.bf16.mxu0 0
    %1484 = vmatmul.mubr.bf16.gmra.mrb[0].mxu0 %v1329
    %v1485 = vpop.f32.mrb[0].mxu0
    %v1486 = vadd.f32 %v1361, %v1485
    %v1487 = vpop.f32.mrb[0].mxu0
    %v1488 = vpop.f32.mrb[0].mxu0
    %v1489 = vadd.f32 %v1361, %v1488
    %v1490 = vpop.f32.mrb[0].mxu0
    %1491 = vmatprep.mubr.bf16.mxu0 0
    %1492 = vmatmul.mubr.bf16.gmra.mrb[0].mxu0 %v1330
    %v1493 = vpop.f32.mrb[0].mxu0
    %v1494 = vadd.f32 %v1361, %v1493
    %v1495 = vpop.f32.mrb[0].mxu0
    %v1496 = vpop.f32.mrb[0].mxu0
    %v1497 = vadd.f32 %v1361, %v1496
    %v1498 = vpop.f32.mrb[0].mxu0
    %1499 = vmatprep.mubr.bf16.mxu0 0
    %1500 = vmatmul.mubr.bf16.gmra.mrb[0].mxu0 %v1331
    %v1501 = vpop.f32.mrb[0].mxu0
    %v1502 = vadd.f32 %v1361, %v1501
    %v1503 = vpop.f32.mrb[0].mxu0
    %v1504 = vpop.f32.mrb[0].mxu0
    %v1505 = vadd.f32 %v1361, %v1504
    %v1506 = vpop.f32.mrb[0].mxu0
    %1507 = vmatprep.mubr.bf16.mxu0 0
    %1508 = vmatmul.mubr.bf16.gmra.mrb[0].mxu0 %v1332
    %v1509 = vpop.f32.mrb[0].mxu0
    %v1510 = vadd.f32 %v1361, %v1509
    %v1511 = vpop.f32.mrb[0].mxu0
    %v1512 = vpop.f32.mrb[0].mxu0
    %v1513 = vadd.f32 %v1361, %v1512
    %v1514 = vpop.f32.mrb[0].mxu0
    %1515 = vmatprep.mubr.bf16.mxu0 0
    %1516 = vmatmul.mubr.bf16.gmra.mrb[0].mxu0 %v1333
    %v1517 = vpop.f32.mrb[0].mxu0
    %v1518 = vadd.f32 %v1361, %v1517
    %v1519 = vpop.f32.mrb[0].mxu0
    %v1520 = vpop.f32.mrb[0].mxu0
    %v1521 = vadd.f32 %v1361, %v1520
    %v1522 = vpop.f32.mrb[0].mxu0
    %1523 = vmatprep.mubr.bf16.mxu0 0
    %1524 = vmatmul.mubr.bf16.gmra.mrb[0].mxu0 %v1334
    %v1525 = vpop.f32.mrb[0].mxu0
    %v1526 = vadd.f32 %v1361, %v1525
    %v1527 = vpop.f32.mrb[0].mxu0
    %v1528 = vpop.f32.mrb[0].mxu0
    %v1529 = vadd.f32 %v1361, %v1528
    %v1530 = vpop.f32.mrb[0].mxu0
    %1531 = vmatprep.mubr.bf16.mxu0 0
    %1532 = vmatmul.mubr.bf16.gmra.mrb[0].mxu0 %v1335
    %v1533 = vpop.f32.mrb[0].mxu0
    %v1534 = vadd.f32 %v1361, %v1533
    %v1535 = vpop.f32.mrb[0].mxu0
    %v1536 = vpop.f32.mrb[0].mxu0
    %v1537 = vadd.f32 %v1361, %v1536
    %v1538 = vpop.f32.mrb[0].mxu0
    %1539 = vmatprep.mubr.bf16.mxu0 0
    %1540 = vmatmul.mubr.bf16.gmra.mrb[0].mxu0 %v1336
    %v1541 = vpop.f32.mrb[0].mxu0
    %v1542 = vadd.f32 %v1361, %v1541
    %v1543 = vpop.f32.mrb[0].mxu0
    %v1544 = vpop.f32.mrb[0].mxu0
    %v1545 = vadd.f32 %v1361, %v1544
    %v1546 = vpop.f32.mrb[0].mxu0
    %1547 = vmatprep.mubr.bf16.mxu0 0
    %1548 = vmatmul.mubr.bf16.gmra.mrb[0].mxu0 %v1337
    %v1549 = vpop.f32.mrb[0].mxu0
    %v1550 = vadd.f32 %v1361, %v1549
    %v1551 = vpop.f32.mrb[0].mxu0
    %v1552 = vpop.f32.mrb[0].mxu0
    %v1553 = vadd.f32 %v1361, %v1552
    %v1554 = vpop.f32.mrb[0].mxu0
    %1555 = vmatprep.mubr.bf16.mxu0 0
    %1556 = vmatmul.mubr.bf16.gmra.mrb[0].mxu0 %v1338
    %v1557 = vpop.f32.mrb[0].mxu0
    %v1558 = vadd.f32 %v1361, %v1557
    %v1559 = vpop.f32.mrb[0].mxu0
    %v1560 = vpop.f32.mrb[0].mxu0
    %v1561 = vadd.f32 %v1361, %v1560
    %v1562 = vpop.f32.mrb[0].mxu0
    %1563 = vmatprep.mubr.bf16.mxu0 0
    %1564 = vmatmul.mubr.bf16.gmra.mrb[0].mxu0 %v1339
    %v1565 = vpop.f32.mrb[0].mxu0
    %v1566 = vadd.f32 %v1361, %v1565
    %v1567 = vpop.f32.mrb[0].mxu0
    %v1568 = vpop.f32.mrb[0].mxu0
    %v1569 = vadd.f32 %v1361, %v1568
    %v1570 = vpop.f32.mrb[0].mxu0
    %1571 = vdwg.mxu0
    %v1572 = vmax.f32 %v1446, 0.0
    %v1573 = vmax.f32 %v1449, 0.0
    %v1574 = vmax.f32 %v1454, 0.0
    %v1575 = vmax.f32 %v1457, 0.0
    %v1576 = vmax.f32 %v1462, 0.0
    %v1577 = vmax.f32 %v1465, 0.0
    %v1578 = vmax.f32 %v1470, 0.0
    %v1579 = vmax.f32 %v1473, 0.0
    %v1580 = vmax.f32 %v1478, 0.0
    %v1581 = vmax.f32 %v1481, 0.0
    %v1582 = vmax.f32 %v1486, 0.0
    %v1583 = vmax.f32 %v1489, 0.0
    %v1584 = vmax.f32 %v1494, 0.0
    %v1585 = vmax.f32 %v1497, 0.0
    %v1586 = vmax.f32 %v1502, 0.0
    %v1587 = vmax.f32 %v1505, 0.0
    %v1588 = vmax.f32 %v1510, 0.0
    %v1589 = vmax.f32 %v1513, 0.0
    %v1590 = vmax.f32 %v1518, 0.0
    %v1591 = vmax.f32 %v1521, 0.0
    %v1592 = vmax.f32 %v1526, 0.0
    %v1593 = vmax.f32 %v1529, 0.0
    %v1594 = vmax.f32 %v1534, 0.0
    %v1595 = vmax.f32 %v1537, 0.0
    %v1596 = vmax.f32 %v1542, 0.0
    %v1597 = vmax.f32 %v1545, 0.0
    %v1598 = vmax.f32 %v1550, 0.0
    %v1599 = vmax.f32 %v1553, 0.0
    %v1600 = vmax.f32 %v1558, 0.0
    %v1601 = vmax.f32 %v1561, 0.0
    %v1602 = vmax.f32 %v1566, 0.0
    %v1603 = vmax.f32 %v1569, 0.0
    %v1604 = vand.u32 2147483647, %v1446
    %v1605 = vand.u32 2147483647, %v1449
    %v1606 = vand.u32 2147483647, %v1454
    %v1607 = vand.u32 2147483647, %v1457
    %v1608 = vand.u32 2147483647, %v1462
    %v1609 = vand.u32 2147483647, %v1465
    %v1610 = vand.u32 2147483647, %v1470
    %v1611 = vand.u32 2147483647, %v1473
    %v1612 = vand.u32 2147483647, %v1478
    %v1613 = vand.u32 2147483647, %v1481
    %v1614 = vand.u32 2147483647, %v1486
    %v1615 = vand.u32 2147483647, %v1489
    %v1616 = vand.u32 2147483647, %v1494
    %v1617 = vand.u32 2147483647, %v1497
    %v1618 = vand.u32 2147483647, %v1502
    %v1619 = vand.u32 2147483647, %v1505
    %v1620 = vand.u32 2147483647, %v1510
    %v1621 = vand.u32 2147483647, %v1513
    %v1622 = vand.u32 2147483647, %v1518
    %v1623 = vand.u32 2147483647, %v1521
    %v1624 = vand.u32 2147483647, %v1526
    %v1625 = vand.u32 2147483647, %v1529
    %v1626 = vand.u32 2147483647, %v1534
    %v1627 = vand.u32 2147483647, %v1537
    %v1628 = vand.u32 2147483647, %v1542
    %v1629 = vand.u32 2147483647, %v1545
    %v1630 = vand.u32 2147483647, %v1550
    %v1631 = vand.u32 2147483647, %v1553
    %v1632 = vand.u32 2147483647, %v1558
    %v1633 = vand.u32 2147483647, %v1561
    %v1634 = vand.u32 2147483647, %v1566
    %v1635 = vand.u32 2147483647, %v1569
    %v1636 = vsub.f32 0.0, %v1604
    %v1637 = vsub.f32 0.0, %v1605
    %v1638 = vsub.f32 0.0, %v1606
    %v1639 = vsub.f32 0.0, %v1607
    %v1640 = vsub.f32 0.0, %v1608
    %v1641 = vsub.f32 0.0, %v1609
    %v1642 = vsub.f32 0.0, %v1610
    %v1643 = vsub.f32 0.0, %v1611
    %v1644 = vsub.f32 0.0, %v1612
    %v1645 = vsub.f32 0.0, %v1613
    %v1646 = vsub.f32 0.0, %v1614
    %v1647 = vsub.f32 0.0, %v1615
    %v1648 = vsub.f32 0.0, %v1616
    %v1649 = vsub.f32 0.0, %v1617
    %v1650 = vsub.f32 0.0, %v1618
    %v1651 = vsub.f32 0.0, %v1619
    %v1652 = vsub.f32 0.0, %v1620
    %v1653 = vsub.f32 0.0, %v1621
    %v1654 = vsub.f32 0.0, %v1622
    %v1655 = vsub.f32 0.0, %v1623
    %v1656 = vsub.f32 0.0, %v1624
    %v1657 = vsub.f32 0.0, %v1625
    %v1658 = vsub.f32 0.0, %v1626
    %v1659 = vsub.f32 0.0, %v1627
    %v1660 = vsub.f32 0.0, %v1628
    %v1661 = vsub.f32 0.0, %v1629
    %v1662 = vsub.f32 0.0, %v1630
    %v1663 = vsub.f32 0.0, %v1631
    %v1664 = vsub.f32 0.0, %v1632
    %v1665 = vsub.f32 0.0, %v1633
    %v1666 = vsub.f32 0.0, %v1634
    %v1667 = vsub.f32 0.0, %v1635
    %v1668 = vmul.f32 %v1636, 1.442695
    %v1669 = vpow.pop %v1668
    %v1670 = vmul.f32 %v1637, 1.442695
    %v1671 = vpow.pop %v1670
    %v1672 = vmul.f32 %v1638, 1.442695
    %v1673 = vpow.pop %v1672
    %v1674 = vmul.f32 %v1639, 1.442695
    %v1675 = vpow.pop %v1674
    %v1676 = vmul.f32 %v1640, 1.442695
    %v1677 = vpow.pop %v1676
    %v1678 = vmul.f32 %v1641, 1.442695
    %v1679 = vpow.pop %v1678
    %v1680 = vmul.f32 %v1642, 1.442695
    %v1681 = vpow.pop %v1680
    %v1682 = vmul.f32 %v1643, 1.442695
    %v1683 = vpow.pop %v1682
    %v1684 = vmul.f32 %v1644, 1.442695
    %v1685 = vpow.pop %v1684
    %v1686 = vmul.f32 %v1645, 1.442695
    %v1687 = vpow.pop %v1686
    %v1688 = vmul.f32 %v1646, 1.442695
    %v1689 = vpow.pop %v1688
    %v1690 = vmul.f32 %v1647, 1.442695
    %v1691 = vpow.pop %v1690
    %v1692 = vmul.f32 %v1648, 1.442695
    %v1693 = vpow.pop %v1692
    %v1694 = vmul.f32 %v1649, 1.442695
    %v1695 = vpow.pop %v1694
    %v1696 = vmul.f32 %v1650, 1.442695
    %v1697 = vpow.pop %v1696
    %v1698 = vmul.f32 %v1651, 1.442695
    %v1699 = vpow.pop %v1698
    %v1700 = vmul.f32 %v1652, 1.442695
    %v1701 = vpow.pop %v1700
    %v1702 = vmul.f32 %v1653, 1.442695
    %v1703 = vpow.pop %v1702
    %v1704 = vmul.f32 %v1654, 1.442695
    %v1705 = vpow.pop %v1704
    %v1706 = vmul.f32 %v1655, 1.442695
    %v1707 = vpow.pop %v1706
    %v1708 = vmul.f32 %v1656, 1.442695
    %v1709 = vpow.pop %v1708
    %v1710 = vmul.f32 %v1657, 1.442695
    %v1711 = vpow.pop %v1710
    %v1712 = vmul.f32 %v1658, 1.442695
    %v1713 = vpow.pop %v1712
    %v1714 = vmul.f32 %v1659, 1.442695
    %v1715 = vpow.pop %v1714
    %v1716 = vmul.f32 %v1660, 1.442695
    %v1717 = vpow.pop %v1716
    %v1718 = vmul.f32 %v1661, 1.442695
    %v1719 = vpow.pop %v1718
    %v1720 = vmul.f32 %v1662, 1.442695
    %v1721 = vpow.pop %v1720
    %v1722 = vmul.f32 %v1663, 1.442695
    %v1723 = vpow.pop %v1722
    %v1724 = vmul.f32 %v1664, 1.442695
    %v1725 = vpow.pop %v1724
    %v1726 = vmul.f32 %v1665, 1.442695
    %v1727 = vpow.pop %v1726
    %v1728 = vmul.f32 %v1666, 1.442695
    %v1729 = vpow.pop %v1728
    %v1730 = vmul.f32 %v1667, 1.442695
    %v1731 = vpow.pop %v1730
    %v1732 = vadd.f32 %v1669, 1.0
    %v1733 = vadd.f32 %v1671, 1.0
    %v1734 = vadd.f32 %v1673, 1.0
    %v1735 = vadd.f32 %v1675, 1.0
    %v1736 = vadd.f32 %v1677, 1.0
    %v1737 = vadd.f32 %v1679, 1.0
    %v1738 = vadd.f32 %v1681, 1.0
    %v1739 = vadd.f32 %v1683, 1.0
    %v1740 = vadd.f32 %v1685, 1.0
    %v1741 = vadd.f32 %v1687, 1.0
    %v1742 = vadd.f32 %v1689, 1.0
    %v1743 = vadd.f32 %v1691, 1.0
    %v1744 = vadd.f32 %v1693, 1.0
    %v1745 = vadd.f32 %v1695, 1.0
    %v1746 = vadd.f32 %v1697, 1.0
    %v1747 = vadd.f32 %v1699, 1.0
    %v1748 = vadd.f32 %v1701, 1.0
    %v1749 = vadd.f32 %v1703, 1.0
    %v1750 = vadd.f32 %v1705, 1.0
    %v1751 = vadd.f32 %v1707, 1.0
    %v1752 = vadd.f32 %v1709, 1.0
    %v1753 = vadd.f32 %v1711, 1.0
    %v1754 = vadd.f32 %v1713, 1.0
    %v1755 = vadd.f32 %v1715, 1.0
    %v1756 = vadd.f32 %v1717, 1.0
    %v1757 = vadd.f32 %v1719, 1.0
    %v1758 = vadd.f32 %v1721, 1.0
    %v1759 = vadd.f32 %v1723, 1.0
    %v1760 = vadd.f32 %v1725, 1.0
    %v1761 = vadd.f32 %v1727, 1.0
    %v1762 = vadd.f32 %v1729, 1.0
    %v1763 = vadd.f32 %v1731, 1.0
    %v1764 = vlog2.pop %v1732
    %v1765 = vmul.f32 %v1764, 0.6931472
    %v1766 = vlog2.pop %v1733
    %v1767 = vmul.f32 %v1766, 0.6931472
    %v1768 = vlog2.pop %v1734
    %v1769 = vmul.f32 %v1768, 0.6931472
    %v1770 = vlog2.pop %v1735
    %v1771 = vmul.f32 %v1770, 0.6931472
    %v1772 = vlog2.pop %v1736
    %v1773 = vmul.f32 %v1772, 0.6931472
    %v1774 = vlog2.pop %v1737
    %v1775 = vmul.f32 %v1774, 0.6931472
    %v1776 = vlog2.pop %v1738
    %v1777 = vmul.f32 %v1776, 0.6931472
    %v1778 = vlog2.pop %v1739
    %v1779 = vmul.f32 %v1778, 0.6931472
    %v1780 = vlog2.pop %v1740
    %v1781 = vmul.f32 %v1780, 0.6931472
    %v1782 = vlog2.pop %v1741
    %v1783 = vmul.f32 %v1782, 0.6931472
    %v1784 = vlog2.pop %v1742
    %v1785 = vmul.f32 %v1784, 0.6931472
    %v1786 = vlog2.pop %v1743
    %v1787 = vmul.f32 %v1786, 0.6931472
    %v1788 = vlog2.pop %v1744
    %v1789 = vmul.f32 %v1788, 0.6931472
    %v1790 = vlog2.pop %v1745
    %v1791 = vmul.f32 %v1790, 0.6931472
    %v1792 = vlog2.pop %v1746
    %v1793 = vmul.f32 %v1792, 0.6931472
    %v1794 = vlog2.pop %v1747
    %v1795 = vmul.f32 %v1794, 0.6931472
    %v1796 = vlog2.pop %v1748
    %v1797 = vmul.f32 %v1796, 0.6931472
    %v1798 = vlog2.pop %v1749
    %v1799 = vmul.f32 %v1798, 0.6931472
    %v1800 = vlog2.pop %v1750
    %v1801 = vmul.f32 %v1800, 0.6931472
    %v1802 = vlog2.pop %v1751
    %v1803 = vmul.f32 %v1802, 0.6931472
    %v1804 = vlog2.pop %v1752
    %v1805 = vmul.f32 %v1804, 0.6931472
    %v1806 = vlog2.pop %v1753
    %v1807 = vmul.f32 %v1806, 0.6931472
    %v1808 = vlog2.pop %v1754
    %v1809 = vmul.f32 %v1808, 0.6931472
    %v1810 = vlog2.pop %v1755
    %v1811 = vmul.f32 %v1810, 0.6931472
    %v1812 = vlog2.pop %v1756
    %v1813 = vmul.f32 %v1812, 0.6931472
    %v1814 = vlog2.pop %v1757
    %v1815 = vmul.f32 %v1814, 0.6931472
    %v1816 = vlog2.pop %v1758
    %v1817 = vmul.f32 %v1816, 0.6931472
    %v1818 = vlog2.pop %v1759
    %v1819 = vmul.f32 %v1818, 0.6931472
    %v1820 = vlog2.pop %v1760
    %v1821 = vmul.f32 %v1820, 0.6931472
    %v1822 = vlog2.pop %v1761
    %v1823 = vmul.f32 %v1822, 0.6931472
    %v1824 = vlog2.pop %v1762
    %v1825 = vmul.f32 %v1824, 0.6931472
    %v1826 = vlog2.pop %v1763
    %v1827 = vmul.f32 %v1826, 0.6931472
    %v1828 = vadd.f32 %v1572, %v1765
    %v1829 = vadd.f32 %v1573, %v1767
    %v1830 = vadd.f32 %v1574, %v1769
    %v1831 = vadd.f32 %v1575, %v1771
    %v1832 = vadd.f32 %v1576, %v1773
    %v1833 = vadd.f32 %v1577, %v1775
    %v1834 = vadd.f32 %v1578, %v1777
    %v1835 = vadd.f32 %v1579, %v1779
    %v1836 = vadd.f32 %v1580, %v1781
    %v1837 = vadd.f32 %v1581, %v1783
    %v1838 = vadd.f32 %v1582, %v1785
    %v1839 = vadd.f32 %v1583, %v1787
    %v1840 = vadd.f32 %v1584, %v1789
    %v1841 = vadd.f32 %v1585, %v1791
    %v1842 = vadd.f32 %v1586, %v1793
    %v1843 = vadd.f32 %v1587, %v1795
    %v1844 = vadd.f32 %v1588, %v1797
    %v1845 = vadd.f32 %v1589, %v1799
    %v1846 = vadd.f32 %v1590, %v1801
    %v1847 = vadd.f32 %v1591, %v1803
    %v1848 = vadd.f32 %v1592, %v1805
    %v1849 = vadd.f32 %v1593, %v1807
    %v1850 = vadd.f32 %v1594, %v1809
    %v1851 = vadd.f32 %v1595, %v1811
    %v1852 = vadd.f32 %v1596, %v1813
    %v1853 = vadd.f32 %v1597, %v1815
    %v1854 = vadd.f32 %v1598, %v1817
    %v1855 = vadd.f32 %v1599, %v1819
    %v1856 = vadd.f32 %v1600, %v1821
    %v1857 = vadd.f32 %v1601, %v1823
    %v1858 = vadd.f32 %v1602, %v1825
    %v1859 = vadd.f32 %v1603, %v1827
    %v1860 = vsub.f32 %v1828, 0.6931472
    %v1861 = vsub.f32 %v1829, 0.6931472
    %v1862 = vsub.f32 %v1830, 0.6931472
    %v1863 = vsub.f32 %v1831, 0.6931472
    %v1864 = vsub.f32 %v1832, 0.6931472
    %v1865 = vsub.f32 %v1833, 0.6931472
    %v1866 = vsub.f32 %v1834, 0.6931472
    %v1867 = vsub.f32 %v1835, 0.6931472
    %v1868 = vsub.f32 %v1836, 0.6931472
    %v1869 = vsub.f32 %v1837, 0.6931472
    %v1870 = vsub.f32 %v1838, 0.6931472
    %v1871 = vsub.f32 %v1839, 0.6931472
    %v1872 = vsub.f32 %v1840, 0.6931472
    %v1873 = vsub.f32 %v1841, 0.6931472
    %v1874 = vsub.f32 %v1842, 0.6931472
    %v1875 = vsub.f32 %v1843, 0.6931472
    %v1876 = vsub.f32 %v1844, 0.6931472
    %v1877 = vsub.f32 %v1845, 0.6931472
    %v1878 = vsub.f32 %v1846, 0.6931472
    %v1879 = vsub.f32 %v1847, 0.6931472
    %v1880 = vsub.f32 %v1848, 0.6931472
    %v1881 = vsub.f32 %v1849, 0.6931472
    %v1882 = vsub.f32 %v1850, 0.6931472
    %v1883 = vsub.f32 %v1851, 0.6931472
    %v1884 = vsub.f32 %v1852, 0.6931472
    %v1885 = vsub.f32 %v1853, 0.6931472
    %v1886 = vsub.f32 %v1854, 0.6931472
    %v1887 = vsub.f32 %v1855, 0.6931472
    %v1888 = vsub.f32 %v1856, 0.6931472
    %v1889 = vsub.f32 %v1857, 0.6931472
    %v1890 = vsub.f32 %v1858, 0.6931472
    %v1891 = vsub.f32 %v1859, 0.6931472
    %v1892 = vpack.c.bf16 %v153, %v152
    %v1893 = vld [vmem:[#allocation4] sm:$0xf]
    %v1894 = vld [vmem:[#allocation4 + $0x4] sm:$0xf]
    %v1895 = vld [vmem:[#allocation4 + $0x8] sm:$0xf]
    %v1896 = vld [vmem:[#allocation4 + $0xc] sm:$0xf]
    %v1897 = vld [vmem:[#allocation4 + $0x10] sm:$0xf]
    %v1898 = vld [vmem:[#allocation4 + $0x14] sm:$0xf]
    %v1899 = vld [vmem:[#allocation4 + $0x18] sm:$0xf]
    %v1900 = vld [vmem:[#allocation4 + $0x1c] sm:$0xf]
    %v1901 = vld [vmem:[#allocation4 + $0x20] sm:$0xf]
    %v1902 = vld [vmem:[#allocation4 + $0x24] sm:$0xf]
    %v1903 = vld [vmem:[#allocation4 + $0x28] sm:$0xf]
    %v1904 = vld [vmem:[#allocation4 + $0x2c] sm:$0xf]
    %v1905 = vld [vmem:[#allocation4 + $0x30] sm:$0xf]
    %v1906 = vld [vmem:[#allocation4 + $0x34] sm:$0xf]
    %v1907 = vld [vmem:[#allocation4 + $0x38] sm:$0xf]
    %v1908 = vld [vmem:[#allocation4 + $0x3c] sm:$0xf]
    %v1909 = vld [vmem:[%s7] sm:$0x1]
    %v1911 = vlaneseq
    %v1912 = vshrl.u32 %v1911, 7
    %v1913 = vsub.s32 0, %v1912
    %v1914 = vrot.slane %v1909, %v1913
    %v1932 = vunpack.c.l.b16 %v1893
    %v1933 = vunpack.c.l.b16 %v1894
    %v1934 = vunpack.c.l.b16 %v1895
    %v1935 = vunpack.c.l.b16 %v1896
    %v1936 = vunpack.c.l.b16 %v1897
    %v1937 = vunpack.c.l.b16 %v1898
    %v1938 = vunpack.c.l.b16 %v1899
    %v1939 = vunpack.c.l.b16 %v1900
    %v1940 = vunpack.c.l.b16 %v1901
    %v1941 = vunpack.c.l.b16 %v1902
    %v1942 = vunpack.c.l.b16 %v1903
    %v1943 = vunpack.c.l.b16 %v1904
    %v1944 = vunpack.c.l.b16 %v1905
    %v1945 = vunpack.c.l.b16 %v1906
    %v1946 = vunpack.c.l.b16 %v1907
    %v1947 = vunpack.c.l.b16 %v1908
    %v1948 = vpack.c.b16 %v1933, %v1932
    %v1949 = vpack.c.b16 %v1935, %v1934
    %v1950 = vpack.c.b16 %v1937, %v1936
    %v1951 = vpack.c.b16 %v1939, %v1938
    %v1952 = vpack.c.b16 %v1941, %v1940
    %v1953 = vpack.c.b16 %v1943, %v1942
    %v1954 = vpack.c.b16 %v1945, %v1944
    %v1955 = vpack.c.b16 %v1947, %v1946
    %1964 = vmatprep.subr.bf16.mxu0 0
    %1965 = vmatpush1.bf16.msra.mxu0 %v1948
    %1966 = vmatprep.subr.bf16.mxu0 0
    %1967 = vmatpush1.bf16.msra.mxu0 %v1949
    %1968 = vmatprep.subr.bf16.mxu0 0
    %1969 = vmatpush1.bf16.msra.mxu0 %v1950
    %1970 = vmatprep.subr.bf16.mxu0 0
    %1971 = vmatpush1.bf16.msra.mxu0 %v1951
    %1972 = vmatprep.subr.bf16.mxu0 0
    %1973 = vmatpush1.bf16.msra.mxu0 %v1952
    %1974 = vmatprep.subr.bf16.mxu0 0
    %1975 = vmatpush1.bf16.msra.mxu0 %v1953
    %1976 = vmatprep.subr.bf16.mxu0 0
    %1977 = vmatpush1.bf16.msra.mxu0 %v1954
    %1978 = vmatprep.subr.bf16.mxu0 0
    %1979 = vmatpush1.bf16.msra.mxu0 %v1955
    %1980 = vmatprep.subr.bf16.mxu0 0
    %1981 = vmatpush1.bf16.msra.mxu0 0
    %1982 = vmatprep.subr.bf16.mxu0 0
    %1983 = vmatpush1.bf16.msra.mxu0 0
    %1984 = vmatprep.subr.bf16.mxu0 0
    %1985 = vmatpush1.bf16.msra.mxu0 0
    %1986 = vmatprep.subr.bf16.mxu0 0
    %1987 = vmatpush1.bf16.msra.mxu0 0
    %1988 = vmatprep.subr.bf16.mxu0 0
    %1989 = vmatpush1.bf16.msra.mxu0 0
    %1990 = vmatprep.subr.bf16.mxu0 0
    %1991 = vmatpush1.bf16.msra.mxu0 0
    %1992 = vmatprep.subr.bf16.mxu0 0
    %1993 = vmatpush1.bf16.msra.mxu0 0
    %1994 = vmatprep.subr.bf16.mxu0 0
    %1995 = vmatpush1.bf16.msra.mxu0 0
    %1996 = vmatprep.mubr.bf16.mxu0 0
    %1997 = vmatmul.mubr.bf16.gmra.mrb[0].mxu0 %v1892
    %v1998 = vpop.f32.mrb[0].mxu0
    %v1999 = vadd.f32 %v1914, %v1998
    %v2000 = vpop.f32.mrb[0].mxu0
    %v2001 = vpop.f32.mrb[0].mxu0
    %v2002 = vadd.f32 %v1914, %v2001
    %v2003 = vpop.f32.mrb[0].mxu0
    %2004 = vdwg.mxu0
    %v2005 = vmul.f32 %v1860, %v243
    %v2006 = vmul.f32 %v1861, %v247
    %v2007 = vmul.f32 %v1862, %v254
    %v2008 = vmul.f32 %v1863, %v258
    %v2009 = vmul.f32 %v1864, %v265
    %v2010 = vmul.f32 %v1865, %v269
    %v2011 = vmul.f32 %v1866, %v276
    %v2012 = vmul.f32 %v1867, %v280
    %v2013 = vmul.f32 %v1868, %v287
    %v2014 = vmul.f32 %v1869, %v291
    %v2015 = vmul.f32 %v1870, %v298
    %v2016 = vmul.f32 %v1871, %v302
    %v2017 = vmul.f32 %v1872, %v309
    %v2018 = vmul.f32 %v1873, %v313
    %v2019 = vmul.f32 %v1874, %v320
    %v2020 = vmul.f32 %v1875, %v324
    %v2021 = vmul.f32 %v1876, %v331
    %v2022 = vmul.f32 %v1877, %v335
    %v2023 = vmul.f32 %v1878, %v342
    %v2024 = vmul.f32 %v1879, %v346
    %v2025 = vmul.f32 %v1880, %v353
    %v2026 = vmul.f32 %v1881, %v357
    %v2027 = vmul.f32 %v1882, %v364
    %v2028 = vmul.f32 %v1883, %v368
    %v2029 = vmul.f32 %v1884, %v375
    %v2030 = vmul.f32 %v1885, %v379
    %v2031 = vmul.f32 %v1886, %v386
    %v2032 = vmul.f32 %v1887, %v390
    %v2033 = vmul.f32 %v1888, %v397
    %v2034 = vmul.f32 %v1889, %v401
    %v2035 = vmul.f32 %v1890, %v408
    %v2036 = vmul.f32 %v1891, %v412
    %v2037 = vmul.f32 %v2005, %v1999
    %v2038 = vmul.f32 %v2006, %v2002
    %v2039 = vmul.f32 %v2007, %v1999
    %v2040 = vmul.f32 %v2008, %v2002
    %v2041 = vmul.f32 %v2009, %v1999
    %v2042 = vmul.f32 %v2010, %v2002
    %v2043 = vmul.f32 %v2011, %v1999
    %v2044 = vmul.f32 %v2012, %v2002
    %v2045 = vmul.f32 %v2013, %v1999
    %v2046 = vmul.f32 %v2014, %v2002
    %v2047 = vmul.f32 %v2015, %v1999
    %v2048 = vmul.f32 %v2016, %v2002
    %v2049 = vmul.f32 %v2017, %v1999
    %v2050 = vmul.f32 %v2018, %v2002
    %v2051 = vmul.f32 %v2019, %v1999
    %v2052 = vmul.f32 %v2020, %v2002
    %v2053 = vmul.f32 %v2021, %v1999
    %v2054 = vmul.f32 %v2022, %v2002
    %v2055 = vmul.f32 %v2023, %v1999
    %v2056 = vmul.f32 %v2024, %v2002
    %v2057 = vmul.f32 %v2025, %v1999
    %v2058 = vmul.f32 %v2026, %v2002
    %v2059 = vmul.f32 %v2027, %v1999
    %v2060 = vmul.f32 %v2028, %v2002
    %v2061 = vmul.f32 %v2029, %v1999
    %v2062 = vmul.f32 %v2030, %v2002
    %v2063 = vmul.f32 %v2031, %v1999
    %v2064 = vmul.f32 %v2032, %v2002
    %v2065 = vmul.f32 %v2033, %v1999
    %v2066 = vmul.f32 %v2034, %v2002
    %v2067 = vmul.f32 %v2035, %v1999
    %v2068 = vmul.f32 %v2036, %v2002
    %v2069 = vadd.f32 %v2037, %v2038
    %v2070 = vrot.slane %v2069, 4
    %v2071 = vadd.f32 %v2069, %v2070
    %v2072 = vrot.slane %v2071, 2
    %v2073 = vadd.f32 %v2071, %v2072
    %v2074 = vrot.slane %v2073, 1
    %v2075 = vadd.f32 %v2073, %v2074
    %v2076 = vadd.f32 %v2039, %v2040
    %v2077 = vrot.slane %v2076, 4
    %v2078 = vadd.f32 %v2076, %v2077
    %v2079 = vrot.slane %v2078, 2
    %v2080 = vadd.f32 %v2078, %v2079
    %v2081 = vrot.slane %v2080, 1
    %v2082 = vadd.f32 %v2080, %v2081
    %v2083 = vadd.f32 %v2041, %v2042
    %v2084 = vrot.slane %v2083, 4
    %v2085 = vadd.f32 %v2083, %v2084
    %v2086 = vrot.slane %v2085, 2
    %v2087 = vadd.f32 %v2085, %v2086
    %v2088 = vrot.slane %v2087, 1
    %v2089 = vadd.f32 %v2087, %v2088
    %v2090 = vadd.f32 %v2043, %v2044
    %v2091 = vrot.slane %v2090, 4
    %v2092 = vadd.f32 %v2090, %v2091
    %v2093 = vrot.slane %v2092, 2
    %v2094 = vadd.f32 %v2092, %v2093
    %v2095 = vrot.slane %v2094, 1
    %v2096 = vadd.f32 %v2094, %v2095
    %v2097 = vadd.f32 %v2045, %v2046
    %v2098 = vrot.slane %v2097, 4
    %v2099 = vadd.f32 %v2097, %v2098
    %v2100 = vrot.slane %v2099, 2
    %v2101 = vadd.f32 %v2099, %v2100
    %v2102 = vrot.slane %v2101, 1
    %v2103 = vadd.f32 %v2101, %v2102
    %v2104 = vadd.f32 %v2047, %v2048
    %v2105 = vrot.slane %v2104, 4
    %v2106 = vadd.f32 %v2104, %v2105
    %v2107 = vrot.slane %v2106, 2
    %v2108 = vadd.f32 %v2106, %v2107
    %v2109 = vrot.slane %v2108, 1
    %v2110 = vadd.f32 %v2108, %v2109
    %v2111 = vadd.f32 %v2049, %v2050
    %v2112 = vrot.slane %v2111, 4
    %v2113 = vadd.f32 %v2111, %v2112
    %v2114 = vrot.slane %v2113, 2
    %v2115 = vadd.f32 %v2113, %v2114
    %v2116 = vrot.slane %v2115, 1
    %v2117 = vadd.f32 %v2115, %v2116
    %v2118 = vadd.f32 %v2051, %v2052
    %v2119 = vrot.slane %v2118, 4
    %v2120 = vadd.f32 %v2118, %v2119
    %v2121 = vrot.slane %v2120, 2
    %v2122 = vadd.f32 %v2120, %v2121
    %v2123 = vrot.slane %v2122, 1
    %v2124 = vadd.f32 %v2122, %v2123
    %v2125 = vadd.f32 %v2053, %v2054
    %v2126 = vrot.slane %v2125, 4
    %v2127 = vadd.f32 %v2125, %v2126
    %v2128 = vrot.slane %v2127, 2
    %v2129 = vadd.f32 %v2127, %v2128
    %v2130 = vrot.slane %v2129, 1
    %v2131 = vadd.f32 %v2129, %v2130
    %v2132 = vadd.f32 %v2055, %v2056
    %v2133 = vrot.slane %v2132, 4
    %v2134 = vadd.f32 %v2132, %v2133
    %v2135 = vrot.slane %v2134, 2
    %v2136 = vadd.f32 %v2134, %v2135
    %v2137 = vrot.slane %v2136, 1
    %v2138 = vadd.f32 %v2136, %v2137
    %v2139 = vadd.f32 %v2057, %v2058
    %v2140 = vrot.slane %v2139, 4
    %v2141 = vadd.f32 %v2139, %v2140
    %v2142 = vrot.slane %v2141, 2
    %v2143 = vadd.f32 %v2141, %v2142
    %v2144 = vrot.slane %v2143, 1
    %v2145 = vadd.f32 %v2143, %v2144
    %v2146 = vadd.f32 %v2059, %v2060
    %v2147 = vrot.slane %v2146, 4
    %v2148 = vadd.f32 %v2146, %v2147
    %v2149 = vrot.slane %v2148, 2
    %v2150 = vadd.f32 %v2148, %v2149
    %v2151 = vrot.slane %v2150, 1
    %v2152 = vadd.f32 %v2150, %v2151
    %v2153 = vadd.f32 %v2061, %v2062
    %v2154 = vrot.slane %v2153, 4
    %v2155 = vadd.f32 %v2153, %v2154
    %v2156 = vrot.slane %v2155, 2
    %v2157 = vadd.f32 %v2155, %v2156
    %v2158 = vrot.slane %v2157, 1
    %v2159 = vadd.f32 %v2157, %v2158
    %v2160 = vadd.f32 %v2063, %v2064
    %v2161 = vrot.slane %v2160, 4
    %v2162 = vadd.f32 %v2160, %v2161
    %v2163 = vrot.slane %v2162, 2
    %v2164 = vadd.f32 %v2162, %v2163
    %v2165 = vrot.slane %v2164, 1
    %v2166 = vadd.f32 %v2164, %v2165
    %v2167 = vadd.f32 %v2065, %v2066
    %v2168 = vrot.slane %v2167, 4
    %v2169 = vadd.f32 %v2167, %v2168
    %v2170 = vrot.slane %v2169, 2
    %v2171 = vadd.f32 %v2169, %v2170
    %v2172 = vrot.slane %v2171, 1
    %v2173 = vadd.f32 %v2171, %v2172
    %v2174 = vadd.f32 %v2067, %v2068
    %v2175 = vrot.slane %v2174, 4
    %v2176 = vadd.f32 %v2174, %v2175
    %v2177 = vrot.slane %v2176, 2
    %v2178 = vadd.f32 %v2176, %v2177
    %v2179 = vrot.slane %v2178, 1
    %v2180 = vadd.f32 %v2178, %v2179
    %v2181 = vpack.c.bf16 %v2075, %v2075
    %v2182 = vpack.c.bf16 %v2082, %v2082
    %v2183 = vpack.c.bf16 %v2089, %v2089
    %v2184 = vpack.c.bf16 %v2096, %v2096
    %v2185 = vpack.c.bf16 %v2103, %v2103
    %v2186 = vpack.c.bf16 %v2110, %v2110
    %v2187 = vpack.c.bf16 %v2117, %v2117
    %v2188 = vpack.c.bf16 %v2124, %v2124
    %v2189 = vpack.c.bf16 %v2131, %v2131
    %v2190 = vpack.c.bf16 %v2138, %v2138
    %v2191 = vpack.c.bf16 %v2145, %v2145
    %v2192 = vpack.c.bf16 %v2152, %v2152
    %v2193 = vpack.c.bf16 %v2159, %v2159
    %v2194 = vpack.c.bf16 %v2166, %v2166
    %v2195 = vpack.c.bf16 %v2173, %v2173
    %v2196 = vpack.c.bf16 %v2180, %v2180
    %v2197 = vld [vmem:[#allocation9] sm:$0xf]
    %v2198 = vld [vmem:[#allocation9 + $0x4] sm:$0xf]
    %v2199 = vld [vmem:[#allocation9 + $0x8] sm:$0xf]
    %v2200 = vld [vmem:[#allocation9 + $0xc] sm:$0xf]
    %v2201 = vld [vmem:[#allocation9 + $0x10] sm:$0xf]
    %v2202 = vld [vmem:[#allocation9 + $0x14] sm:$0xf]
    %v2203 = vld [vmem:[#allocation9 + $0x18] sm:$0xf]
    %v2204 = vld [vmem:[#allocation9 + $0x1c] sm:$0xf]
    %v2205 = vld [vmem:[#allocation9 + $0x20] sm:$0xf]
    %v2206 = vld [vmem:[#allocation9 + $0x24] sm:$0xf]
    %v2207 = vld [vmem:[#allocation9 + $0x28] sm:$0xf]
    %v2208 = vld [vmem:[#allocation9 + $0x2c] sm:$0xf]
    %v2209 = vld [vmem:[#allocation9 + $0x30] sm:$0xf]
    %v2210 = vld [vmem:[#allocation9 + $0x34] sm:$0xf]
    %v2211 = vld [vmem:[#allocation9 + $0x38] sm:$0xf]
    %v2212 = vld [vmem:[#allocation9 + $0x3c] sm:$0xf]
    %v2213 = vld [vmem:[%s13] sm:$0x1]
    %v2215 = vlaneseq
    %v2216 = vshrl.u32 %v2215, 7
    %v2217 = vsub.s32 0, %v2216
    %v2218 = vrot.slane %v2213, %v2217
    %v2236 = vunpack.c.l.b16 %v2181
    %v2237 = vunpack.c.l.b16 %v2182
    %v2238 = vunpack.c.l.b16 %v2183
    %v2239 = vunpack.c.l.b16 %v2184
    %v2240 = vunpack.c.l.b16 %v2185
    %v2241 = vunpack.c.l.b16 %v2186
    %v2242 = vunpack.c.l.b16 %v2187
    %v2243 = vunpack.c.l.b16 %v2188
    %v2244 = vunpack.c.l.b16 %v2189
    %v2245 = vunpack.c.l.b16 %v2190
    %v2246 = vunpack.c.l.b16 %v2191
    %v2247 = vunpack.c.l.b16 %v2192
    %v2248 = vunpack.c.l.b16 %v2193
    %v2249 = vunpack.c.l.b16 %v2194
    %v2250 = vunpack.c.l.b16 %v2195
    %v2251 = vunpack.c.l.b16 %v2196
    %vm2252 = vcmask 1041409
    %v2253 = vsel %vm2252, %v2237, %v2236
    %vm2254 = vcmask 1042434
    %v2255 = vsel %vm2254, %v2238, %v2253
    %vm2256 = vcmask 1043459
    %v2257 = vsel %vm2256, %v2239, %v2255
    %vm2258 = vcmask 1044484
    %v2259 = vsel %vm2258, %v2240, %v2257
    %vm2260 = vcmask 1045509
    %v2261 = vsel %vm2260, %v2241, %v2259
    %vm2262 = vcmask 1046534
    %v2263 = vsel %vm2262, %v2242, %v2261
    %vm2264 = vcmask 1047559
    %v2265 = vsel %vm2264, %v2243, %v2263
    %v2266 = vsel %vm2252, %v2245, %v2244
    %v2267 = vsel %vm2254, %v2246, %v2266
    %v2268 = vsel %vm2256, %v2247, %v2267
    %v2269 = vsel %vm2258, %v2248, %v2268
    %v2270 = vsel %vm2260, %v2249, %v2269
    %v2271 = vsel %vm2262, %v2250, %v2270
    %v2272 = vsel %vm2264, %v2251, %v2271
    %v2273 = vpack.c.b16 %v2272, %v2265
    %v2291 = vunpack.c.l.b16 %v2197
    %v2292 = vunpack.c.l.b16 %v2198
    %v2293 = vunpack.c.l.b16 %v2199
    %v2294 = vunpack.c.l.b16 %v2200
    %v2295 = vunpack.c.l.b16 %v2201
    %v2296 = vunpack.c.l.b16 %v2202
    %v2297 = vunpack.c.l.b16 %v2203
    %v2298 = vunpack.c.l.b16 %v2204
    %v2299 = vunpack.c.l.b16 %v2205
    %v2300 = vunpack.c.l.b16 %v2206
    %v2301 = vunpack.c.l.b16 %v2207
    %v2302 = vunpack.c.l.b16 %v2208
    %v2303 = vunpack.c.l.b16 %v2209
    %v2304 = vunpack.c.l.b16 %v2210
    %v2305 = vunpack.c.l.b16 %v2211
    %v2306 = vunpack.c.l.b16 %v2212
    %v2307 = vpack.c.b16 %v2292, %v2291
    %v2308 = vpack.c.b16 %v2294, %v2293
    %v2309 = vpack.c.b16 %v2296, %v2295
    %v2310 = vpack.c.b16 %v2298, %v2297
    %v2311 = vpack.c.b16 %v2300, %v2299
    %v2312 = vpack.c.b16 %v2302, %v2301
    %v2313 = vpack.c.b16 %v2304, %v2303
    %v2314 = vpack.c.b16 %v2306, %v2305
    %2323 = vmatprep.subr.bf16.mxu0 0
    %2324 = vmatpush1.bf16.msra.mxu0 %v2307
    %2325 = vmatprep.subr.bf16.mxu0 0
    %2326 = vmatpush1.bf16.msra.mxu0 %v2308
    %2327 = vmatprep.subr.bf16.mxu0 0
    %2328 = vmatpush1.bf16.msra.mxu0 %v2309
    %2329 = vmatprep.subr.bf16.mxu0 0
    %2330 = vmatpush1.bf16.msra.mxu0 %v2310
    %2331 = vmatprep.subr.bf16.mxu0 0
    %2332 = vmatpush1.bf16.msra.mxu0 %v2311
    %2333 = vmatprep.subr.bf16.mxu0 0
    %2334 = vmatpush1.bf16.msra.mxu0 %v2312
    %2335 = vmatprep.subr.bf16.mxu0 0
    %2336 = vmatpush1.bf16.msra.mxu0 %v2313
    %2337 = vmatprep.subr.bf16.mxu0 0
    %2338 = vmatpush1.bf16.msra.mxu0 %v2314
    %2339 = vmatprep.subr.bf16.mxu0 0
    %2340 = vmatpush1.bf16.msra.mxu0 0
    %2341 = vmatprep.subr.bf16.mxu0 0
    %2342 = vmatpush1.bf16.msra.mxu0 0
    %2343 = vmatprep.subr.bf16.mxu0 0
    %2344 = vmatpush1.bf16.msra.mxu0 0
    %2345 = vmatprep.subr.bf16.mxu0 0
    %2346 = vmatpush1.bf16.msra.mxu0 0
    %2347 = vmatprep.subr.bf16.mxu0 0
    %2348 = vmatpush1.bf16.msra.mxu0 0
    %2349 = vmatprep.subr.bf16.mxu0 0
    %2350 = vmatpush1.bf16.msra.mxu0 0
    %2351 = vmatprep.subr.bf16.mxu0 0
    %2352 = vmatpush1.bf16.msra.mxu0 0
    %2353 = vmatprep.subr.bf16.mxu0 0
    %2354 = vmatpush1.bf16.msra.mxu0 0
    %2355 = vmatprep.mubr.bf16.mxu0 0
    %2356 = vmatmul.mubr.bf16.gmra.mrb[0].mxu0 %v2273
    %v2357 = vpop.f32.mrb[0].mxu0
    %v2358 = vadd.f32 %v2218, %v2357
    %v2359 = vpop.f32.mrb[0].mxu0
    %v2360 = vpop.f32.mrb[0].mxu0
    %v2361 = vadd.f32 %v2218, %v2360
    %v2362 = vpop.f32.mrb[0].mxu0
    %2363 = vdwg.mxu0
    %v2364 = vmax.f32 %v2358, 0.0
    %v2365 = vmax.f32 %v2361, 0.0
    %v2366 = vand.u32 2147483647, %v2358
    %v2367 = vand.u32 2147483647, %v2361
    %v2368 = vsub.f32 0.0, %v2366
    %v2369 = vsub.f32 0.0, %v2367
    %v2370 = vmul.f32 %v2368, 1.442695
    %v2371 = vpow.pop %v2370
    %v2372 = vmul.f32 %v2369, 1.442695
    %v2373 = vpow.pop %v2372
    %v2374 = vadd.f32 %v2371, 1.0
    %v2375 = vadd.f32 %v2373, 1.0
    %v2376 = vlog2.pop %v2374
    %v2377 = vmul.f32 %v2376, 0.6931472
    %v2378 = vlog2.pop %v2375
    %v2379 = vmul.f32 %v2378, 0.6931472
    %v2380 = vadd.f32 %v2364, %v2377
    %v2381 = vadd.f32 %v2365, %v2379
    %v2382 = vsub.f32 %v2380, 0.6931472
    %v2383 = vsub.f32 %v2381, 0.6931472
    %v2384 = vpack.c.bf16 %v2383, %v2382
    %v2385 = vld [vmem:[%s14] sm:$0xf]
    %v2386 = vld [vmem:[%s14 + $0x4] sm:$0xf]
    %v2387 = vld [vmem:[%s14 + $0x8] sm:$0xf]
    %v2388 = vld [vmem:[%s14 + $0xc] sm:$0xf]
    %v2389 = vld [vmem:[%s14 + $0x10] sm:$0xf]
    %v2390 = vld [vmem:[%s14 + $0x14] sm:$0xf]
    %v2391 = vld [vmem:[%s14 + $0x18] sm:$0xf]
    %v2392 = vld [vmem:[%s14 + $0x1c] sm:$0xf]
    %v2393 = vld [vmem:[%s14 + $0x20] sm:$0xf]
    %v2394 = vld [vmem:[%s14 + $0x24] sm:$0xf]
    %v2395 = vld [vmem:[%s14 + $0x28] sm:$0xf]
    %v2396 = vld [vmem:[%s14 + $0x2c] sm:$0xf]
    %v2397 = vld [vmem:[%s14 + $0x30] sm:$0xf]
    %v2398 = vld [vmem:[%s14 + $0x34] sm:$0xf]
    %v2399 = vld [vmem:[%s14 + $0x38] sm:$0xf]
    %v2400 = vld [vmem:[%s14 + $0x3c] sm:$0xf]
    %v2401 = vld [vmem:[%s15] sm:$0x1]
    %v2403 = vlaneseq
    %v2404 = vshrl.u32 %v2403, 7
    %v2405 = vsub.s32 0, %v2404
    %v2406 = vrot.slane %v2401, %v2405
    %v2424 = vunpack.c.l.b16 %v2385
    %v2425 = vunpack.c.l.b16 %v2386
    %v2426 = vunpack.c.l.b16 %v2387
    %v2427 = vunpack.c.l.b16 %v2388
    %v2428 = vunpack.c.l.b16 %v2389
    %v2429 = vunpack.c.l.b16 %v2390
    %v2430 = vunpack.c.l.b16 %v2391
    %v2431 = vunpack.c.l.b16 %v2392
    %v2432 = vunpack.c.l.b16 %v2393
    %v2433 = vunpack.c.l.b16 %v2394
    %v2434 = vunpack.c.l.b16 %v2395
    %v2435 = vunpack.c.l.b16 %v2396
    %v2436 = vunpack.c.l.b16 %v2397
    %v2437 = vunpack.c.l.b16 %v2398
    %v2438 = vunpack.c.l.b16 %v2399
    %v2439 = vunpack.c.l.b16 %v2400
    %v2440 = vpack.c.b16 %v2425, %v2424
    %v2441 = vpack.c.b16 %v2427, %v2426
    %v2442 = vpack.c.b16 %v2429, %v2428
    %v2443 = vpack.c.b16 %v2431, %v2430
    %v2444 = vpack.c.b16 %v2433, %v2432
    %v2445 = vpack.c.b16 %v2435, %v2434
    %v2446 = vpack.c.b16 %v2437, %v2436
    %v2447 = vpack.c.b16 %v2439, %v2438
    %2456 = vmatprep.subr.bf16.mxu0 0
    %2457 = vmatpush1.bf16.msra.mxu0 %v2440
    %2458 = vmatprep.subr.bf16.mxu0 0
    %2459 = vmatpush1.bf16.msra.mxu0 %v2441
    %2460 = vmatprep.subr.bf16.mxu0 0
    %2461 = vmatpush1.bf16.msra.mxu0 %v2442
    %2462 = vmatprep.subr.bf16.mxu0 0
    %2463 = vmatpush1.bf16.msra.mxu0 %v2443
    %2464 = vmatprep.subr.bf16.mxu0 0
    %2465 = vmatpush1.bf16.msra.mxu0 %v2444
    %2466 = vmatprep.subr.bf16.mxu0 0
    %2467 = vmatpush1.bf16.msra.mxu0 %v2445
    %2468 = vmatprep.subr.bf16.mxu0 0
    %2469 = vmatpush1.bf16.msra.mxu0 %v2446
    %2470 = vmatprep.subr.bf16.mxu0 0
    %2471 = vmatpush1.bf16.msra.mxu0 %v2447
    %2472 = vmatprep.subr.bf16.mxu0 0
    %2473 = vmatpush1.bf16.msra.mxu0 0
    %2474 = vmatprep.subr.bf16.mxu0 0
    %2475 = vmatpush1.bf16.msra.mxu0 0
    %2476 = vmatprep.subr.bf16.mxu0 0
    %2477 = vmatpush1.bf16.msra.mxu0 0
    %2478 = vmatprep.subr.bf16.mxu0 0
    %2479 = vmatpush1.bf16.msra.mxu0 0
    %2480 = vmatprep.subr.bf16.mxu0 0
    %2481 = vmatpush1.bf16.msra.mxu0 0
    %2482 = vmatprep.subr.bf16.mxu0 0
    %2483 = vmatpush1.bf16.msra.mxu0 0
    %2484 = vmatprep.subr.bf16.mxu0 0
    %2485 = vmatpush1.bf16.msra.mxu0 0
    %2486 = vmatprep.subr.bf16.mxu0 0
    %2487 = vmatpush1.bf16.msra.mxu0 0
    %2488 = vmatprep.mubr.bf16.mxu0 0
    %2489 = vmatmul.mubr.bf16.gmra.mrb[0].mxu0 %v2384
    %v2490 = vpop.f32.mrb[0].mxu0
    %v2491 = vadd.f32 %v2406, %v2490
    %v2492 = vpop.f32.mrb[0].mxu0
    %v2493 = vpop.f32.mrb[0].mxu0
    %v2494 = vadd.f32 %v2406, %v2493
    %v2495 = vpop.f32.mrb[0].mxu0
    %2496 = vdwg.mxu0
    %v2497 = vmax.f32 %v2491, 0.0
    %v2498 = vmax.f32 %v2494, 0.0
    %v2499 = vand.u32 2147483647, %v2491
    %v2500 = vand.u32 2147483647, %v2494
    %v2501 = vsub.f32 0.0, %v2499
    %v2502 = vsub.f32 0.0, %v2500
    %v2503 = vmul.f32 %v2501, 1.442695
    %v2504 = vpow.pop %v2503
    %v2505 = vmul.f32 %v2502, 1.442695
    %v2506 = vpow.pop %v2505
    %v2507 = vadd.f32 %v2504, 1.0
    %v2508 = vadd.f32 %v2506, 1.0
    %v2509 = vlog2.pop %v2507
    %v2510 = vmul.f32 %v2509, 0.6931472
    %v2511 = vlog2.pop %v2508
    %v2512 = vmul.f32 %v2511, 0.6931472
    %v2513 = vadd.f32 %v2497, %v2510
    %v2514 = vadd.f32 %v2498, %v2512
    %v2515 = vsub.f32 %v2513, 0.6931472
    %v2516 = vsub.f32 %v2514, 0.6931472
    %v2517 = vpack.c.bf16 %v2516, %v2515
    %v2518 = vld [vmem:[%s16] sm:$0xf]
    %v2519 = vld [vmem:[%s16 + $0x4] sm:$0xf]
    %v2520 = vld [vmem:[%s16 + $0x8] sm:$0xf]
    %v2521 = vld [vmem:[%s16 + $0xc] sm:$0xf]
    %v2522 = vld [vmem:[%s16 + $0x10] sm:$0xf]
    %v2523 = vld [vmem:[%s16 + $0x14] sm:$0xf]
    %v2524 = vld [vmem:[%s16 + $0x18] sm:$0xf]
    %v2525 = vld [vmem:[%s16 + $0x1c] sm:$0xf]
    %v2526 = vld [vmem:[%s16 + $0x20] sm:$0xf]
    %v2527 = vld [vmem:[%s16 + $0x24] sm:$0xf]
    %v2528 = vld [vmem:[%s16 + $0x28] sm:$0xf]
    %v2529 = vld [vmem:[%s16 + $0x2c] sm:$0xf]
    %v2530 = vld [vmem:[%s16 + $0x30] sm:$0xf]
    %v2531 = vld [vmem:[%s16 + $0x34] sm:$0xf]
    %v2532 = vld [vmem:[%s16 + $0x38] sm:$0xf]
    %v2533 = vld [vmem:[%s16 + $0x3c] sm:$0xf]
    %v2534 = vld [vmem:[%s17] sm:$0x1]
    %v2536 = vlaneseq
    %v2537 = vshrl.u32 %v2536, 7
    %v2538 = vsub.s32 0, %v2537
    %v2539 = vrot.slane %v2534, %v2538
    %v2557 = vunpack.c.l.b16 %v2518
    %v2558 = vunpack.c.l.b16 %v2519
    %v2559 = vunpack.c.l.b16 %v2520
    %v2560 = vunpack.c.l.b16 %v2521
    %v2561 = vunpack.c.l.b16 %v2522
    %v2562 = vunpack.c.l.b16 %v2523
    %v2563 = vunpack.c.l.b16 %v2524
    %v2564 = vunpack.c.l.b16 %v2525
    %v2565 = vunpack.c.l.b16 %v2526
    %v2566 = vunpack.c.l.b16 %v2527
    %v2567 = vunpack.c.l.b16 %v2528
    %v2568 = vunpack.c.l.b16 %v2529
    %v2569 = vunpack.c.l.b16 %v2530
    %v2570 = vunpack.c.l.b16 %v2531
    %v2571 = vunpack.c.l.b16 %v2532
    %v2572 = vunpack.c.l.b16 %v2533
    %v2573 = vpack.c.b16 %v2558, %v2557
    %v2574 = vpack.c.b16 %v2560, %v2559
    %v2575 = vpack.c.b16 %v2562, %v2561
    %v2576 = vpack.c.b16 %v2564, %v2563
    %v2577 = vpack.c.b16 %v2566, %v2565
    %v2578 = vpack.c.b16 %v2568, %v2567
    %v2579 = vpack.c.b16 %v2570, %v2569
    %v2580 = vpack.c.b16 %v2572, %v2571
    %2589 = vmatprep.subr.bf16.mxu0 0
    %2590 = vmatpush1.bf16.msra.mxu0 %v2573
    %2591 = vmatprep.subr.bf16.mxu0 0
    %2592 = vmatpush1.bf16.msra.mxu0 %v2574
    %2593 = vmatprep.subr.bf16.mxu0 0
    %2594 = vmatpush1.bf16.msra.mxu0 %v2575
    %2595 = vmatprep.subr.bf16.mxu0 0
    %2596 = vmatpush1.bf16.msra.mxu0 %v2576
    %2597 = vmatprep.subr.bf16.mxu0 0
    %2598 = vmatpush1.bf16.msra.mxu0 %v2577
    %2599 = vmatprep.subr.bf16.mxu0 0
    %2600 = vmatpush1.bf16.msra.mxu0 %v2578
    %2601 = vmatprep.subr.bf16.mxu0 0
    %2602 = vmatpush1.bf16.msra.mxu0 %v2579
    %2603 = vmatprep.subr.bf16.mxu0 0
    %2604 = vmatpush1.bf16.msra.mxu0 %v2580
    %2605 = vmatprep.subr.bf16.mxu0 0
    %2606 = vmatpush1.bf16.msra.mxu0 0
    %2607 = vmatprep.subr.bf16.mxu0 0
    %2608 = vmatpush1.bf16.msra.mxu0 0
    %2609 = vmatprep.subr.bf16.mxu0 0
    %2610 = vmatpush1.bf16.msra.mxu0 0
    %2611 = vmatprep.subr.bf16.mxu0 0
    %2612 = vmatpush1.bf16.msra.mxu0 0
    %2613 = vmatprep.subr.bf16.mxu0 0
    %2614 = vmatpush1.bf16.msra.mxu0 0
    %2615 = vmatprep.subr.bf16.mxu0 0
    %2616 = vmatpush1.bf16.msra.mxu0 0
    %2617 = vmatprep.subr.bf16.mxu0 0
    %2618 = vmatpush1.bf16.msra.mxu0 0
    %2619 = vmatprep.subr.bf16.mxu0 0
    %2620 = vmatpush1.bf16.msra.mxu0 0
    %2621 = vmatprep.mubr.bf16.mxu0 0
    %2622 = vmatmul.mubr.bf16.gmra.mrb[0].mxu0 %v2517
    %v2623 = vpop.f32.mrb[0].mxu0
    %v2624 = vadd.f32 %v2539, %v2623
    %v2625 = vpop.f32.mrb[0].mxu0
    %v2626 = vpop.f32.mrb[0].mxu0
    %v2627 = vadd.f32 %v2539, %v2626
    %v2628 = vpop.f32.mrb[0].mxu0
    %2629 = vdwg.mxu0
    %v2630 = vmul.f32 %v152, 2.0
    %v2631 = vmul.f32 %v153, 2.0
    %v2632 = vadd.f32 %v2630, %v2624
    %v2633 = vadd.f32 %v2631, %v2627
    %s2634 = scalar_lea.vmem [#allocation6], 64
    %v2635 = vld [vmem:[%s2634] sm:$0xf]
    %v2636 = vld [vmem:[%s2634 + $0x4] sm:$0xf]
    %v2637 = vld [vmem:[%s2634 + $0x8] sm:$0xf]
    %v2638 = vld [vmem:[%s2634 + $0xc] sm:$0xf]
    %v2639 = vld [vmem:[%s2634 + $0x10] sm:$0xf]
    %v2640 = vld [vmem:[%s2634 + $0x14] sm:$0xf]
    %v2641 = vld [vmem:[%s2634 + $0x18] sm:$0xf]
    %v2642 = vld [vmem:[%s2634 + $0x1c] sm:$0xf]
    %v2643 = vld [vmem:[%s2634 + $0x20] sm:$0xf]
    %v2644 = vld [vmem:[%s2634 + $0x24] sm:$0xf]
    %v2645 = vld [vmem:[%s2634 + $0x28] sm:$0xf]
    %v2646 = vld [vmem:[%s2634 + $0x2c] sm:$0xf]
    %v2647 = vld [vmem:[%s2634 + $0x30] sm:$0xf]
    %v2648 = vld [vmem:[%s2634 + $0x34] sm:$0xf]
    %v2649 = vld [vmem:[%s2634 + $0x38] sm:$0xf]
    %v2650 = vld [vmem:[%s2634 + $0x3c] sm:$0xf]
    %s2651 = scalar_lea.vmem %s9, 1
    %v2652 = vld [vmem:[%s2651] sm:$0x1]
    %v2654 = vlaneseq
    %v2655 = vshrl.u32 %v2654, 7
    %v2656 = vsub.s32 0, %v2655
    %v2657 = vrot.slane %v2652, %v2656
    %v2675 = vunpack.c.l.b16 %v2635
    %v2676 = vunpack.c.l.b16 %v2636
    %v2677 = vunpack.c.l.b16 %v2637
    %v2678 = vunpack.c.l.b16 %v2638
    %v2679 = vunpack.c.l.b16 %v2639
    %v2680 = vunpack.c.l.b16 %v2640
    %v2681 = vunpack.c.l.b16 %v2641
    %v2682 = vunpack.c.l.b16 %v2642
    %v2683 = vunpack.c.l.b16 %v2643
    %v2684 = vunpack.c.l.b16 %v2644
    %v2685 = vunpack.c.l.b16 %v2645
    %v2686 = vunpack.c.l.b16 %v2646
    %v2687 = vunpack.c.l.b16 %v2647
    %v2688 = vunpack.c.l.b16 %v2648
    %v2689 = vunpack.c.l.b16 %v2649
    %v2690 = vunpack.c.l.b16 %v2650
    %v2691 = vpack.c.b16 %v2676, %v2675
    %v2692 = vpack.c.b16 %v2678, %v2677
    %v2693 = vpack.c.b16 %v2680, %v2679
    %v2694 = vpack.c.b16 %v2682, %v2681
    %v2695 = vpack.c.b16 %v2684, %v2683
    %v2696 = vpack.c.b16 %v2686, %v2685
    %v2697 = vpack.c.b16 %v2688, %v2687
    %v2698 = vpack.c.b16 %v2690, %v2689
    %2707 = vmatprep.subr.bf16.mxu0 0
    %2708 = vmatpush1.bf16.msra.mxu0 %v2691
    %2709 = vmatprep.subr.bf16.mxu0 0
    %2710 = vmatpush1.bf16.msra.mxu0 %v2692
    %2711 = vmatprep.subr.bf16.mxu0 0
    %2712 = vmatpush1.bf16.msra.mxu0 %v2693
    %2713 = vmatprep.subr.bf16.mxu0 0
    %2714 = vmatpush1.bf16.msra.mxu0 %v2694
    %2715 = vmatprep.subr.bf16.mxu0 0
    %2716 = vmatpush1.bf16.msra.mxu0 %v2695
    %2717 = vmatprep.subr.bf16.mxu0 0
    %2718 = vmatpush1.bf16.msra.mxu0 %v2696
    %2719 = vmatprep.subr.bf16.mxu0 0
    %2720 = vmatpush1.bf16.msra.mxu0 %v2697
    %2721 = vmatprep.subr.bf16.mxu0 0
    %2722 = vmatpush1.bf16.msra.mxu0 %v2698
    %2723 = vmatprep.subr.bf16.mxu0 0
    %2724 = vmatpush1.bf16.msra.mxu0 0
    %2725 = vmatprep.subr.bf16.mxu0 0
    %2726 = vmatpush1.bf16.msra.mxu0 0
    %2727 = vmatprep.subr.bf16.mxu0 0
    %2728 = vmatpush1.bf16.msra.mxu0 0
    %2729 = vmatprep.subr.bf16.mxu0 0
    %2730 = vmatpush1.bf16.msra.mxu0 0
    %2731 = vmatprep.subr.bf16.mxu0 0
    %2732 = vmatpush1.bf16.msra.mxu0 0
    %2733 = vmatprep.subr.bf16.mxu0 0
    %2734 = vmatpush1.bf16.msra.mxu0 0
    %2735 = vmatprep.subr.bf16.mxu0 0
    %2736 = vmatpush1.bf16.msra.mxu0 0
    %2737 = vmatprep.subr.bf16.mxu0 0
    %2738 = vmatpush1.bf16.msra.mxu0 0
    %2739 = vmatprep.mubr.bf16.mxu0 0
    %2740 = vmatmul.mubr.bf16.gmra.mrb[0].mxu0 %v756
    %v2741 = vpop.f32.mrb[0].mxu0
    %v2742 = vadd.f32 %v2657, %v2741
    %v2743 = vpop.f32.mrb[0].mxu0
    %v2744 = vpop.f32.mrb[0].mxu0
    %v2745 = vadd.f32 %v2657, %v2744
    %v2746 = vpop.f32.mrb[0].mxu0
    %2747 = vmatprep.mubr.bf16.mxu0 0
    %2748 = vmatmul.mubr.bf16.gmra.mrb[0].mxu0 %v757
    %v2749 = vpop.f32.mrb[0].mxu0
    %v2750 = vadd.f32 %v2657, %v2749
    %v2751 = vpop.f32.mrb[0].mxu0
    %v2752 = vpop.f32.mrb[0].mxu0
    %v2753 = vadd.f32 %v2657, %v2752
    %v2754 = vpop.f32.mrb[0].mxu0
    %2755 = vmatprep.mubr.bf16.mxu0 0
    %2756 = vmatmul.mubr.bf16.gmra.mrb[0].mxu0 %v758
    %v2757 = vpop.f32.mrb[0].mxu0
    %v2758 = vadd.f32 %v2657, %v2757
    %v2759 = vpop.f32.mrb[0].mxu0
    %v2760 = vpop.f32.mrb[0].mxu0
    %v2761 = vadd.f32 %v2657, %v2760
    %v2762 = vpop.f32.mrb[0].mxu0
    %2763 = vmatprep.mubr.bf16.mxu0 0
    %2764 = vmatmul.mubr.bf16.gmra.mrb[0].mxu0 %v759
    %v2765 = vpop.f32.mrb[0].mxu0
    %v2766 = vadd.f32 %v2657, %v2765
    %v2767 = vpop.f32.mrb[0].mxu0
    %v2768 = vpop.f32.mrb[0].mxu0
    %v2769 = vadd.f32 %v2657, %v2768
    %v2770 = vpop.f32.mrb[0].mxu0
    %2771 = vmatprep.mubr.bf16.mxu0 0
    %2772 = vmatmul.mubr.bf16.gmra.mrb[0].mxu0 %v760
    %v2773 = vpop.f32.mrb[0].mxu0
    %v2774 = vadd.f32 %v2657, %v2773
    %v2775 = vpop.f32.mrb[0].mxu0
    %v2776 = vpop.f32.mrb[0].mxu0
    %v2777 = vadd.f32 %v2657, %v2776
    %v2778 = vpop.f32.mrb[0].mxu0
    %2779 = vmatprep.mubr.bf16.mxu0 0
    %2780 = vmatmul.mubr.bf16.gmra.mrb[0].mxu0 %v761
    %v2781 = vpop.f32.mrb[0].mxu0
    %v2782 = vadd.f32 %v2657, %v2781
    %v2783 = vpop.f32.mrb[0].mxu0
    %v2784 = vpop.f32.mrb[0].mxu0
    %v2785 = vadd.f32 %v2657, %v2784
    %v2786 = vpop.f32.mrb[0].mxu0
    %2787 = vmatprep.mubr.bf16.mxu0 0
    %2788 = vmatmul.mubr.bf16.gmra.mrb[0].mxu0 %v762
    %v2789 = vpop.f32.mrb[0].mxu0
    %v2790 = vadd.f32 %v2657, %v2789
    %v2791 = vpop.f32.mrb[0].mxu0
    %v2792 = vpop.f32.mrb[0].mxu0
    %v2793 = vadd.f32 %v2657, %v2792
    %v2794 = vpop.f32.mrb[0].mxu0
    %2795 = vmatprep.mubr.bf16.mxu0 0
    %2796 = vmatmul.mubr.bf16.gmra.mrb[0].mxu0 %v763
    %v2797 = vpop.f32.mrb[0].mxu0
    %v2798 = vadd.f32 %v2657, %v2797
    %v2799 = vpop.f32.mrb[0].mxu0
    %v2800 = vpop.f32.mrb[0].mxu0
    %v2801 = vadd.f32 %v2657, %v2800
    %v2802 = vpop.f32.mrb[0].mxu0
    %2803 = vmatprep.mubr.bf16.mxu0 0
    %2804 = vmatmul.mubr.bf16.gmra.mrb[0].mxu0 %v764
    %v2805 = vpop.f32.mrb[0].mxu0
    %v2806 = vadd.f32 %v2657, %v2805
    %v2807 = vpop.f32.mrb[0].mxu0
    %v2808 = vpop.f32.mrb[0].mxu0
    %v2809 = vadd.f32 %v2657, %v2808
    %v2810 = vpop.f32.mrb[0].mxu0
    %2811 = vmatprep.mubr.bf16.mxu0 0
    %2812 = vmatmul.mubr.bf16.gmra.mrb[0].mxu0 %v765
    %v2813 = vpop.f32.mrb[0].mxu0
    %v2814 = vadd.f32 %v2657, %v2813
    %v2815 = vpop.f32.mrb[0].mxu0
    %v2816 = vpop.f32.mrb[0].mxu0
    %v2817 = vadd.f32 %v2657, %v2816
    %v2818 = vpop.f32.mrb[0].mxu0
    %2819 = vmatprep.mubr.bf16.mxu0 0
    %2820 = vmatmul.mubr.bf16.gmra.mrb[0].mxu0 %v766
    %v2821 = vpop.f32.mrb[0].mxu0
    %v2822 = vadd.f32 %v2657, %v2821
    %v2823 = vpop.f32.mrb[0].mxu0
    %v2824 = vpop.f32.mrb[0].mxu0
    %v2825 = vadd.f32 %v2657, %v2824
    %v2826 = vpop.f32.mrb[0].mxu0
    %2827 = vmatprep.mubr.bf16.mxu0 0
    %2828 = vmatmul.mubr.bf16.gmra.mrb[0].mxu0 %v767
    %v2829 = vpop.f32.mrb[0].mxu0
    %v2830 = vadd.f32 %v2657, %v2829
    %v2831 = vpop.f32.mrb[0].mxu0
    %v2832 = vpop.f32.mrb[0].mxu0
    %v2833 = vadd.f32 %v2657, %v2832
    %v2834 = vpop.f32.mrb[0].mxu0
    %2835 = vmatprep.mubr.bf16.mxu0 0
    %2836 = vmatmul.mubr.bf16.gmra.mrb[0].mxu0 %v768
    %v2837 = vpop.f32.mrb[0].mxu0
    %v2838 = vadd.f32 %v2657, %v2837
    %v2839 = vpop.f32.mrb[0].mxu0
    %v2840 = vpop.f32.mrb[0].mxu0
    %v2841 = vadd.f32 %v2657, %v2840
    %v2842 = vpop.f32.mrb[0].mxu0
    %2843 = vmatprep.mubr.bf16.mxu0 0
    %2844 = vmatmul.mubr.bf16.gmra.mrb[0].mxu0 %v769
    %v2845 = vpop.f32.mrb[0].mxu0
    %v2846 = vadd.f32 %v2657, %v2845
    %v2847 = vpop.f32.mrb[0].mxu0
    %v2848 = vpop.f32.mrb[0].mxu0
    %v2849 = vadd.f32 %v2657, %v2848
    %v2850 = vpop.f32.mrb[0].mxu0
    %2851 = vmatprep.mubr.bf16.mxu0 0
    %2852 = vmatmul.mubr.bf16.gmra.mrb[0].mxu0 %v770
    %v2853 = vpop.f32.mrb[0].mxu0
    %v2854 = vadd.f32 %v2657, %v2853
    %v2855 = vpop.f32.mrb[0].mxu0
    %v2856 = vpop.f32.mrb[0].mxu0
    %v2857 = vadd.f32 %v2657, %v2856
    %v2858 = vpop.f32.mrb[0].mxu0
    %2859 = vmatprep.mubr.bf16.mxu0 0
    %2860 = vmatmul.mubr.bf16.gmra.mrb[0].mxu0 %v771
    %v2861 = vpop.f32.mrb[0].mxu0
    %v2862 = vadd.f32 %v2657, %v2861
    %v2863 = vpop.f32.mrb[0].mxu0
    %v2864 = vpop.f32.mrb[0].mxu0
    %v2865 = vadd.f32 %v2657, %v2864
    %v2866 = vpop.f32.mrb[0].mxu0
    %2867 = vdwg.mxu0
    %v2868 = vmax.f32 %v2742, 0.0
    %v2869 = vmax.f32 %v2745, 0.0
    %v2870 = vmax.f32 %v2750, 0.0
    %v2871 = vmax.f32 %v2753, 0.0
    %v2872 = vmax.f32 %v2758, 0.0
    %v2873 = vmax.f32 %v2761, 0.0
    %v2874 = vmax.f32 %v2766, 0.0
    %v2875 = vmax.f32 %v2769, 0.0
    %v2876 = vmax.f32 %v2774, 0.0
    %v2877 = vmax.f32 %v2777, 0.0
    %v2878 = vmax.f32 %v2782, 0.0
    %v2879 = vmax.f32 %v2785, 0.0
    %v2880 = vmax.f32 %v2790, 0.0
    %v2881 = vmax.f32 %v2793, 0.0
    %v2882 = vmax.f32 %v2798, 0.0
    %v2883 = vmax.f32 %v2801, 0.0
    %v2884 = vmax.f32 %v2806, 0.0
    %v2885 = vmax.f32 %v2809, 0.0
    %v2886 = vmax.f32 %v2814, 0.0
    %v2887 = vmax.f32 %v2817, 0.0
    %v2888 = vmax.f32 %v2822, 0.0
    %v2889 = vmax.f32 %v2825, 0.0
    %v2890 = vmax.f32 %v2830, 0.0
    %v2891 = vmax.f32 %v2833, 0.0
    %v2892 = vmax.f32 %v2838, 0.0
    %v2893 = vmax.f32 %v2841, 0.0
    %v2894 = vmax.f32 %v2846, 0.0
    %v2895 = vmax.f32 %v2849, 0.0
    %v2896 = vmax.f32 %v2854, 0.0
    %v2897 = vmax.f32 %v2857, 0.0
    %v2898 = vmax.f32 %v2862, 0.0
    %v2899 = vmax.f32 %v2865, 0.0
    %v2900 = vand.u32 2147483647, %v2742
    %v2901 = vand.u32 2147483647, %v2745
    %v2902 = vand.u32 2147483647, %v2750
    %v2903 = vand.u32 2147483647, %v2753
    %v2904 = vand.u32 2147483647, %v2758
    %v2905 = vand.u32 2147483647, %v2761
    %v2906 = vand.u32 2147483647, %v2766
    %v2907 = vand.u32 2147483647, %v2769
    %v2908 = vand.u32 2147483647, %v2774
    %v2909 = vand.u32 2147483647, %v2777
    %v2910 = vand.u32 2147483647, %v2782
    %v2911 = vand.u32 2147483647, %v2785
    %v2912 = vand.u32 2147483647, %v2790
    %v2913 = vand.u32 2147483647, %v2793
    %v2914 = vand.u32 2147483647, %v2798
    %v2915 = vand.u32 2147483647, %v2801
    %v2916 = vand.u32 2147483647, %v2806
    %v2917 = vand.u32 2147483647, %v2809
    %v2918 = vand.u32 2147483647, %v2814
    %v2919 = vand.u32 2147483647, %v2817
    %v2920 = vand.u32 2147483647, %v2822
    %v2921 = vand.u32 2147483647, %v2825
    %v2922 = vand.u32 2147483647, %v2830
    %v2923 = vand.u32 2147483647, %v2833
    %v2924 = vand.u32 2147483647, %v2838
    %v2925 = vand.u32 2147483647, %v2841
    %v2926 = vand.u32 2147483647, %v2846
    %v2927 = vand.u32 2147483647, %v2849
    %v2928 = vand.u32 2147483647, %v2854
    %v2929 = vand.u32 2147483647, %v2857
    %v2930 = vand.u32 2147483647, %v2862
    %v2931 = vand.u32 2147483647, %v2865
    %v2932 = vsub.f32 0.0, %v2900
    %v2933 = vsub.f32 0.0, %v2901
    %v2934 = vsub.f32 0.0, %v2902
    %v2935 = vsub.f32 0.0, %v2903
    %v2936 = vsub.f32 0.0, %v2904
    %v2937 = vsub.f32 0.0, %v2905
    %v2938 = vsub.f32 0.0, %v2906
    %v2939 = vsub.f32 0.0, %v2907
    %v2940 = vsub.f32 0.0, %v2908
    %v2941 = vsub.f32 0.0, %v2909
    %v2942 = vsub.f32 0.0, %v2910
    %v2943 = vsub.f32 0.0, %v2911
    %v2944 = vsub.f32 0.0, %v2912
    %v2945 = vsub.f32 0.0, %v2913
    %v2946 = vsub.f32 0.0, %v2914
    %v2947 = vsub.f32 0.0, %v2915
    %v2948 = vsub.f32 0.0, %v2916
    %v2949 = vsub.f32 0.0, %v2917
    %v2950 = vsub.f32 0.0, %v2918
    %v2951 = vsub.f32 0.0, %v2919
    %v2952 = vsub.f32 0.0, %v2920
    %v2953 = vsub.f32 0.0, %v2921
    %v2954 = vsub.f32 0.0, %v2922
    %v2955 = vsub.f32 0.0, %v2923
    %v2956 = vsub.f32 0.0, %v2924
    %v2957 = vsub.f32 0.0, %v2925
    %v2958 = vsub.f32 0.0, %v2926
    %v2959 = vsub.f32 0.0, %v2927
    %v2960 = vsub.f32 0.0, %v2928
    %v2961 = vsub.f32 0.0, %v2929
    %v2962 = vsub.f32 0.0, %v2930
    %v2963 = vsub.f32 0.0, %v2931
    %v2964 = vmul.f32 %v2932, 1.442695
    %v2965 = vpow.pop %v2964
    %v2966 = vmul.f32 %v2933, 1.442695
    %v2967 = vpow.pop %v2966
    %v2968 = vmul.f32 %v2934, 1.442695
    %v2969 = vpow.pop %v2968
    %v2970 = vmul.f32 %v2935, 1.442695
    %v2971 = vpow.pop %v2970
    %v2972 = vmul.f32 %v2936, 1.442695
    %v2973 = vpow.pop %v2972
    %v2974 = vmul.f32 %v2937, 1.442695
    %v2975 = vpow.pop %v2974
    %v2976 = vmul.f32 %v2938, 1.442695
    %v2977 = vpow.pop %v2976
    %v2978 = vmul.f32 %v2939, 1.442695
    %v2979 = vpow.pop %v2978
    %v2980 = vmul.f32 %v2940, 1.442695
    %v2981 = vpow.pop %v2980
    %v2982 = vmul.f32 %v2941, 1.442695
    %v2983 = vpow.pop %v2982
    %v2984 = vmul.f32 %v2942, 1.442695
    %v2985 = vpow.pop %v2984
    %v2986 = vmul.f32 %v2943, 1.442695
    %v2987 = vpow.pop %v2986
    %v2988 = vmul.f32 %v2944, 1.442695
    %v2989 = vpow.pop %v2988
    %v2990 = vmul.f32 %v2945, 1.442695
    %v2991 = vpow.pop %v2990
    %v2992 = vmul.f32 %v2946, 1.442695
    %v2993 = vpow.pop %v2992
    %v2994 = vmul.f32 %v2947, 1.442695
    %v2995 = vpow.pop %v2994
    %v2996 = vmul.f32 %v2948, 1.442695
    %v2997 = vpow.pop %v2996
    %v2998 = vmul.f32 %v2949, 1.442695
    %v2999 = vpow.pop %v2998
    %v3000 = vmul.f32 %v2950, 1.442695
    %v3001 = vpow.pop %v3000
    %v3002 = vmul.f32 %v2951, 1.442695
    %v3003 = vpow.pop %v3002
    %v3004 = vmul.f32 %v2952, 1.442695
    %v3005 = vpow.pop %v3004
    %v3006 = vmul.f32 %v2953, 1.442695
    %v3007 = vpow.pop %v3006
    %v3008 = vmul.f32 %v2954, 1.442695
    %v3009 = vpow.pop %v3008
    %v3010 = vmul.f32 %v2955, 1.442695
    %v3011 = vpow.pop %v3010
    %v3012 = vmul.f32 %v2956, 1.442695
    %v3013 = vpow.pop %v3012
    %v3014 = vmul.f32 %v2957, 1.442695
    %v3015 = vpow.pop %v3014
    %v3016 = vmul.f32 %v2958, 1.442695
    %v3017 = vpow.pop %v3016
    %v3018 = vmul.f32 %v2959, 1.442695
    %v3019 = vpow.pop %v3018
    %v3020 = vmul.f32 %v2960, 1.442695
    %v3021 = vpow.pop %v3020
    %v3022 = vmul.f32 %v2961, 1.442695
    %v3023 = vpow.pop %v3022
    %v3024 = vmul.f32 %v2962, 1.442695
    %v3025 = vpow.pop %v3024
    %v3026 = vmul.f32 %v2963, 1.442695
    %v3027 = vpow.pop %v3026
    %v3028 = vadd.f32 %v2965, 1.0
    %v3029 = vadd.f32 %v2967, 1.0
    %v3030 = vadd.f32 %v2969, 1.0
    %v3031 = vadd.f32 %v2971, 1.0
    %v3032 = vadd.f32 %v2973, 1.0
    %v3033 = vadd.f32 %v2975, 1.0
    %v3034 = vadd.f32 %v2977, 1.0
    %v3035 = vadd.f32 %v2979, 1.0
    %v3036 = vadd.f32 %v2981, 1.0
    %v3037 = vadd.f32 %v2983, 1.0
    %v3038 = vadd.f32 %v2985, 1.0
    %v3039 = vadd.f32 %v2987, 1.0
    %v3040 = vadd.f32 %v2989, 1.0
    %v3041 = vadd.f32 %v2991, 1.0
    %v3042 = vadd.f32 %v2993, 1.0
    %v3043 = vadd.f32 %v2995, 1.0
    %v3044 = vadd.f32 %v2997, 1.0
    %v3045 = vadd.f32 %v2999, 1.0
    %v3046 = vadd.f32 %v3001, 1.0
    %v3047 = vadd.f32 %v3003, 1.0
    %v3048 = vadd.f32 %v3005, 1.0
    %v3049 = vadd.f32 %v3007, 1.0
    %v3050 = vadd.f32 %v3009, 1.0
    %v3051 = vadd.f32 %v3011, 1.0
    %v3052 = vadd.f32 %v3013, 1.0
    %v3053 = vadd.f32 %v3015, 1.0
    %v3054 = vadd.f32 %v3017, 1.0
    %v3055 = vadd.f32 %v3019, 1.0
    %v3056 = vadd.f32 %v3021, 1.0
    %v3057 = vadd.f32 %v3023, 1.0
    %v3058 = vadd.f32 %v3025, 1.0
    %v3059 = vadd.f32 %v3027, 1.0
    %v3060 = vlog2.pop %v3028
    %v3061 = vmul.f32 %v3060, 0.6931472
    %v3062 = vlog2.pop %v3029
    %v3063 = vmul.f32 %v3062, 0.6931472
    %v3064 = vlog2.pop %v3030
    %v3065 = vmul.f32 %v3064, 0.6931472
    %v3066 = vlog2.pop %v3031
    %v3067 = vmul.f32 %v3066, 0.6931472
    %v3068 = vlog2.pop %v3032
    %v3069 = vmul.f32 %v3068, 0.6931472
    %v3070 = vlog2.pop %v3033
    %v3071 = vmul.f32 %v3070, 0.6931472
    %v3072 = vlog2.pop %v3034
    %v3073 = vmul.f32 %v3072, 0.6931472
    %v3074 = vlog2.pop %v3035
    %v3075 = vmul.f32 %v3074, 0.6931472
    %v3076 = vlog2.pop %v3036
    %v3077 = vmul.f32 %v3076, 0.6931472
    %v3078 = vlog2.pop %v3037
    %v3079 = vmul.f32 %v3078, 0.6931472
    %v3080 = vlog2.pop %v3038
    %v3081 = vmul.f32 %v3080, 0.6931472
    %v3082 = vlog2.pop %v3039
    %v3083 = vmul.f32 %v3082, 0.6931472
    %v3084 = vlog2.pop %v3040
    %v3085 = vmul.f32 %v3084, 0.6931472
    %v3086 = vlog2.pop %v3041
    %v3087 = vmul.f32 %v3086, 0.6931472
    %v3088 = vlog2.pop %v3042
    %v3089 = vmul.f32 %v3088, 0.6931472
    %v3090 = vlog2.pop %v3043
    %v3091 = vmul.f32 %v3090, 0.6931472
    %v3092 = vlog2.pop %v3044
    %v3093 = vmul.f32 %v3092, 0.6931472
    %v3094 = vlog2.pop %v3045
    %v3095 = vmul.f32 %v3094, 0.6931472
    %v3096 = vlog2.pop %v3046
    %v3097 = vmul.f32 %v3096, 0.6931472
    %v3098 = vlog2.pop %v3047
    %v3099 = vmul.f32 %v3098, 0.6931472
    %v3100 = vlog2.pop %v3048
    %v3101 = vmul.f32 %v3100, 0.6931472
    %v3102 = vlog2.pop %v3049
    %v3103 = vmul.f32 %v3102, 0.6931472
    %v3104 = vlog2.pop %v3050
    %v3105 = vmul.f32 %v3104, 0.6931472
    %v3106 = vlog2.pop %v3051
    %v3107 = vmul.f32 %v3106, 0.6931472
    %v3108 = vlog2.pop %v3052
    %v3109 = vmul.f32 %v3108, 0.6931472
    %v3110 = vlog2.pop %v3053
    %v3111 = vmul.f32 %v3110, 0.6931472
    %v3112 = vlog2.pop %v3054
    %v3113 = vmul.f32 %v3112, 0.6931472
    %v3114 = vlog2.pop %v3055
    %v3115 = vmul.f32 %v3114, 0.6931472
    %v3116 = vlog2.pop %v3056
    %v3117 = vmul.f32 %v3116, 0.6931472
    %v3118 = vlog2.pop %v3057
    %v3119 = vmul.f32 %v3118, 0.6931472
    %v3120 = vlog2.pop %v3058
    %v3121 = vmul.f32 %v3120, 0.6931472
    %v3122 = vlog2.pop %v3059
    %v3123 = vmul.f32 %v3122, 0.6931472
    %v3124 = vadd.f32 %v2868, %v3061
    %v3125 = vadd.f32 %v2869, %v3063
    %v3126 = vadd.f32 %v2870, %v3065
    %v3127 = vadd.f32 %v2871, %v3067
    %v3128 = vadd.f32 %v2872, %v3069
    %v3129 = vadd.f32 %v2873, %v3071
    %v3130 = vadd.f32 %v2874, %v3073
    %v3131 = vadd.f32 %v2875, %v3075
    %v3132 = vadd.f32 %v2876, %v3077
    %v3133 = vadd.f32 %v2877, %v3079
    %v3134 = vadd.f32 %v2878, %v3081
    %v3135 = vadd.f32 %v2879, %v3083
    %v3136 = vadd.f32 %v2880, %v3085
    %v3137 = vadd.f32 %v2881, %v3087
    %v3138 = vadd.f32 %v2882, %v3089
    %v3139 = vadd.f32 %v2883, %v3091
    %v3140 = vadd.f32 %v2884, %v3093
    %v3141 = vadd.f32 %v2885, %v3095
    %v3142 = vadd.f32 %v2886, %v3097
    %v3143 = vadd.f32 %v2887, %v3099
    %v3144 = vadd.f32 %v2888, %v3101
    %v3145 = vadd.f32 %v2889, %v3103
    %v3146 = vadd.f32 %v2890, %v3105
    %v3147 = vadd.f32 %v2891, %v3107
    %v3148 = vadd.f32 %v2892, %v3109
    %v3149 = vadd.f32 %v2893, %v3111
    %v3150 = vadd.f32 %v2894, %v3113
    %v3151 = vadd.f32 %v2895, %v3115
    %v3152 = vadd.f32 %v2896, %v3117
    %v3153 = vadd.f32 %v2897, %v3119
    %v3154 = vadd.f32 %v2898, %v3121
    %v3155 = vadd.f32 %v2899, %v3123
    %v3156 = vsub.f32 %v3124, 0.6931472
    %v3157 = vsub.f32 %v3125, 0.6931472
    %v3158 = vsub.f32 %v3126, 0.6931472
    %v3159 = vsub.f32 %v3127, 0.6931472
    %v3160 = vsub.f32 %v3128, 0.6931472
    %v3161 = vsub.f32 %v3129, 0.6931472
    %v3162 = vsub.f32 %v3130, 0.6931472
    %v3163 = vsub.f32 %v3131, 0.6931472
    %v3164 = vsub.f32 %v3132, 0.6931472
    %v3165 = vsub.f32 %v3133, 0.6931472
    %v3166 = vsub.f32 %v3134, 0.6931472
    %v3167 = vsub.f32 %v3135, 0.6931472
    %v3168 = vsub.f32 %v3136, 0.6931472
    %v3169 = vsub.f32 %v3137, 0.6931472
    %v3170 = vsub.f32 %v3138, 0.6931472
    %v3171 = vsub.f32 %v3139, 0.6931472
    %v3172 = vsub.f32 %v3140, 0.6931472
    %v3173 = vsub.f32 %v3141, 0.6931472
    %v3174 = vsub.f32 %v3142, 0.6931472
    %v3175 = vsub.f32 %v3143, 0.6931472
    %v3176 = vsub.f32 %v3144, 0.6931472
    %v3177 = vsub.f32 %v3145, 0.6931472
    %v3178 = vsub.f32 %v3146, 0.6931472
    %v3179 = vsub.f32 %v3147, 0.6931472
    %v3180 = vsub.f32 %v3148, 0.6931472
    %v3181 = vsub.f32 %v3149, 0.6931472
    %v3182 = vsub.f32 %v3150, 0.6931472
    %v3183 = vsub.f32 %v3151, 0.6931472
    %v3184 = vsub.f32 %v3152, 0.6931472
    %v3185 = vsub.f32 %v3153, 0.6931472
    %v3186 = vsub.f32 %v3154, 0.6931472
    %v3187 = vsub.f32 %v3155, 0.6931472
    %v3188 = vpack.c.bf16 %v3157, %v3156
    %v3189 = vpack.c.bf16 %v3159, %v3158
    %v3190 = vpack.c.bf16 %v3161, %v3160
    %v3191 = vpack.c.bf16 %v3163, %v3162
    %v3192 = vpack.c.bf16 %v3165, %v3164
    %v3193 = vpack.c.bf16 %v3167, %v3166
    %v3194 = vpack.c.bf16 %v3169, %v3168
    %v3195 = vpack.c.bf16 %v3171, %v3170
    %v3196 = vpack.c.bf16 %v3173, %v3172
    %v3197 = vpack.c.bf16 %v3175, %v3174
    %v3198 = vpack.c.bf16 %v3177, %v3176
    %v3199 = vpack.c.bf16 %v3179, %v3178
    %v3200 = vpack.c.bf16 %v3181, %v3180
    %v3201 = vpack.c.bf16 %v3183, %v3182
    %v3202 = vpack.c.bf16 %v3185, %v3184
    %v3203 = vpack.c.bf16 %v3187, %v3186
    %s3204 = scalar_lea.vmem [#allocation7], 64
    %v3205 = vld [vmem:[%s3204] sm:$0xf]
    %v3206 = vld [vmem:[%s3204 + $0x4] sm:$0xf]
    %v3207 = vld [vmem:[%s3204 + $0x8] sm:$0xf]
    %v3208 = vld [vmem:[%s3204 + $0xc] sm:$0xf]
    %v3209 = vld [vmem:[%s3204 + $0x10] sm:$0xf]
    %v3210 = vld [vmem:[%s3204 + $0x14] sm:$0xf]
    %v3211 = vld [vmem:[%s3204 + $0x18] sm:$0xf]
    %v3212 = vld [vmem:[%s3204 + $0x1c] sm:$0xf]
    %v3213 = vld [vmem:[%s3204 + $0x20] sm:$0xf]
    %v3214 = vld [vmem:[%s3204 + $0x24] sm:$0xf]
    %v3215 = vld [vmem:[%s3204 + $0x28] sm:$0xf]
    %v3216 = vld [vmem:[%s3204 + $0x2c] sm:$0xf]
    %v3217 = vld [vmem:[%s3204 + $0x30] sm:$0xf]
    %v3218 = vld [vmem:[%s3204 + $0x34] sm:$0xf]
    %v3219 = vld [vmem:[%s3204 + $0x38] sm:$0xf]
    %v3220 = vld [vmem:[%s3204 + $0x3c] sm:$0xf]
    %s3221 = scalar_lea.vmem %s11, 1
    %v3222 = vld [vmem:[%s3221] sm:$0x1]
    %v3224 = vlaneseq
    %v3225 = vshrl.u32 %v3224, 7
    %v3226 = vsub.s32 0, %v3225
    %v3227 = vrot.slane %v3222, %v3226
    %v3245 = vunpack.c.l.b16 %v3205
    %v3246 = vunpack.c.l.b16 %v3206
    %v3247 = vunpack.c.l.b16 %v3207
    %v3248 = vunpack.c.l.b16 %v3208
    %v3249 = vunpack.c.l.b16 %v3209
    %v3250 = vunpack.c.l.b16 %v3210
    %v3251 = vunpack.c.l.b16 %v3211
    %v3252 = vunpack.c.l.b16 %v3212
    %v3253 = vunpack.c.l.b16 %v3213
    %v3254 = vunpack.c.l.b16 %v3214
    %v3255 = vunpack.c.l.b16 %v3215
    %v3256 = vunpack.c.l.b16 %v3216
    %v3257 = vunpack.c.l.b16 %v3217
    %v3258 = vunpack.c.l.b16 %v3218
    %v3259 = vunpack.c.l.b16 %v3219
    %v3260 = vunpack.c.l.b16 %v3220
    %v3261 = vpack.c.b16 %v3246, %v3245
    %v3262 = vpack.c.b16 %v3248, %v3247
    %v3263 = vpack.c.b16 %v3250, %v3249
    %v3264 = vpack.c.b16 %v3252, %v3251
    %v3265 = vpack.c.b16 %v3254, %v3253
    %v3266 = vpack.c.b16 %v3256, %v3255
    %v3267 = vpack.c.b16 %v3258, %v3257
    %v3268 = vpack.c.b16 %v3260, %v3259
    %3277 = vmatprep.subr.bf16.mxu0 0
    %3278 = vmatpush1.bf16.msra.mxu0 %v3261
    %3279 = vmatprep.subr.bf16.mxu0 0
    %3280 = vmatpush1.bf16.msra.mxu0 %v3262
    %3281 = vmatprep.subr.bf16.mxu0 0
    %3282 = vmatpush1.bf16.msra.mxu0 %v3263
    %3283 = vmatprep.subr.bf16.mxu0 0
    %3284 = vmatpush1.bf16.msra.mxu0 %v3264
    %3285 = vmatprep.subr.bf16.mxu0 0
    %3286 = vmatpush1.bf16.msra.mxu0 %v3265
    %3287 = vmatprep.subr.bf16.mxu0 0
    %3288 = vmatpush1.bf16.msra.mxu0 %v3266
    %3289 = vmatprep.subr.bf16.mxu0 0
    %3290 = vmatpush1.bf16.msra.mxu0 %v3267
    %3291 = vmatprep.subr.bf16.mxu0 0
    %3292 = vmatpush1.bf16.msra.mxu0 %v3268
    %3293 = vmatprep.subr.bf16.mxu0 0
    %3294 = vmatpush1.bf16.msra.mxu0 0
    %3295 = vmatprep.subr.bf16.mxu0 0
    %3296 = vmatpush1.bf16.msra.mxu0 0
    %3297 = vmatprep.subr.bf16.mxu0 0
    %3298 = vmatpush1.bf16.msra.mxu0 0
    %3299 = vmatprep.subr.bf16.mxu0 0
    %3300 = vmatpush1.bf16.msra.mxu0 0
    %3301 = vmatprep.subr.bf16.mxu0 0
    %3302 = vmatpush1.bf16.msra.mxu0 0
    %3303 = vmatprep.subr.bf16.mxu0 0
    %3304 = vmatpush1.bf16.msra.mxu0 0
    %3305 = vmatprep.subr.bf16.mxu0 0
    %3306 = vmatpush1.bf16.msra.mxu0 0
    %3307 = vmatprep.subr.bf16.mxu0 0
    %3308 = vmatpush1.bf16.msra.mxu0 0
    %3309 = vmatprep.mubr.bf16.mxu0 0
    %3310 = vmatmul.mubr.bf16.gmra.mrb[0].mxu0 %v3188
    %v3311 = vpop.f32.mrb[0].mxu0
    %v3312 = vadd.f32 %v3227, %v3311
    %v3313 = vpop.f32.mrb[0].mxu0
    %v3314 = vpop.f32.mrb[0].mxu0
    %v3315 = vadd.f32 %v3227, %v3314
    %v3316 = vpop.f32.mrb[0].mxu0
    %3317 = vmatprep.mubr.bf16.mxu0 0
    %3318 = vmatmul.mubr.bf16.gmra.mrb[0].mxu0 %v3189
    %v3319 = vpop.f32.mrb[0].mxu0
    %v3320 = vadd.f32 %v3227, %v3319
    %v3321 = vpop.f32.mrb[0].mxu0
    %v3322 = vpop.f32.mrb[0].mxu0
    %v3323 = vadd.f32 %v3227, %v3322
    %v3324 = vpop.f32.mrb[0].mxu0
    %3325 = vmatprep.mubr.bf16.mxu0 0
    %3326 = vmatmul.mubr.bf16.gmra.mrb[0].mxu0 %v3190
    %v3327 = vpop.f32.mrb[0].mxu0
    %v3328 = vadd.f32 %v3227, %v3327
    %v3329 = vpop.f32.mrb[0].mxu0
    %v3330 = vpop.f32.mrb[0].mxu0
    %v3331 = vadd.f32 %v3227, %v3330
    %v3332 = vpop.f32.mrb[0].mxu0
    %3333 = vmatprep.mubr.bf16.mxu0 0
    %3334 = vmatmul.mubr.bf16.gmra.mrb[0].mxu0 %v3191
    %v3335 = vpop.f32.mrb[0].mxu0
    %v3336 = vadd.f32 %v3227, %v3335
    %v3337 = vpop.f32.mrb[0].mxu0
    %v3338 = vpop.f32.mrb[0].mxu0
    %v3339 = vadd.f32 %v3227, %v3338
    %v3340 = vpop.f32.mrb[0].mxu0
    %3341 = vmatprep.mubr.bf16.mxu0 0
    %3342 = vmatmul.mubr.bf16.gmra.mrb[0].mxu0 %v3192
    %v3343 = vpop.f32.mrb[0].mxu0
    %v3344 = vadd.f32 %v3227, %v3343
    %v3345 = vpop.f32.mrb[0].mxu0
    %v3346 = vpop.f32.mrb[0].mxu0
    %v3347 = vadd.f32 %v3227, %v3346
    %v3348 = vpop.f32.mrb[0].mxu0
    %3349 = vmatprep.mubr.bf16.mxu0 0
    %3350 = vmatmul.mubr.bf16.gmra.mrb[0].mxu0 %v3193
    %v3351 = vpop.f32.mrb[0].mxu0
    %v3352 = vadd.f32 %v3227, %v3351
    %v3353 = vpop.f32.mrb[0].mxu0
    %v3354 = vpop.f32.mrb[0].mxu0
    %v3355 = vadd.f32 %v3227, %v3354
    %v3356 = vpop.f32.mrb[0].mxu0
    %3357 = vmatprep.mubr.bf16.mxu0 0
    %3358 = vmatmul.mubr.bf16.gmra.mrb[0].mxu0 %v3194
    %v3359 = vpop.f32.mrb[0].mxu0
    %v3360 = vadd.f32 %v3227, %v3359
    %v3361 = vpop.f32.mrb[0].mxu0
    %v3362 = vpop.f32.mrb[0].mxu0
    %v3363 = vadd.f32 %v3227, %v3362
    %v3364 = vpop.f32.mrb[0].mxu0
    %3365 = vmatprep.mubr.bf16.mxu0 0
    %3366 = vmatmul.mubr.bf16.gmra.mrb[0].mxu0 %v3195
    %v3367 = vpop.f32.mrb[0].mxu0
    %v3368 = vadd.f32 %v3227, %v3367
    %v3369 = vpop.f32.mrb[0].mxu0
    %v3370 = vpop.f32.mrb[0].mxu0
    %v3371 = vadd.f32 %v3227, %v3370
    %v3372 = vpop.f32.mrb[0].mxu0
    %3373 = vmatprep.mubr.bf16.mxu0 0
    %3374 = vmatmul.mubr.bf16.gmra.mrb[0].mxu0 %v3196
    %v3375 = vpop.f32.mrb[0].mxu0
    %v3376 = vadd.f32 %v3227, %v3375
    %v3377 = vpop.f32.mrb[0].mxu0
    %v3378 = vpop.f32.mrb[0].mxu0
    %v3379 = vadd.f32 %v3227, %v3378
    %v3380 = vpop.f32.mrb[0].mxu0
    %3381 = vmatprep.mubr.bf16.mxu0 0
    %3382 = vmatmul.mubr.bf16.gmra.mrb[0].mxu0 %v3197
    %v3383 = vpop.f32.mrb[0].mxu0
    %v3384 = vadd.f32 %v3227, %v3383
    %v3385 = vpop.f32.mrb[0].mxu0
    %v3386 = vpop.f32.mrb[0].mxu0
    %v3387 = vadd.f32 %v3227, %v3386
    %v3388 = vpop.f32.mrb[0].mxu0
    %3389 = vmatprep.mubr.bf16.mxu0 0
    %3390 = vmatmul.mubr.bf16.gmra.mrb[0].mxu0 %v3198
    %v3391 = vpop.f32.mrb[0].mxu0
    %v3392 = vadd.f32 %v3227, %v3391
    %v3393 = vpop.f32.mrb[0].mxu0
    %v3394 = vpop.f32.mrb[0].mxu0
    %v3395 = vadd.f32 %v3227, %v3394
    %v3396 = vpop.f32.mrb[0].mxu0
    %3397 = vmatprep.mubr.bf16.mxu0 0
    %3398 = vmatmul.mubr.bf16.gmra.mrb[0].mxu0 %v3199
    %v3399 = vpop.f32.mrb[0].mxu0
    %v3400 = vadd.f32 %v3227, %v3399
    %v3401 = vpop.f32.mrb[0].mxu0
    %v3402 = vpop.f32.mrb[0].mxu0
    %v3403 = vadd.f32 %v3227, %v3402
    %v3404 = vpop.f32.mrb[0].mxu0
    %3405 = vmatprep.mubr.bf16.mxu0 0
    %3406 = vmatmul.mubr.bf16.gmra.mrb[0].mxu0 %v3200
    %v3407 = vpop.f32.mrb[0].mxu0
    %v3408 = vadd.f32 %v3227, %v3407
    %v3409 = vpop.f32.mrb[0].mxu0
    %v3410 = vpop.f32.mrb[0].mxu0
    %v3411 = vadd.f32 %v3227, %v3410
    %v3412 = vpop.f32.mrb[0].mxu0
    %3413 = vmatprep.mubr.bf16.mxu0 0
    %3414 = vmatmul.mubr.bf16.gmra.mrb[0].mxu0 %v3201
    %v3415 = vpop.f32.mrb[0].mxu0
    %v3416 = vadd.f32 %v3227, %v3415
    %v3417 = vpop.f32.mrb[0].mxu0
    %v3418 = vpop.f32.mrb[0].mxu0
    %v3419 = vadd.f32 %v3227, %v3418
    %v3420 = vpop.f32.mrb[0].mxu0
    %3421 = vmatprep.mubr.bf16.mxu0 0
    %3422 = vmatmul.mubr.bf16.gmra.mrb[0].mxu0 %v3202
    %v3423 = vpop.f32.mrb[0].mxu0
    %v3424 = vadd.f32 %v3227, %v3423
    %v3425 = vpop.f32.mrb[0].mxu0
    %v3426 = vpop.f32.mrb[0].mxu0
    %v3427 = vadd.f32 %v3227, %v3426
    %v3428 = vpop.f32.mrb[0].mxu0
    %3429 = vmatprep.mubr.bf16.mxu0 0
    %3430 = vmatmul.mubr.bf16.gmra.mrb[0].mxu0 %v3203
    %v3431 = vpop.f32.mrb[0].mxu0
    %v3432 = vadd.f32 %v3227, %v3431
    %v3433 = vpop.f32.mrb[0].mxu0
    %v3434 = vpop.f32.mrb[0].mxu0
    %v3435 = vadd.f32 %v3227, %v3434
    %v3436 = vpop.f32.mrb[0].mxu0
    %3437 = vdwg.mxu0
    %v3438 = vmax.f32 %v3312, 0.0
    %v3439 = vmax.f32 %v3315, 0.0
    %v3440 = vmax.f32 %v3320, 0.0
    %v3441 = vmax.f32 %v3323, 0.0
    %v3442 = vmax.f32 %v3328, 0.0
    %v3443 = vmax.f32 %v3331, 0.0
    %v3444 = vmax.f32 %v3336, 0.0
    %v3445 = vmax.f32 %v3339, 0.0
    %v3446 = vmax.f32 %v3344, 0.0
    %v3447 = vmax.f32 %v3347, 0.0
    %v3448 = vmax.f32 %v3352, 0.0
    %v3449 = vmax.f32 %v3355, 0.0
    %v3450 = vmax.f32 %v3360, 0.0
    %v3451 = vmax.f32 %v3363, 0.0
    %v3452 = vmax.f32 %v3368, 0.0
    %v3453 = vmax.f32 %v3371, 0.0
    %v3454 = vmax.f32 %v3376, 0.0
    %v3455 = vmax.f32 %v3379, 0.0
    %v3456 = vmax.f32 %v3384, 0.0
    %v3457 = vmax.f32 %v3387, 0.0
    %v3458 = vmax.f32 %v3392, 0.0
    %v3459 = vmax.f32 %v3395, 0.0
    %v3460 = vmax.f32 %v3400, 0.0
    %v3461 = vmax.f32 %v3403, 0.0
    %v3462 = vmax.f32 %v3408, 0.0
    %v3463 = vmax.f32 %v3411, 0.0
    %v3464 = vmax.f32 %v3416, 0.0
    %v3465 = vmax.f32 %v3419, 0.0
    %v3466 = vmax.f32 %v3424, 0.0
    %v3467 = vmax.f32 %v3427, 0.0
    %v3468 = vmax.f32 %v3432, 0.0
    %v3469 = vmax.f32 %v3435, 0.0
    %v3470 = vand.u32 2147483647, %v3312
    %v3471 = vand.u32 2147483647, %v3315
    %v3472 = vand.u32 2147483647, %v3320
    %v3473 = vand.u32 2147483647, %v3323
    %v3474 = vand.u32 2147483647, %v3328
    %v3475 = vand.u32 2147483647, %v3331
    %v3476 = vand.u32 2147483647, %v3336
    %v3477 = vand.u32 2147483647, %v3339
    %v3478 = vand.u32 2147483647, %v3344
    %v3479 = vand.u32 2147483647, %v3347
    %v3480 = vand.u32 2147483647, %v3352
    %v3481 = vand.u32 2147483647, %v3355
    %v3482 = vand.u32 2147483647, %v3360
    %v3483 = vand.u32 2147483647, %v3363
    %v3484 = vand.u32 2147483647, %v3368
    %v3485 = vand.u32 2147483647, %v3371
    %v3486 = vand.u32 2147483647, %v3376
    %v3487 = vand.u32 2147483647, %v3379
    %v3488 = vand.u32 2147483647, %v3384
    %v3489 = vand.u32 2147483647, %v3387
    %v3490 = vand.u32 2147483647, %v3392
    %v3491 = vand.u32 2147483647, %v3395
    %v3492 = vand.u32 2147483647, %v3400
    %v3493 = vand.u32 2147483647, %v3403
    %v3494 = vand.u32 2147483647, %v3408
    %v3495 = vand.u32 2147483647, %v3411
    %v3496 = vand.u32 2147483647, %v3416
    %v3497 = vand.u32 2147483647, %v3419
    %v3498 = vand.u32 2147483647, %v3424
    %v3499 = vand.u32 2147483647, %v3427
    %v3500 = vand.u32 2147483647, %v3432
    %v3501 = vand.u32 2147483647, %v3435
    %v3502 = vsub.f32 0.0, %v3470
    %v3503 = vsub.f32 0.0, %v3471
    %v3504 = vsub.f32 0.0, %v3472
    %v3505 = vsub.f32 0.0, %v3473
    %v3506 = vsub.f32 0.0, %v3474
    %v3507 = vsub.f32 0.0, %v3475
    %v3508 = vsub.f32 0.0, %v3476
    %v3509 = vsub.f32 0.0, %v3477
    %v3510 = vsub.f32 0.0, %v3478
    %v3511 = vsub.f32 0.0, %v3479
    %v3512 = vsub.f32 0.0, %v3480
    %v3513 = vsub.f32 0.0, %v3481
    %v3514 = vsub.f32 0.0, %v3482
    %v3515 = vsub.f32 0.0, %v3483
    %v3516 = vsub.f32 0.0, %v3484
    %v3517 = vsub.f32 0.0, %v3485
    %v3518 = vsub.f32 0.0, %v3486
    %v3519 = vsub.f32 0.0, %v3487
    %v3520 = vsub.f32 0.0, %v3488
    %v3521 = vsub.f32 0.0, %v3489
    %v3522 = vsub.f32 0.0, %v3490
    %v3523 = vsub.f32 0.0, %v3491
    %v3524 = vsub.f32 0.0, %v3492
    %v3525 = vsub.f32 0.0, %v3493
    %v3526 = vsub.f32 0.0, %v3494
    %v3527 = vsub.f32 0.0, %v3495
    %v3528 = vsub.f32 0.0, %v3496
    %v3529 = vsub.f32 0.0, %v3497
    %v3530 = vsub.f32 0.0, %v3498
    %v3531 = vsub.f32 0.0, %v3499
    %v3532 = vsub.f32 0.0, %v3500
    %v3533 = vsub.f32 0.0, %v3501
    %v3534 = vmul.f32 %v3502, 1.442695
    %v3535 = vpow.pop %v3534
    %v3536 = vmul.f32 %v3503, 1.442695
    %v3537 = vpow.pop %v3536
    %v3538 = vmul.f32 %v3504, 1.442695
    %v3539 = vpow.pop %v3538
    %v3540 = vmul.f32 %v3505, 1.442695
    %v3541 = vpow.pop %v3540
    %v3542 = vmul.f32 %v3506, 1.442695
    %v3543 = vpow.pop %v3542
    %v3544 = vmul.f32 %v3507, 1.442695
    %v3545 = vpow.pop %v3544
    %v3546 = vmul.f32 %v3508, 1.442695
    %v3547 = vpow.pop %v3546
    %v3548 = vmul.f32 %v3509, 1.442695
    %v3549 = vpow.pop %v3548
    %v3550 = vmul.f32 %v3510, 1.442695
    %v3551 = vpow.pop %v3550
    %v3552 = vmul.f32 %v3511, 1.442695
    %v3553 = vpow.pop %v3552
    %v3554 = vmul.f32 %v3512, 1.442695
    %v3555 = vpow.pop %v3554
    %v3556 = vmul.f32 %v3513, 1.442695
    %v3557 = vpow.pop %v3556
    %v3558 = vmul.f32 %v3514, 1.442695
    %v3559 = vpow.pop %v3558
    %v3560 = vmul.f32 %v3515, 1.442695
    %v3561 = vpow.pop %v3560
    %v3562 = vmul.f32 %v3516, 1.442695
    %v3563 = vpow.pop %v3562
    %v3564 = vmul.f32 %v3517, 1.442695
    %v3565 = vpow.pop %v3564
    %v3566 = vmul.f32 %v3518, 1.442695
    %v3567 = vpow.pop %v3566
    %v3568 = vmul.f32 %v3519, 1.442695
    %v3569 = vpow.pop %v3568
    %v3570 = vmul.f32 %v3520, 1.442695
    %v3571 = vpow.pop %v3570
    %v3572 = vmul.f32 %v3521, 1.442695
    %v3573 = vpow.pop %v3572
    %v3574 = vmul.f32 %v3522, 1.442695
    %v3575 = vpow.pop %v3574
    %v3576 = vmul.f32 %v3523, 1.442695
    %v3577 = vpow.pop %v3576
    %v3578 = vmul.f32 %v3524, 1.442695
    %v3579 = vpow.pop %v3578
    %v3580 = vmul.f32 %v3525, 1.442695
    %v3581 = vpow.pop %v3580
    %v3582 = vmul.f32 %v3526, 1.442695
    %v3583 = vpow.pop %v3582
    %v3584 = vmul.f32 %v3527, 1.442695
    %v3585 = vpow.pop %v3584
    %v3586 = vmul.f32 %v3528, 1.442695
    %v3587 = vpow.pop %v3586
    %v3588 = vmul.f32 %v3529, 1.442695
    %v3589 = vpow.pop %v3588
    %v3590 = vmul.f32 %v3530, 1.442695
    %v3591 = vpow.pop %v3590
    %v3592 = vmul.f32 %v3531, 1.442695
    %v3593 = vpow.pop %v3592
    %v3594 = vmul.f32 %v3532, 1.442695
    %v3595 = vpow.pop %v3594
    %v3596 = vmul.f32 %v3533, 1.442695
    %v3597 = vpow.pop %v3596
    %v3598 = vadd.f32 %v3535, 1.0
    %v3599 = vadd.f32 %v3537, 1.0
    %v3600 = vadd.f32 %v3539, 1.0
    %v3601 = vadd.f32 %v3541, 1.0
    %v3602 = vadd.f32 %v3543, 1.0
    %v3603 = vadd.f32 %v3545, 1.0
    %v3604 = vadd.f32 %v3547, 1.0
    %v3605 = vadd.f32 %v3549, 1.0
    %v3606 = vadd.f32 %v3551, 1.0
    %v3607 = vadd.f32 %v3553, 1.0
    %v3608 = vadd.f32 %v3555, 1.0
    %v3609 = vadd.f32 %v3557, 1.0
    %v3610 = vadd.f32 %v3559, 1.0
    %v3611 = vadd.f32 %v3561, 1.0
    %v3612 = vadd.f32 %v3563, 1.0
    %v3613 = vadd.f32 %v3565, 1.0
    %v3614 = vadd.f32 %v3567, 1.0
    %v3615 = vadd.f32 %v3569, 1.0
    %v3616 = vadd.f32 %v3571, 1.0
    %v3617 = vadd.f32 %v3573, 1.0
    %v3618 = vadd.f32 %v3575, 1.0
    %v3619 = vadd.f32 %v3577, 1.0
    %v3620 = vadd.f32 %v3579, 1.0
    %v3621 = vadd.f32 %v3581, 1.0
    %v3622 = vadd.f32 %v3583, 1.0
    %v3623 = vadd.f32 %v3585, 1.0
    %v3624 = vadd.f32 %v3587, 1.0
    %v3625 = vadd.f32 %v3589, 1.0
    %v3626 = vadd.f32 %v3591, 1.0
    %v3627 = vadd.f32 %v3593, 1.0
    %v3628 = vadd.f32 %v3595, 1.0
    %v3629 = vadd.f32 %v3597, 1.0
    %v3630 = vlog2.pop %v3598
    %v3631 = vmul.f32 %v3630, 0.6931472
    %v3632 = vlog2.pop %v3599
    %v3633 = vmul.f32 %v3632, 0.6931472
    %v3634 = vlog2.pop %v3600
    %v3635 = vmul.f32 %v3634, 0.6931472
    %v3636 = vlog2.pop %v3601
    %v3637 = vmul.f32 %v3636, 0.6931472
    %v3638 = vlog2.pop %v3602
    %v3639 = vmul.f32 %v3638, 0.6931472
    %v3640 = vlog2.pop %v3603
    %v3641 = vmul.f32 %v3640, 0.6931472
    %v3642 = vlog2.pop %v3604
    %v3643 = vmul.f32 %v3642, 0.6931472
    %v3644 = vlog2.pop %v3605
    %v3645 = vmul.f32 %v3644, 0.6931472
    %v3646 = vlog2.pop %v3606
    %v3647 = vmul.f32 %v3646, 0.6931472
    %v3648 = vlog2.pop %v3607
    %v3649 = vmul.f32 %v3648, 0.6931472
    %v3650 = vlog2.pop %v3608
    %v3651 = vmul.f32 %v3650, 0.6931472
    %v3652 = vlog2.pop %v3609
    %v3653 = vmul.f32 %v3652, 0.6931472
    %v3654 = vlog2.pop %v3610
    %v3655 = vmul.f32 %v3654, 0.6931472
    %v3656 = vlog2.pop %v3611
    %v3657 = vmul.f32 %v3656, 0.6931472
    %v3658 = vlog2.pop %v3612
    %v3659 = vmul.f32 %v3658, 0.6931472
    %v3660 = vlog2.pop %v3613
    %v3661 = vmul.f32 %v3660, 0.6931472
    %v3662 = vlog2.pop %v3614
    %v3663 = vmul.f32 %v3662, 0.6931472
    %v3664 = vlog2.pop %v3615
    %v3665 = vmul.f32 %v3664, 0.6931472
    %v3666 = vlog2.pop %v3616
    %v3667 = vmul.f32 %v3666, 0.6931472
    %v3668 = vlog2.pop %v3617
    %v3669 = vmul.f32 %v3668, 0.6931472
    %v3670 = vlog2.pop %v3618
    %v3671 = vmul.f32 %v3670, 0.6931472
    %v3672 = vlog2.pop %v3619
    %v3673 = vmul.f32 %v3672, 0.6931472
    %v3674 = vlog2.pop %v3620
    %v3675 = vmul.f32 %v3674, 0.6931472
    %v3676 = vlog2.pop %v3621
    %v3677 = vmul.f32 %v3676, 0.6931472
    %v3678 = vlog2.pop %v3622
    %v3679 = vmul.f32 %v3678, 0.6931472
    %v3680 = vlog2.pop %v3623
    %v3681 = vmul.f32 %v3680, 0.6931472
    %v3682 = vlog2.pop %v3624
    %v3683 = vmul.f32 %v3682, 0.6931472
    %v3684 = vlog2.pop %v3625
    %v3685 = vmul.f32 %v3684, 0.6931472
    %v3686 = vlog2.pop %v3626
    %v3687 = vmul.f32 %v3686, 0.6931472
    %v3688 = vlog2.pop %v3627
    %v3689 = vmul.f32 %v3688, 0.6931472
    %v3690 = vlog2.pop %v3628
    %v3691 = vmul.f32 %v3690, 0.6931472
    %v3692 = vlog2.pop %v3629
    %v3693 = vmul.f32 %v3692, 0.6931472
    %v3694 = vadd.f32 %v3438, %v3631
    %v3695 = vadd.f32 %v3439, %v3633
    %v3696 = vadd.f32 %v3440, %v3635
    %v3697 = vadd.f32 %v3441, %v3637
    %v3698 = vadd.f32 %v3442, %v3639
    %v3699 = vadd.f32 %v3443, %v3641
    %v3700 = vadd.f32 %v3444, %v3643
    %v3701 = vadd.f32 %v3445, %v3645
    %v3702 = vadd.f32 %v3446, %v3647
    %v3703 = vadd.f32 %v3447, %v3649
    %v3704 = vadd.f32 %v3448, %v3651
    %v3705 = vadd.f32 %v3449, %v3653
    %v3706 = vadd.f32 %v3450, %v3655
    %v3707 = vadd.f32 %v3451, %v3657
    %v3708 = vadd.f32 %v3452, %v3659
    %v3709 = vadd.f32 %v3453, %v3661
    %v3710 = vadd.f32 %v3454, %v3663
    %v3711 = vadd.f32 %v3455, %v3665
    %v3712 = vadd.f32 %v3456, %v3667
    %v3713 = vadd.f32 %v3457, %v3669
    %v3714 = vadd.f32 %v3458, %v3671
    %v3715 = vadd.f32 %v3459, %v3673
    %v3716 = vadd.f32 %v3460, %v3675
    %v3717 = vadd.f32 %v3461, %v3677
    %v3718 = vadd.f32 %v3462, %v3679
    %v3719 = vadd.f32 %v3463, %v3681
    %v3720 = vadd.f32 %v3464, %v3683
    %v3721 = vadd.f32 %v3465, %v3685
    %v3722 = vadd.f32 %v3466, %v3687
    %v3723 = vadd.f32 %v3467, %v3689
    %v3724 = vadd.f32 %v3468, %v3691
    %v3725 = vadd.f32 %v3469, %v3693
    %v3726 = vsub.f32 %v3694, 0.6931472
    %v3727 = vsub.f32 %v3695, 0.6931472
    %v3728 = vsub.f32 %v3696, 0.6931472
    %v3729 = vsub.f32 %v3697, 0.6931472
    %v3730 = vsub.f32 %v3698, 0.6931472
    %v3731 = vsub.f32 %v3699, 0.6931472
    %v3732 = vsub.f32 %v3700, 0.6931472
    %v3733 = vsub.f32 %v3701, 0.6931472
    %v3734 = vsub.f32 %v3702, 0.6931472
    %v3735 = vsub.f32 %v3703, 0.6931472
    %v3736 = vsub.f32 %v3704, 0.6931472
    %v3737 = vsub.f32 %v3705, 0.6931472
    %v3738 = vsub.f32 %v3706, 0.6931472
    %v3739 = vsub.f32 %v3707, 0.6931472
    %v3740 = vsub.f32 %v3708, 0.6931472
    %v3741 = vsub.f32 %v3709, 0.6931472
    %v3742 = vsub.f32 %v3710, 0.6931472
    %v3743 = vsub.f32 %v3711, 0.6931472
    %v3744 = vsub.f32 %v3712, 0.6931472
    %v3745 = vsub.f32 %v3713, 0.6931472
    %v3746 = vsub.f32 %v3714, 0.6931472
    %v3747 = vsub.f32 %v3715, 0.6931472
    %v3748 = vsub.f32 %v3716, 0.6931472
    %v3749 = vsub.f32 %v3717, 0.6931472
    %v3750 = vsub.f32 %v3718, 0.6931472
    %v3751 = vsub.f32 %v3719, 0.6931472
    %v3752 = vsub.f32 %v3720, 0.6931472
    %v3753 = vsub.f32 %v3721, 0.6931472
    %v3754 = vsub.f32 %v3722, 0.6931472
    %v3755 = vsub.f32 %v3723, 0.6931472
    %v3756 = vsub.f32 %v3724, 0.6931472
    %v3757 = vsub.f32 %v3725, 0.6931472
    %v3758 = vpack.c.bf16 %v2633, %v2632
    %s3759 = scalar_lea.vmem [#allocation4], 64
    %v3760 = vld [vmem:[%s3759] sm:$0xf]
    %v3761 = vld [vmem:[%s3759 + $0x4] sm:$0xf]
    %v3762 = vld [vmem:[%s3759 + $0x8] sm:$0xf]
    %v3763 = vld [vmem:[%s3759 + $0xc] sm:$0xf]
    %v3764 = vld [vmem:[%s3759 + $0x10] sm:$0xf]
    %v3765 = vld [vmem:[%s3759 + $0x14] sm:$0xf]
    %v3766 = vld [vmem:[%s3759 + $0x18] sm:$0xf]
    %v3767 = vld [vmem:[%s3759 + $0x1c] sm:$0xf]
    %v3768 = vld [vmem:[%s3759 + $0x20] sm:$0xf]
    %v3769 = vld [vmem:[%s3759 + $0x24] sm:$0xf]
    %v3770 = vld [vmem:[%s3759 + $0x28] sm:$0xf]
    %v3771 = vld [vmem:[%s3759 + $0x2c] sm:$0xf]
    %v3772 = vld [vmem:[%s3759 + $0x30] sm:$0xf]
    %v3773 = vld [vmem:[%s3759 + $0x34] sm:$0xf]
    %v3774 = vld [vmem:[%s3759 + $0x38] sm:$0xf]
    %v3775 = vld [vmem:[%s3759 + $0x3c] sm:$0xf]
    %s3776 = scalar_lea.vmem %s7, 1
    %v3777 = vld [vmem:[%s3776] sm:$0x1]
    %v3779 = vlaneseq
    %v3780 = vshrl.u32 %v3779, 7
    %v3781 = vsub.s32 0, %v3780
    %v3782 = vrot.slane %v3777, %v3781
    %v3800 = vunpack.c.l.b16 %v3760
    %v3801 = vunpack.c.l.b16 %v3761
    %v3802 = vunpack.c.l.b16 %v3762
    %v3803 = vunpack.c.l.b16 %v3763
    %v3804 = vunpack.c.l.b16 %v3764
    %v3805 = vunpack.c.l.b16 %v3765
    %v3806 = vunpack.c.l.b16 %v3766
    %v3807 = vunpack.c.l.b16 %v3767
    %v3808 = vunpack.c.l.b16 %v3768
    %v3809 = vunpack.c.l.b16 %v3769
    %v3810 = vunpack.c.l.b16 %v3770
    %v3811 = vunpack.c.l.b16 %v3771
    %v3812 = vunpack.c.l.b16 %v3772
    %v3813 = vunpack.c.l.b16 %v3773
    %v3814 = vunpack.c.l.b16 %v3774
    %v3815 = vunpack.c.l.b16 %v3775
    %v3816 = vpack.c.b16 %v3801, %v3800
    %v3817 = vpack.c.b16 %v3803, %v3802
    %v3818 = vpack.c.b16 %v3805, %v3804
    %v3819 = vpack.c.b16 %v3807, %v3806
    %v3820 = vpack.c.b16 %v3809, %v3808
    %v3821 = vpack.c.b16 %v3811, %v3810
    %v3822 = vpack.c.b16 %v3813, %v3812
    %v3823 = vpack.c.b16 %v3815, %v3814
    %3832 = vmatprep.subr.bf16.mxu0 0
    %3833 = vmatpush1.bf16.msra.mxu0 %v3816
    %3834 = vmatprep.subr.bf16.mxu0 0
    %3835 = vmatpush1.bf16.msra.mxu0 %v3817
    %3836 = vmatprep.subr.bf16.mxu0 0
    %3837 = vmatpush1.bf16.msra.mxu0 %v3818
    %3838 = vmatprep.subr.bf16.mxu0 0
    %3839 = vmatpush1.bf16.msra.mxu0 %v3819
    %3840 = vmatprep.subr.bf16.mxu0 0
    %3841 = vmatpush1.bf16.msra.mxu0 %v3820
    %3842 = vmatprep.subr.bf16.mxu0 0
    %3843 = vmatpush1.bf16.msra.mxu0 %v3821
    %3844 = vmatprep.subr.bf16.mxu0 0
    %3845 = vmatpush1.bf16.msra.mxu0 %v3822
    %3846 = vmatprep.subr.bf16.mxu0 0
    %3847 = vmatpush1.bf16.msra.mxu0 %v3823
    %3848 = vmatprep.subr.bf16.mxu0 0
    %3849 = vmatpush1.bf16.msra.mxu0 0
    %3850 = vmatprep.subr.bf16.mxu0 0
    %3851 = vmatpush1.bf16.msra.mxu0 0
    %3852 = vmatprep.subr.bf16.mxu0 0
    %3853 = vmatpush1.bf16.msra.mxu0 0
    %3854 = vmatprep.subr.bf16.mxu0 0
    %3855 = vmatpush1.bf16.msra.mxu0 0
    %3856 = vmatprep.subr.bf16.mxu0 0
    %3857 = vmatpush1.bf16.msra.mxu0 0
    %3858 = vmatprep.subr.bf16.mxu0 0
    %3859 = vmatpush1.bf16.msra.mxu0 0
    %3860 = vmatprep.subr.bf16.mxu0 0
    %3861 = vmatpush1.bf16.msra.mxu0 0
    %3862 = vmatprep.subr.bf16.mxu0 0
    %3863 = vmatpush1.bf16.msra.mxu0 0
    %3864 = vmatprep.mubr.bf16.mxu0 0
    %3865 = vmatmul.mubr.bf16.gmra.mrb[0].mxu0 %v3758
    %v3866 = vpop.f32.mrb[0].mxu0
    %v3867 = vadd.f32 %v3782, %v3866
    %v3868 = vpop.f32.mrb[0].mxu0
    %v3869 = vpop.f32.mrb[0].mxu0
    %v3870 = vadd.f32 %v3782, %v3869
    %v3871 = vpop.f32.mrb[0].mxu0
    %3872 = vdwg.mxu0
    %v3873 = vmul.f32 %v3726, %v243
    %v3874 = vmul.f32 %v3727, %v247
    %v3875 = vmul.f32 %v3728, %v254
    %v3876 = vmul.f32 %v3729, %v258
    %v3877 = vmul.f32 %v3730, %v265
    %v3878 = vmul.f32 %v3731, %v269
    %v3879 = vmul.f32 %v3732, %v276
    %v3880 = vmul.f32 %v3733, %v280
    %v3881 = vmul.f32 %v3734, %v287
    %v3882 = vmul.f32 %v3735, %v291
    %v3883 = vmul.f32 %v3736, %v298
    %v3884 = vmul.f32 %v3737, %v302
    %v3885 = vmul.f32 %v3738, %v309
    %v3886 = vmul.f32 %v3739, %v313
    %v3887 = vmul.f32 %v3740, %v320
    %v3888 = vmul.f32 %v3741, %v324
    %v3889 = vmul.f32 %v3742, %v331
    %v3890 = vmul.f32 %v3743, %v335
    %v3891 = vmul.f32 %v3744, %v342
    %v3892 = vmul.f32 %v3745, %v346
    %v3893 = vmul.f32 %v3746, %v353
    %v3894 = vmul.f32 %v3747, %v357
    %v3895 = vmul.f32 %v3748, %v364
    %v3896 = vmul.f32 %v3749, %v368
    %v3897 = vmul.f32 %v3750, %v375
    %v3898 = vmul.f32 %v3751, %v379
    %v3899 = vmul.f32 %v3752, %v386
    %v3900 = vmul.f32 %v3753, %v390
    %v3901 = vmul.f32 %v3754, %v397
    %v3902 = vmul.f32 %v3755, %v401
    %v3903 = vmul.f32 %v3756, %v408
    %v3904 = vmul.f32 %v3757, %v412
    %v3905 = vmul.f32 %v3873, %v3867
    %v3906 = vmul.f32 %v3874, %v3870
    %v3907 = vmul.f32 %v3875, %v3867
    %v3908 = vmul.f32 %v3876, %v3870
    %v3909 = vmul.f32 %v3877, %v3867
    %v3910 = vmul.f32 %v3878, %v3870
    %v3911 = vmul.f32 %v3879, %v3867
    %v3912 = vmul.f32 %v3880, %v3870
    %v3913 = vmul.f32 %v3881, %v3867
    %v3914 = vmul.f32 %v3882, %v3870
    %v3915 = vmul.f32 %v3883, %v3867
    %v3916 = vmul.f32 %v3884, %v3870
    %v3917 = vmul.f32 %v3885, %v3867
    %v3918 = vmul.f32 %v3886, %v3870
    %v3919 = vmul.f32 %v3887, %v3867
    %v3920 = vmul.f32 %v3888, %v3870
    %v3921 = vmul.f32 %v3889, %v3867
    %v3922 = vmul.f32 %v3890, %v3870
    %v3923 = vmul.f32 %v3891, %v3867
    %v3924 = vmul.f32 %v3892, %v3870
    %v3925 = vmul.f32 %v3893, %v3867
    %v3926 = vmul.f32 %v3894, %v3870
    %v3927 = vmul.f32 %v3895, %v3867
    %v3928 = vmul.f32 %v3896, %v3870
    %v3929 = vmul.f32 %v3897, %v3867
    %v3930 = vmul.f32 %v3898, %v3870
    %v3931 = vmul.f32 %v3899, %v3867
    %v3932 = vmul.f32 %v3900, %v3870
    %v3933 = vmul.f32 %v3901, %v3867
    %v3934 = vmul.f32 %v3902, %v3870
    %v3935 = vmul.f32 %v3903, %v3867
    %v3936 = vmul.f32 %v3904, %v3870
    %v3937 = vadd.f32 %v3905, %v3906
    %v3938 = vrot.slane %v3937, 4
    %v3939 = vadd.f32 %v3937, %v3938
    %v3940 = vrot.slane %v3939, 2
    %v3941 = vadd.f32 %v3939, %v3940
    %v3942 = vrot.slane %v3941, 1
    %v3943 = vadd.f32 %v3941, %v3942
    %v3944 = vadd.f32 %v3907, %v3908
    %v3945 = vrot.slane %v3944, 4
    %v3946 = vadd.f32 %v3944, %v3945
    %v3947 = vrot.slane %v3946, 2
    %v3948 = vadd.f32 %v3946, %v3947
    %v3949 = vrot.slane %v3948, 1
    %v3950 = vadd.f32 %v3948, %v3949
    %v3951 = vadd.f32 %v3909, %v3910
    %v3952 = vrot.slane %v3951, 4
    %v3953 = vadd.f32 %v3951, %v3952
    %v3954 = vrot.slane %v3953, 2
    %v3955 = vadd.f32 %v3953, %v3954
    %v3956 = vrot.slane %v3955, 1
    %v3957 = vadd.f32 %v3955, %v3956
    %v3958 = vadd.f32 %v3911, %v3912
    %v3959 = vrot.slane %v3958, 4
    %v3960 = vadd.f32 %v3958, %v3959
    %v3961 = vrot.slane %v3960, 2
    %v3962 = vadd.f32 %v3960, %v3961
    %v3963 = vrot.slane %v3962, 1
    %v3964 = vadd.f32 %v3962, %v3963
    %v3965 = vadd.f32 %v3913, %v3914
    %v3966 = vrot.slane %v3965, 4
    %v3967 = vadd.f32 %v3965, %v3966
    %v3968 = vrot.slane %v3967, 2
    %v3969 = vadd.f32 %v3967, %v3968
    %v3970 = vrot.slane %v3969, 1
    %v3971 = vadd.f32 %v3969, %v3970
    %v3972 = vadd.f32 %v3915, %v3916
    %v3973 = vrot.slane %v3972, 4
    %v3974 = vadd.f32 %v3972, %v3973
    %v3975 = vrot.slane %v3974, 2
    %v3976 = vadd.f32 %v3974, %v3975
    %v3977 = vrot.slane %v3976, 1
    %v3978 = vadd.f32 %v3976, %v3977
    %v3979 = vadd.f32 %v3917, %v3918
    %v3980 = vrot.slane %v3979, 4
    %v3981 = vadd.f32 %v3979, %v3980
    %v3982 = vrot.slane %v3981, 2
    %v3983 = vadd.f32 %v3981, %v3982
    %v3984 = vrot.slane %v3983, 1
    %v3985 = vadd.f32 %v3983, %v3984
    %v3986 = vadd.f32 %v3919, %v3920
    %v3987 = vrot.slane %v3986, 4
    %v3988 = vadd.f32 %v3986, %v3987
    %v3989 = vrot.slane %v3988, 2
    %v3990 = vadd.f32 %v3988, %v3989
    %v3991 = vrot.slane %v3990, 1
    %v3992 = vadd.f32 %v3990, %v3991
    %v3993 = vadd.f32 %v3921, %v3922
    %v3994 = vrot.slane %v3993, 4
    %v3995 = vadd.f32 %v3993, %v3994
    %v3996 = vrot.slane %v3995, 2
    %v3997 = vadd.f32 %v3995, %v3996
    %v3998 = vrot.slane %v3997, 1
    %v3999 = vadd.f32 %v3997, %v3998
    %v4000 = vadd.f32 %v3923, %v3924
    %v4001 = vrot.slane %v4000, 4
    %v4002 = vadd.f32 %v4000, %v4001
    %v4003 = vrot.slane %v4002, 2
    %v4004 = vadd.f32 %v4002, %v4003
    %v4005 = vrot.slane %v4004, 1
    %v4006 = vadd.f32 %v4004, %v4005
    %v4007 = vadd.f32 %v3925, %v3926
    %v4008 = vrot.slane %v4007, 4
    %v4009 = vadd.f32 %v4007, %v4008
    %v4010 = vrot.slane %v4009, 2
    %v4011 = vadd.f32 %v4009, %v4010
    %v4012 = vrot.slane %v4011, 1
    %v4013 = vadd.f32 %v4011, %v4012
    %v4014 = vadd.f32 %v3927, %v3928
    %v4015 = vrot.slane %v4014, 4
    %v4016 = vadd.f32 %v4014, %v4015
    %v4017 = vrot.slane %v4016, 2
    %v4018 = vadd.f32 %v4016, %v4017
    %v4019 = vrot.slane %v4018, 1
    %v4020 = vadd.f32 %v4018, %v4019
    %v4021 = vadd.f32 %v3929, %v3930
    %v4022 = vrot.slane %v4021, 4
    %v4023 = vadd.f32 %v4021, %v4022
    %v4024 = vrot.slane %v4023, 2
    %v4025 = vadd.f32 %v4023, %v4024
    %v4026 = vrot.slane %v4025, 1
    %v4027 = vadd.f32 %v4025, %v4026
    %v4028 = vadd.f32 %v3931, %v3932
    %v4029 = vrot.slane %v4028, 4
    %v4030 = vadd.f32 %v4028, %v4029
    %v4031 = vrot.slane %v4030, 2
    %v4032 = vadd.f32 %v4030, %v4031
    %v4033 = vrot.slane %v4032, 1
    %v4034 = vadd.f32 %v4032, %v4033
    %v4035 = vadd.f32 %v3933, %v3934
    %v4036 = vrot.slane %v4035, 4
    %v4037 = vadd.f32 %v4035, %v4036
    %v4038 = vrot.slane %v4037, 2
    %v4039 = vadd.f32 %v4037, %v4038
    %v4040 = vrot.slane %v4039, 1
    %v4041 = vadd.f32 %v4039, %v4040
    %v4042 = vadd.f32 %v3935, %v3936
    %v4043 = vrot.slane %v4042, 4
    %v4044 = vadd.f32 %v4042, %v4043
    %v4045 = vrot.slane %v4044, 2
    %v4046 = vadd.f32 %v4044, %v4045
    %v4047 = vrot.slane %v4046, 1
    %v4048 = vadd.f32 %v4046, %v4047
    %v4049 = vpack.c.bf16 %v3943, %v3943
    %v4050 = vpack.c.bf16 %v3950, %v3950
    %v4051 = vpack.c.bf16 %v3957, %v3957
    %v4052 = vpack.c.bf16 %v3964, %v3964
    %v4053 = vpack.c.bf16 %v3971, %v3971
    %v4054 = vpack.c.bf16 %v3978, %v3978
    %v4055 = vpack.c.bf16 %v3985, %v3985
    %v4056 = vpack.c.bf16 %v3992, %v3992
    %v4057 = vpack.c.bf16 %v3999, %v3999
    %v4058 = vpack.c.bf16 %v4006, %v4006
    %v4059 = vpack.c.bf16 %v4013, %v4013
    %v4060 = vpack.c.bf16 %v4020, %v4020
    %v4061 = vpack.c.bf16 %v4027, %v4027
    %v4062 = vpack.c.bf16 %v4034, %v4034
    %v4063 = vpack.c.bf16 %v4041, %v4041
    %v4064 = vpack.c.bf16 %v4048, %v4048
    %s4065 = scalar_lea.vmem [#allocation9], 64
    %v4066 = vld [vmem:[%s4065] sm:$0xf]
    %v4067 = vld [vmem:[%s4065 + $0x4] sm:$0xf]
    %v4068 = vld [vmem:[%s4065 + $0x8] sm:$0xf]
    %v4069 = vld [vmem:[%s4065 + $0xc] sm:$0xf]
    %v4070 = vld [vmem:[%s4065 + $0x10] sm:$0xf]
    %v4071 = vld [vmem:[%s4065 + $0x14] sm:$0xf]
    %v4072 = vld [vmem:[%s4065 + $0x18] sm:$0xf]
    %v4073 = vld [vmem:[%s4065 + $0x1c] sm:$0xf]
    %v4074 = vld [vmem:[%s4065 + $0x20] sm:$0xf]
    %v4075 = vld [vmem:[%s4065 + $0x24] sm:$0xf]
    %v4076 = vld [vmem:[%s4065 + $0x28] sm:$0xf]
    %v4077 = vld [vmem:[%s4065 + $0x2c] sm:$0xf]
    %v4078 = vld [vmem:[%s4065 + $0x30] sm:$0xf]
    %v4079 = vld [vmem:[%s4065 + $0x34] sm:$0xf]
    %v4080 = vld [vmem:[%s4065 + $0x38] sm:$0xf]
    %v4081 = vld [vmem:[%s4065 + $0x3c] sm:$0xf]
    %s4082 = scalar_lea.vmem %s13, 1
    %v4083 = vld [vmem:[%s4082] sm:$0x1]
    %v4085 = vlaneseq
    %v4086 = vshrl.u32 %v4085, 7
    %v4087 = vsub.s32 0, %v4086
    %v4088 = vrot.slane %v4083, %v4087
    %v4106 = vunpack.c.l.b16 %v4049
    %v4107 = vunpack.c.l.b16 %v4050
    %v4108 = vunpack.c.l.b16 %v4051
    %v4109 = vunpack.c.l.b16 %v4052
    %v4110 = vunpack.c.l.b16 %v4053
    %v4111 = vunpack.c.l.b16 %v4054
    %v4112 = vunpack.c.l.b16 %v4055
    %v4113 = vunpack.c.l.b16 %v4056
    %v4114 = vunpack.c.l.b16 %v4057
    %v4115 = vunpack.c.l.b16 %v4058
    %v4116 = vunpack.c.l.b16 %v4059
    %v4117 = vunpack.c.l.b16 %v4060
    %v4118 = vunpack.c.l.b16 %v4061
    %v4119 = vunpack.c.l.b16 %v4062
    %v4120 = vunpack.c.l.b16 %v4063
    %v4121 = vunpack.c.l.b16 %v4064
    %v4122 = vsel %vm2252, %v4107, %v4106
    %v4123 = vsel %vm2254, %v4108, %v4122
    %v4124 = vsel %vm2256, %v4109, %v4123
    %v4125 = vsel %vm2258, %v4110, %v4124
    %v4126 = vsel %vm2260, %v4111, %v4125
    %v4127 = vsel %vm2262, %v4112, %v4126
    %v4128 = vsel %vm2264, %v4113, %v4127
    %v4129 = vsel %vm2252, %v4115, %v4114
    %v4130 = vsel %vm2254, %v4116, %v4129
    %v4131 = vsel %vm2256, %v4117, %v4130
    %v4132 = vsel %vm2258, %v4118, %v4131
    %v4133 = vsel %vm2260, %v4119, %v4132
    %v4134 = vsel %vm2262, %v4120, %v4133
    %v4135 = vsel %vm2264, %v4121, %v4134
    %v4136 = vpack.c.b16 %v4135, %v4128
    %v4154 = vunpack.c.l.b16 %v4066
    %v4155 = vunpack.c.l.b16 %v4067
    %v4156 = vunpack.c.l.b16 %v4068
    %v4157 = vunpack.c.l.b16 %v4069
    %v4158 = vunpack.c.l.b16 %v4070
    %v4159 = vunpack.c.l.b16 %v4071
    %v4160 = vunpack.c.l.b16 %v4072
    %v4161 = vunpack.c.l.b16 %v4073
    %v4162 = vunpack.c.l.b16 %v4074
    %v4163 = vunpack.c.l.b16 %v4075
    %v4164 = vunpack.c.l.b16 %v4076
    %v4165 = vunpack.c.l.b16 %v4077
    %v4166 = vunpack.c.l.b16 %v4078
    %v4167 = vunpack.c.l.b16 %v4079
    %v4168 = vunpack.c.l.b16 %v4080
    %v4169 = vunpack.c.l.b16 %v4081
    %v4170 = vpack.c.b16 %v4155, %v4154
    %v4171 = vpack.c.b16 %v4157, %v4156
    %v4172 = vpack.c.b16 %v4159, %v4158
    %v4173 = vpack.c.b16 %v4161, %v4160
    %v4174 = vpack.c.b16 %v4163, %v4162
    %v4175 = vpack.c.b16 %v4165, %v4164
    %v4176 = vpack.c.b16 %v4167, %v4166
    %v4177 = vpack.c.b16 %v4169, %v4168
    %4186 = vmatprep.subr.bf16.mxu0 0
    %4187 = vmatpush1.bf16.msra.mxu0 %v4170
    %4188 = vmatprep.subr.bf16.mxu0 0
    %4189 = vmatpush1.bf16.msra.mxu0 %v4171
    %4190 = vmatprep.subr.bf16.mxu0 0
    %4191 = vmatpush1.bf16.msra.mxu0 %v4172
    %4192 = vmatprep.subr.bf16.mxu0 0
    %4193 = vmatpush1.bf16.msra.mxu0 %v4173
    %4194 = vmatprep.subr.bf16.mxu0 0
    %4195 = vmatpush1.bf16.msra.mxu0 %v4174
    %4196 = vmatprep.subr.bf16.mxu0 0
    %4197 = vmatpush1.bf16.msra.mxu0 %v4175
    %4198 = vmatprep.subr.bf16.mxu0 0
    %4199 = vmatpush1.bf16.msra.mxu0 %v4176
    %4200 = vmatprep.subr.bf16.mxu0 0
    %4201 = vmatpush1.bf16.msra.mxu0 %v4177
    %4202 = vmatprep.subr.bf16.mxu0 0
    %4203 = vmatpush1.bf16.msra.mxu0 0
    %4204 = vmatprep.subr.bf16.mxu0 0
    %4205 = vmatpush1.bf16.msra.mxu0 0
    %4206 = vmatprep.subr.bf16.mxu0 0
    %4207 = vmatpush1.bf16.msra.mxu0 0
    %4208 = vmatprep.subr.bf16.mxu0 0
    %4209 = vmatpush1.bf16.msra.mxu0 0
    %4210 = vmatprep.subr.bf16.mxu0 0
    %4211 = vmatpush1.bf16.msra.mxu0 0
    %4212 = vmatprep.subr.bf16.mxu0 0
    %4213 = vmatpush1.bf16.msra.mxu0 0
    %4214 = vmatprep.subr.bf16.mxu0 0
    %4215 = vmatpush1.bf16.msra.mxu0 0
    %4216 = vmatprep.subr.bf16.mxu0 0
    %4217 = vmatpush1.bf16.msra.mxu0 0
    %4218 = vmatprep.mubr.bf16.mxu0 0
    %4219 = vmatmul.mubr.bf16.gmra.mrb[0].mxu0 %v4136
    %v4220 = vpop.f32.mrb[0].mxu0
    %v4221 = vadd.f32 %v4088, %v4220
    %v4222 = vpop.f32.mrb[0].mxu0
    %v4223 = vpop.f32.mrb[0].mxu0
    %v4224 = vadd.f32 %v4088, %v4223
    %v4225 = vpop.f32.mrb[0].mxu0
    %4226 = vdwg.mxu0
    %v4227 = vmax.f32 %v4221, 0.0
    %v4228 = vmax.f32 %v4224, 0.0
    %v4229 = vand.u32 2147483647, %v4221
    %v4230 = vand.u32 2147483647, %v4224
    %v4231 = vsub.f32 0.0, %v4229
    %v4232 = vsub.f32 0.0, %v4230
    %v4233 = vmul.f32 %v4231, 1.442695
    %v4234 = vpow.pop %v4233
    %v4235 = vmul.f32 %v4232, 1.442695
    %v4236 = vpow.pop %v4235
    %v4237 = vadd.f32 %v4234, 1.0
    %v4238 = vadd.f32 %v4236, 1.0
    %v4239 = vlog2.pop %v4237
    %v4240 = vmul.f32 %v4239, 0.6931472
    %v4241 = vlog2.pop %v4238
    %v4242 = vmul.f32 %v4241, 0.6931472
    %v4243 = vadd.f32 %v4227, %v4240
    %v4244 = vadd.f32 %v4228, %v4242
    %v4245 = vsub.f32 %v4243, 0.6931472
    %v4246 = vsub.f32 %v4244, 0.6931472
    %v4247 = vpack.c.bf16 %v4246, %v4245
    %s4248 = scalar_lea.vmem %s14, 64
    %v4249 = vld [vmem:[%s4248] sm:$0xf]
    %v4250 = vld [vmem:[%s4248 + $0x4] sm:$0xf]
    %v4251 = vld [vmem:[%s4248 + $0x8] sm:$0xf]
    %v4252 = vld [vmem:[%s4248 + $0xc] sm:$0xf]
    %v4253 = vld [vmem:[%s4248 + $0x10] sm:$0xf]
    %v4254 = vld [vmem:[%s4248 + $0x14] sm:$0xf]
    %v4255 = vld [vmem:[%s4248 + $0x18] sm:$0xf]
    %v4256 = vld [vmem:[%s4248 + $0x1c] sm:$0xf]
    %v4257 = vld [vmem:[%s4248 + $0x20] sm:$0xf]
    %v4258 = vld [vmem:[%s4248 + $0x24] sm:$0xf]
    %v4259 = vld [vmem:[%s4248 + $0x28] sm:$0xf]
    %v4260 = vld [vmem:[%s4248 + $0x2c] sm:$0xf]
    %v4261 = vld [vmem:[%s4248 + $0x30] sm:$0xf]
    %v4262 = vld [vmem:[%s4248 + $0x34] sm:$0xf]
    %v4263 = vld [vmem:[%s4248 + $0x38] sm:$0xf]
    %v4264 = vld [vmem:[%s4248 + $0x3c] sm:$0xf]
    %s4265 = scalar_lea.vmem %s15, 1
    %v4266 = vld [vmem:[%s4265] sm:$0x1]
    %v4268 = vlaneseq
    %v4269 = vshrl.u32 %v4268, 7
    %v4270 = vsub.s32 0, %v4269
    %v4271 = vrot.slane %v4266, %v4270
    %v4289 = vunpack.c.l.b16 %v4249
    %v4290 = vunpack.c.l.b16 %v4250
    %v4291 = vunpack.c.l.b16 %v4251
    %v4292 = vunpack.c.l.b16 %v4252
    %v4293 = vunpack.c.l.b16 %v4253
    %v4294 = vunpack.c.l.b16 %v4254
    %v4295 = vunpack.c.l.b16 %v4255
    %v4296 = vunpack.c.l.b16 %v4256
    %v4297 = vunpack.c.l.b16 %v4257
    %v4298 = vunpack.c.l.b16 %v4258
    %v4299 = vunpack.c.l.b16 %v4259
    %v4300 = vunpack.c.l.b16 %v4260
    %v4301 = vunpack.c.l.b16 %v4261
    %v4302 = vunpack.c.l.b16 %v4262
    %v4303 = vunpack.c.l.b16 %v4263
    %v4304 = vunpack.c.l.b16 %v4264
    %v4305 = vpack.c.b16 %v4290, %v4289
    %v4306 = vpack.c.b16 %v4292, %v4291
    %v4307 = vpack.c.b16 %v4294, %v4293
    %v4308 = vpack.c.b16 %v4296, %v4295
    %v4309 = vpack.c.b16 %v4298, %v4297
    %v4310 = vpack.c.b16 %v4300, %v4299
    %v4311 = vpack.c.b16 %v4302, %v4301
    %v4312 = vpack.c.b16 %v4304, %v4303
    %4321 = vmatprep.subr.bf16.mxu0 0
    %4322 = vmatpush1.bf16.msra.mxu0 %v4305
    %4323 = vmatprep.subr.bf16.mxu0 0
    %4324 = vmatpush1.bf16.msra.mxu0 %v4306
    %4325 = vmatprep.subr.bf16.mxu0 0
    %4326 = vmatpush1.bf16.msra.mxu0 %v4307
    %4327 = vmatprep.subr.bf16.mxu0 0
    %4328 = vmatpush1.bf16.msra.mxu0 %v4308
    %4329 = vmatprep.subr.bf16.mxu0 0
    %4330 = vmatpush1.bf16.msra.mxu0 %v4309
    %4331 = vmatprep.subr.bf16.mxu0 0
    %4332 = vmatpush1.bf16.msra.mxu0 %v4310
    %4333 = vmatprep.subr.bf16.mxu0 0
    %4334 = vmatpush1.bf16.msra.mxu0 %v4311
    %4335 = vmatprep.subr.bf16.mxu0 0
    %4336 = vmatpush1.bf16.msra.mxu0 %v4312
    %4337 = vmatprep.subr.bf16.mxu0 0
    %4338 = vmatpush1.bf16.msra.mxu0 0
    %4339 = vmatprep.subr.bf16.mxu0 0
    %4340 = vmatpush1.bf16.msra.mxu0 0
    %4341 = vmatprep.subr.bf16.mxu0 0
    %4342 = vmatpush1.bf16.msra.mxu0 0
    %4343 = vmatprep.subr.bf16.mxu0 0
    %4344 = vmatpush1.bf16.msra.mxu0 0
    %4345 = vmatprep.subr.bf16.mxu0 0
    %4346 = vmatpush1.bf16.msra.mxu0 0
    %4347 = vmatprep.subr.bf16.mxu0 0
    %4348 = vmatpush1.bf16.msra.mxu0 0
    %4349 = vmatprep.subr.bf16.mxu0 0
    %4350 = vmatpush1.bf16.msra.mxu0 0
    %4351 = vmatprep.subr.bf16.mxu0 0
    %4352 = vmatpush1.bf16.msra.mxu0 0
    %4353 = vmatprep.mubr.bf16.mxu0 0
    %4354 = vmatmul.mubr.bf16.gmra.mrb[0].mxu0 %v4247
    %v4355 = vpop.f32.mrb[0].mxu0
    %v4356 = vadd.f32 %v4271, %v4355
    %v4357 = vpop.f32.mrb[0].mxu0
    %v4358 = vpop.f32.mrb[0].mxu0
    %v4359 = vadd.f32 %v4271, %v4358
    %v4360 = vpop.f32.mrb[0].mxu0
    %4361 = vdwg.mxu0
    %v4362 = vmax.f32 %v4356, 0.0
    %v4363 = vmax.f32 %v4359, 0.0
    %v4364 = vand.u32 2147483647, %v4356
    %v4365 = vand.u32 2147483647, %v4359
    %v4366 = vsub.f32 0.0, %v4364
    %v4367 = vsub.f32 0.0, %v4365
    %v4368 = vmul.f32 %v4366, 1.442695
    %v4369 = vpow.pop %v4368
    %v4370 = vmul.f32 %v4367, 1.442695
    %v4371 = vpow.pop %v4370
    %v4372 = vadd.f32 %v4369, 1.0
    %v4373 = vadd.f32 %v4371, 1.0
    %v4374 = vlog2.pop %v4372
    %v4375 = vmul.f32 %v4374, 0.6931472
    %v4376 = vlog2.pop %v4373
    %v4377 = vmul.f32 %v4376, 0.6931472
    %v4378 = vadd.f32 %v4362, %v4375
    %v4379 = vadd.f32 %v4363, %v4377
    %v4380 = vsub.f32 %v4378, 0.6931472
    %v4381 = vsub.f32 %v4379, 0.6931472
    %v4382 = vpack.c.bf16 %v4381, %v4380
    %s4383 = scalar_lea.vmem %s16, 64
    %v4384 = vld [vmem:[%s4383] sm:$0xf]
    %v4385 = vld [vmem:[%s4383 + $0x4] sm:$0xf]
    %v4386 = vld [vmem:[%s4383 + $0x8] sm:$0xf]
    %v4387 = vld [vmem:[%s4383 + $0xc] sm:$0xf]
    %v4388 = vld [vmem:[%s4383 + $0x10] sm:$0xf]
    %v4389 = vld [vmem:[%s4383 + $0x14] sm:$0xf]
    %v4390 = vld [vmem:[%s4383 + $0x18] sm:$0xf]
    %v4391 = vld [vmem:[%s4383 + $0x1c] sm:$0xf]
    %v4392 = vld [vmem:[%s4383 + $0x20] sm:$0xf]
    %v4393 = vld [vmem:[%s4383 + $0x24] sm:$0xf]
    %v4394 = vld [vmem:[%s4383 + $0x28] sm:$0xf]
    %v4395 = vld [vmem:[%s4383 + $0x2c] sm:$0xf]
    %v4396 = vld [vmem:[%s4383 + $0x30] sm:$0xf]
    %v4397 = vld [vmem:[%s4383 + $0x34] sm:$0xf]
    %v4398 = vld [vmem:[%s4383 + $0x38] sm:$0xf]
    %v4399 = vld [vmem:[%s4383 + $0x3c] sm:$0xf]
    %s4400 = scalar_lea.vmem %s17, 1
    %v4401 = vld [vmem:[%s4400] sm:$0x1]
    %v4403 = vlaneseq
    %v4404 = vshrl.u32 %v4403, 7
    %v4405 = vsub.s32 0, %v4404
    %v4406 = vrot.slane %v4401, %v4405
    %v4424 = vunpack.c.l.b16 %v4384
    %v4425 = vunpack.c.l.b16 %v4385
    %v4426 = vunpack.c.l.b16 %v4386
    %v4427 = vunpack.c.l.b16 %v4387
    %v4428 = vunpack.c.l.b16 %v4388
    %v4429 = vunpack.c.l.b16 %v4389
    %v4430 = vunpack.c.l.b16 %v4390
    %v4431 = vunpack.c.l.b16 %v4391
    %v4432 = vunpack.c.l.b16 %v4392
    %v4433 = vunpack.c.l.b16 %v4393
    %v4434 = vunpack.c.l.b16 %v4394
    %v4435 = vunpack.c.l.b16 %v4395
    %v4436 = vunpack.c.l.b16 %v4396
    %v4437 = vunpack.c.l.b16 %v4397
    %v4438 = vunpack.c.l.b16 %v4398
    %v4439 = vunpack.c.l.b16 %v4399
    %v4440 = vpack.c.b16 %v4425, %v4424
    %v4441 = vpack.c.b16 %v4427, %v4426
    %v4442 = vpack.c.b16 %v4429, %v4428
    %v4443 = vpack.c.b16 %v4431, %v4430
    %v4444 = vpack.c.b16 %v4433, %v4432
    %v4445 = vpack.c.b16 %v4435, %v4434
    %v4446 = vpack.c.b16 %v4437, %v4436
    %v4447 = vpack.c.b16 %v4439, %v4438
    %4456 = vmatprep.subr.bf16.mxu0 0
    %4457 = vmatpush1.bf16.msra.mxu0 %v4440
    %4458 = vmatprep.subr.bf16.mxu0 0
    %4459 = vmatpush1.bf16.msra.mxu0 %v4441
    %4460 = vmatprep.subr.bf16.mxu0 0
    %4461 = vmatpush1.bf16.msra.mxu0 %v4442
    %4462 = vmatprep.subr.bf16.mxu0 0
    %4463 = vmatpush1.bf16.msra.mxu0 %v4443
    %4464 = vmatprep.subr.bf16.mxu0 0
    %4465 = vmatpush1.bf16.msra.mxu0 %v4444
    %4466 = vmatprep.subr.bf16.mxu0 0
    %4467 = vmatpush1.bf16.msra.mxu0 %v4445
    %4468 = vmatprep.subr.bf16.mxu0 0
    %4469 = vmatpush1.bf16.msra.mxu0 %v4446
    %4470 = vmatprep.subr.bf16.mxu0 0
    %4471 = vmatpush1.bf16.msra.mxu0 %v4447
    %4472 = vmatprep.subr.bf16.mxu0 0
    %4473 = vmatpush1.bf16.msra.mxu0 0
    %4474 = vmatprep.subr.bf16.mxu0 0
    %4475 = vmatpush1.bf16.msra.mxu0 0
    %4476 = vmatprep.subr.bf16.mxu0 0
    %4477 = vmatpush1.bf16.msra.mxu0 0
    %4478 = vmatprep.subr.bf16.mxu0 0
    %4479 = vmatpush1.bf16.msra.mxu0 0
    %4480 = vmatprep.subr.bf16.mxu0 0
    %4481 = vmatpush1.bf16.msra.mxu0 0
    %4482 = vmatprep.subr.bf16.mxu0 0
    %4483 = vmatpush1.bf16.msra.mxu0 0
    %4484 = vmatprep.subr.bf16.mxu0 0
    %4485 = vmatpush1.bf16.msra.mxu0 0
    %4486 = vmatprep.subr.bf16.mxu0 0
    %4487 = vmatpush1.bf16.msra.mxu0 0
    %4488 = vmatprep.mubr.bf16.mxu0 0
    %4489 = vmatmul.mubr.bf16.gmra.mrb[0].mxu0 %v4382
    %v4490 = vpop.f32.mrb[0].mxu0
    %v4491 = vadd.f32 %v4406, %v4490
    %v4492 = vpop.f32.mrb[0].mxu0
    %v4493 = vpop.f32.mrb[0].mxu0
    %v4494 = vadd.f32 %v4406, %v4493
    %v4495 = vpop.f32.mrb[0].mxu0
    %4496 = vdwg.mxu0
    %v4497 = vmul.f32 %v2632, 2.0
    %v4498 = vmul.f32 %v2633, 2.0
    %v4499 = vadd.f32 %v4497, %v4491
    %v4500 = vadd.f32 %v4498, %v4494
    %v4501 = vpack.c.bf16 %v4500, %v4499
    %v4502 = vld [vmem:[#allocation10] sm:$0xf]
    %v4503 = vld [vmem:[#allocation10 + $0x4] sm:$0xf]
    %v4504 = vld [vmem:[#allocation10 + $0x8] sm:$0xf]
    %v4505 = vld [vmem:[#allocation10 + $0xc] sm:$0xf]
    %v4506 = vld [vmem:[#allocation10 + $0x10] sm:$0xf]
    %v4507 = vld [vmem:[#allocation10 + $0x14] sm:$0xf]
    %v4508 = vld [vmem:[#allocation10 + $0x18] sm:$0xf]
    %v4509 = vld [vmem:[#allocation10 + $0x1c] sm:$0xf]
    %v4510 = vld [vmem:[#allocation10 + $0x20] sm:$0xf]
    %v4511 = vld [vmem:[#allocation10 + $0x24] sm:$0xf]
    %v4512 = vld [vmem:[#allocation10 + $0x28] sm:$0xf]
    %v4513 = vld [vmem:[#allocation10 + $0x2c] sm:$0xf]
    %v4514 = vld [vmem:[#allocation10 + $0x30] sm:$0xf]
    %v4515 = vld [vmem:[#allocation10 + $0x34] sm:$0xf]
    %v4516 = vld [vmem:[#allocation10 + $0x38] sm:$0xf]
    %v4517 = vld [vmem:[#allocation10 + $0x3c] sm:$0xf]
    %v4518 = vld [vmem:[%s19] sm:$0x1]
    %v4520 = vlaneseq
    %v4521 = vshrl.u32 %v4520, 7
    %v4522 = vsub.s32 0, %v4521
    %v4523 = vrot.slane %v4518, %v4522
    %v4541 = vunpack.c.l.b16 %v4502
    %v4542 = vunpack.c.l.b16 %v4503
    %v4543 = vunpack.c.l.b16 %v4504
    %v4544 = vunpack.c.l.b16 %v4505
    %v4545 = vunpack.c.l.b16 %v4506
    %v4546 = vunpack.c.l.b16 %v4507
    %v4547 = vunpack.c.l.b16 %v4508
    %v4548 = vunpack.c.l.b16 %v4509
    %v4549 = vunpack.c.l.b16 %v4510
    %v4550 = vunpack.c.l.b16 %v4511
    %v4551 = vunpack.c.l.b16 %v4512
    %v4552 = vunpack.c.l.b16 %v4513
    %v4553 = vunpack.c.l.b16 %v4514
    %v4554 = vunpack.c.l.b16 %v4515
    %v4555 = vunpack.c.l.b16 %v4516
    %v4556 = vunpack.c.l.b16 %v4517
    %v4557 = vpack.c.b16 %v4542, %v4541
    %v4558 = vpack.c.b16 %v4544, %v4543
    %v4559 = vpack.c.b16 %v4546, %v4545
    %v4560 = vpack.c.b16 %v4548, %v4547
    %v4561 = vpack.c.b16 %v4550, %v4549
    %v4562 = vpack.c.b16 %v4552, %v4551
    %v4563 = vpack.c.b16 %v4554, %v4553
    %v4564 = vpack.c.b16 %v4556, %v4555
    %4573 = vmatprep.subr.bf16.mxu0 0
    %4574 = vmatpush1.bf16.msra.mxu0 %v4557
    %4575 = vmatprep.subr.bf16.mxu0 0
    %4576 = vmatpush1.bf16.msra.mxu0 %v4558
    %4577 = vmatprep.subr.bf16.mxu0 0
    %4578 = vmatpush1.bf16.msra.mxu0 %v4559
    %4579 = vmatprep.subr.bf16.mxu0 0
    %4580 = vmatpush1.bf16.msra.mxu0 %v4560
    %4581 = vmatprep.subr.bf16.mxu0 0
    %4582 = vmatpush1.bf16.msra.mxu0 %v4561
    %4583 = vmatprep.subr.bf16.mxu0 0
    %4584 = vmatpush1.bf16.msra.mxu0 %v4562
    %4585 = vmatprep.subr.bf16.mxu0 0
    %4586 = vmatpush1.bf16.msra.mxu0 %v4563
    %4587 = vmatprep.subr.bf16.mxu0 0
    %4588 = vmatpush1.bf16.msra.mxu0 %v4564
    %4589 = vmatprep.subr.bf16.mxu0 0
    %4590 = vmatpush1.bf16.msra.mxu0 0
    %4591 = vmatprep.subr.bf16.mxu0 0
    %4592 = vmatpush1.bf16.msra.mxu0 0
    %4593 = vmatprep.subr.bf16.mxu0 0
    %4594 = vmatpush1.bf16.msra.mxu0 0
    %4595 = vmatprep.subr.bf16.mxu0 0
    %4596 = vmatpush1.bf16.msra.mxu0 0
    %4597 = vmatprep.subr.bf16.mxu0 0
    %4598 = vmatpush1.bf16.msra.mxu0 0
    %4599 = vmatprep.subr.bf16.mxu0 0
    %4600 = vmatpush1.bf16.msra.mxu0 0
    %4601 = vmatprep.subr.bf16.mxu0 0
    %4602 = vmatpush1.bf16.msra.mxu0 0
    %4603 = vmatprep.subr.bf16.mxu0 0
    %4604 = vmatpush1.bf16.msra.mxu0 0
    %4605 = vmatprep.mubr.bf16.mxu0 0
    %4606 = vmatmul.mubr.bf16.gmra.mrb[0].mxu0 %v4501
    %v4607 = vpop.f32.mrb[0].mxu0
    %v4608 = vadd.f32 %v4523, %v4607
    %v4609 = vpop.f32.mrb[0].mxu0
    %v4610 = vpop.f32.mrb[0].mxu0
    %v4611 = vadd.f32 %v4523, %v4610
    %v4612 = vpop.f32.mrb[0].mxu0
    %4613 = vdwg.mxu0
    %v4614 = vmax.f32 %v4608, 0.0
    %v4615 = vmax.f32 %v4611, 0.0
    %v4616 = vand.u32 2147483647, %v4608
    %v4617 = vand.u32 2147483647, %v4611
    %v4618 = vsub.f32 0.0, %v4616
    %v4619 = vsub.f32 0.0, %v4617
    %v4620 = vmul.f32 %v4618, 1.442695
    %v4621 = vpow.pop %v4620
    %v4622 = vmul.f32 %v4619, 1.442695
    %v4623 = vpow.pop %v4622
    %v4624 = vadd.f32 %v4621, 1.0
    %v4625 = vadd.f32 %v4623, 1.0
    %v4626 = vlog2.pop %v4624
    %v4627 = vmul.f32 %v4626, 0.6931472
    %v4628 = vlog2.pop %v4625
    %v4629 = vmul.f32 %v4628, 0.6931472
    %v4630 = vadd.f32 %v4614, %v4627
    %v4631 = vadd.f32 %v4615, %v4629
    %v4632 = vsub.f32 %v4630, 0.6931472
    %v4633 = vsub.f32 %v4631, 0.6931472
    %v4634 = vpack.c.bf16 %v4633, %v4632
    %v4635 = vld [vmem:[%s20] sm:$0xf]
    %v4636 = vld [vmem:[%s20 + $0x4] sm:$0xf]
    %v4637 = vld [vmem:[%s20 + $0x8] sm:$0xf]
    %v4638 = vld [vmem:[%s20 + $0xc] sm:$0xf]
    %v4639 = vld [vmem:[%s20 + $0x10] sm:$0xf]
    %v4640 = vld [vmem:[%s20 + $0x14] sm:$0xf]
    %v4641 = vld [vmem:[%s20 + $0x18] sm:$0xf]
    %v4642 = vld [vmem:[%s20 + $0x1c] sm:$0xf]
    %v4643 = vld [vmem:[%s20 + $0x20] sm:$0xf]
    %v4644 = vld [vmem:[%s20 + $0x24] sm:$0xf]
    %v4645 = vld [vmem:[%s20 + $0x28] sm:$0xf]
    %v4646 = vld [vmem:[%s20 + $0x2c] sm:$0xf]
    %v4647 = vld [vmem:[%s20 + $0x30] sm:$0xf]
    %v4648 = vld [vmem:[%s20 + $0x34] sm:$0xf]
    %v4649 = vld [vmem:[%s20 + $0x38] sm:$0xf]
    %v4650 = vld [vmem:[%s20 + $0x3c] sm:$0xf]
    %v4651 = vld [vmem:[%s21] sm:$0x1]
    %v4653 = vlaneseq
    %v4654 = vshrl.u32 %v4653, 7
    %v4655 = vsub.s32 0, %v4654
    %v4656 = vrot.slane %v4651, %v4655
    %v4674 = vunpack.c.l.b16 %v4635
    %v4675 = vunpack.c.l.b16 %v4636
    %v4676 = vunpack.c.l.b16 %v4637
    %v4677 = vunpack.c.l.b16 %v4638
    %v4678 = vunpack.c.l.b16 %v4639
    %v4679 = vunpack.c.l.b16 %v4640
    %v4680 = vunpack.c.l.b16 %v4641
    %v4681 = vunpack.c.l.b16 %v4642
    %v4682 = vunpack.c.l.b16 %v4643
    %v4683 = vunpack.c.l.b16 %v4644
    %v4684 = vunpack.c.l.b16 %v4645
    %v4685 = vunpack.c.l.b16 %v4646
    %v4686 = vunpack.c.l.b16 %v4647
    %v4687 = vunpack.c.l.b16 %v4648
    %v4688 = vunpack.c.l.b16 %v4649
    %v4689 = vunpack.c.l.b16 %v4650
    %v4690 = vpack.c.b16 %v4675, %v4674
    %v4691 = vpack.c.b16 %v4677, %v4676
    %v4692 = vpack.c.b16 %v4679, %v4678
    %v4693 = vpack.c.b16 %v4681, %v4680
    %v4694 = vpack.c.b16 %v4683, %v4682
    %v4695 = vpack.c.b16 %v4685, %v4684
    %v4696 = vpack.c.b16 %v4687, %v4686
    %v4697 = vpack.c.b16 %v4689, %v4688
    %4706 = vmatprep.subr.bf16.mxu0 0
    %4707 = vmatpush1.bf16.msra.mxu0 %v4690
    %4708 = vmatprep.subr.bf16.mxu0 0
    %4709 = vmatpush1.bf16.msra.mxu0 %v4691
    %4710 = vmatprep.subr.bf16.mxu0 0
    %4711 = vmatpush1.bf16.msra.mxu0 %v4692
    %4712 = vmatprep.subr.bf16.mxu0 0
    %4713 = vmatpush1.bf16.msra.mxu0 %v4693
    %4714 = vmatprep.subr.bf16.mxu0 0
    %4715 = vmatpush1.bf16.msra.mxu0 %v4694
    %4716 = vmatprep.subr.bf16.mxu0 0
    %4717 = vmatpush1.bf16.msra.mxu0 %v4695
    %4718 = vmatprep.subr.bf16.mxu0 0
    %4719 = vmatpush1.bf16.msra.mxu0 %v4696
    %4720 = vmatprep.subr.bf16.mxu0 0
    %4721 = vmatpush1.bf16.msra.mxu0 %v4697
    %4722 = vmatprep.subr.bf16.mxu0 0
    %4723 = vmatpush1.bf16.msra.mxu0 0
    %4724 = vmatprep.subr.bf16.mxu0 0
    %4725 = vmatpush1.bf16.msra.mxu0 0
    %4726 = vmatprep.subr.bf16.mxu0 0
    %4727 = vmatpush1.bf16.msra.mxu0 0
    %4728 = vmatprep.subr.bf16.mxu0 0
    %4729 = vmatpush1.bf16.msra.mxu0 0
    %4730 = vmatprep.subr.bf16.mxu0 0
    %4731 = vmatpush1.bf16.msra.mxu0 0
    %4732 = vmatprep.subr.bf16.mxu0 0
    %4733 = vmatpush1.bf16.msra.mxu0 0
    %4734 = vmatprep.subr.bf16.mxu0 0
    %4735 = vmatpush1.bf16.msra.mxu0 0
    %4736 = vmatprep.subr.bf16.mxu0 0
    %4737 = vmatpush1.bf16.msra.mxu0 0
    %4738 = vmatprep.mubr.bf16.mxu0 0
    %4739 = vmatmul.mubr.bf16.gmra.mrb[0].mxu0 %v4634
    %v4740 = vpop.f32.mrb[0].mxu0
    %v4741 = vadd.f32 %v4656, %v4740
    %v4742 = vpop.f32.mrb[0].mxu0
    %v4743 = vpop.f32.mrb[0].mxu0
    %v4744 = vadd.f32 %v4656, %v4743
    %v4745 = vpop.f32.mrb[0].mxu0
    %4746 = vdwg.mxu0
    %v4747 = vld [vmem:[%s5] sm:$0x3]
    %vm4748 = vcmask 130048
    %v4750 = vsel %vm4748, %v4747, 0
    %4752 = vmatprep.subr.mxu0 0.0
    %4753 = vmatpush1.msra.mxu0 %v4741
    %4754 = vmatprep.subr.mxu0 0.0
    %4755 = vmatpush1.msra.mxu0 %v4744
    %4756 = vmatprep.subr.mxu0 0.0
    %4757 = vmatpush1.msra.mxu0 0.0
    %4758 = vmatprep.subr.mxu0 0.0
    %4759 = vmatpush1.msra.mxu0 0.0
    %4760 = vmatprep.subr.mxu0 0.0
    %4761 = vmatpush1.msra.mxu0 0.0
    %4762 = vmatprep.subr.mxu0 0.0
    %4763 = vmatpush1.msra.mxu0 0.0
    %4764 = vmatprep.subr.mxu0 0.0
    %4765 = vmatpush1.msra.mxu0 0.0
    %4766 = vmatprep.subr.mxu0 0.0
    %4767 = vmatpush1.msra.mxu0 0.0
    %4768 = vmatprep.subr.mxu0 0.0
    %4769 = vmatpush1.msra.mxu0 0.0
    %4770 = vmatprep.subr.mxu0 0.0
    %4771 = vmatpush1.msra.mxu0 0.0
    %4772 = vmatprep.subr.mxu0 0.0
    %4773 = vmatpush1.msra.mxu0 0.0
    %4774 = vmatprep.subr.mxu0 0.0
    %4775 = vmatpush1.msra.mxu0 0.0
    %4776 = vmatprep.subr.mxu0 0.0
    %4777 = vmatpush1.msra.mxu0 0.0
    %4778 = vmatprep.subr.mxu0 0.0
    %4779 = vmatpush1.msra.mxu0 0.0
    %4780 = vmatprep.subr.mxu0 0.0
    %4781 = vmatpush1.msra.mxu0 0.0
    %4782 = vmatprep.subr.mxu0 0.0
    %4783 = vmatpush1.msra.mxu0 0.0
    %4784 = vmatprep.subr.mxu0 0.0
    %4785 = vmatpush1.msra.mxu0 0.0
    %4786 = vmatprep.subr.mxu0 0.0
    %4787 = vmatpush1.msra.mxu0 0.0
    %4788 = vmatprep.subr.mxu0 0.0
    %4789 = vmatpush1.msra.mxu0 0.0
    %4790 = vmatprep.subr.mxu0 0.0
    %4791 = vmatpush1.msra.mxu0 0.0
    %4792 = vmatprep.subr.mxu0 0.0
    %4793 = vmatpush1.msra.mxu0 0.0
    %4794 = vmatprep.subr.mxu0 0.0
    %4795 = vmatpush1.msra.mxu0 0.0
    %4796 = vmatprep.subr.mxu0 0.0
    %4797 = vmatpush1.msra.mxu0 0.0
    %4798 = vmatprep.subr.mxu0 0.0
    %4799 = vmatpush1.msra.mxu0 0.0
    %4800 = vmatprep.subr.mxu0 0.0
    %4801 = vmatpush1.msra.mxu0 0.0
    %4802 = vmatprep.subr.mxu0 0.0
    %4803 = vmatpush1.msra.mxu0 0.0
    %4804 = vmatprep.subr.mxu0 0.0
    %4805 = vmatpush1.msra.mxu0 0.0
    %4806 = vmatprep.subr.mxu0 0.0
    %4807 = vmatpush1.msra.mxu0 0.0
    %4808 = vmatprep.subr.mxu0 0.0
    %4809 = vmatpush1.msra.mxu0 0.0
    %4810 = vmatprep.subr.mxu0 0.0
    %4811 = vmatpush1.msra.mxu0 0.0
    %4812 = vmatprep.subr.mxu0 0.0
    %4813 = vmatpush1.msra.mxu0 0.0
    %4814 = vmatprep.subr.mxu0 0.0
    %4815 = vmatpush1.msra.mxu0 0.0
    %4816 = vmatprep.mubr.f32.mxu0 0.0
    %4817 = vmatmul.mubr.f32.gmra.mrb[0].mxu0 %v4750
    %v4818 = vpop.f32.mrb[0].mxu0
    %v4819 = vadd.f32 0.0, %v4818
    %v4820 = vpop.f32.mrb[0].mxu0
    %4821 = vdwg.mxu0
    %4822 = vst [vmem:[%s22] sm:$0x3] %v4819
    // Predicated region
    $region114: #{forward.1} parent=1 // pred_check
      _
    $region115: #{forward.1} parent=1 // pred_check_branch
      %4824 = sbr.rel (0) target = $region117
    $region116: #{forward.1} parent=1 // pred_region
      _
    $region117: #{forward.1} parent=1 // pred_fallthru
      _
    // Predicated region
    $region118: #{forward.1} parent=1 // pred_check
      _
    $region119: #{forward.1} parent=1 // pred_check_branch
      %4826 = sbr.rel (0) target = $region121
    $region120: #{forward.1} parent=1 // pred_region
      _
    $region121: #{forward.1} parent=1 // pred_fallthru
      _
    %4827 = vsyncpa [#allocation3], 1
    %4828 = vsyncpa [#allocation5], 1
    %4829 = vsyncpa [#allocation8], 1
    %4830 = vsyncpa [#allocation11], 1

</llo_original>
